<compile_context>
chip_gen: v6e
topology: v6e:2x2x1
jax: 0.10.0
libtpu: 0.0.40
codegen_flags: <defaults>
</compile_context>

<pallas_src>
import functools

import jax
import jax.numpy as jnp
from jax.experimental import pallas as pl
from jax.experimental.pallas import tpu as pltpu

LATENT_DIM = 3
IN_DIM = 28 * 28

# (in_dim, out_dim) for the 10 Linear layers of the PyTorch module.
LAYER_DIMS = [
    (IN_DIM, 256), (256, 128), (128, 64), (64, 12), (12, LATENT_DIM),   # encoder
    (LATENT_DIM, 12), (12, 64), (64, 128), (128, 256), (256, IN_DIM),   # decoder
]

# LeakyReLU after enc layers 0-3 and dec layers 5-8; nothing after the latent
# projection (layer 4); sigmoid after the final layer 9.
LEAKY_LAYERS = {0, 1, 2, 3, 5, 6, 7, 8}
NEG_SLOPE = 0.01  # PyTorch nn.LeakyReLU default

# Fused layer dims (bottleneck 12->3->12 composed into 12->12).
FUSED_DIMS = [
    (IN_DIM, 256), (256, 128), (128, 64), (64, 12), (12, 12),
    (12, 64), (64, 128), (128, 256), (256, IN_DIM),
]
_FUSED_MACS = sum(i * o for i, o in FUSED_DIMS)          # ~485k MACs / row
_VMEM_CAP_BYTES = 48 * 1024 * 1024                        # safe on v5e/v6e/v7x


def _leaky_relu(x):
    # 2 VALU ops (mul + max) instead of cmp + mul + select.
    return jnp.maximum(x, NEG_SLOPE * x)


def autoencoder_kernel(x_ref, *refs):
    """refs = (w0, b0, ..., w8, b8, out_ref): 9 fused layers, all VMEM-resident.

    Weights are bf16; activations are cast to bf16 at each dot input and the
    MXU accumulates in f32 (preferred_element_type).  Bias add + activation
    run in f32 (no bf16 VPU on v5e), then cast back to bf16 for the next dot.
    """
    out_ref = refs[-1]
    params = refs[:-1]
    n_layers = len(params) // 2

    h = x_ref[...].astype(jnp.bfloat16)
    for li in range(n_layers):
        w = params[2 * li][...]          # bf16 (in, out)
        b = params[2 * li + 1][...]      # f32  (1, out)
        acc = jnp.dot(h, w, preferred_element_type=jnp.float32) + b
        if li < n_layers - 1:
            h = _leaky_relu(acc).astype(jnp.bfloat16)
        else:
            # Sigmoid: exp + approximate reciprocal both on the EUP slot.
            h = pl.reciprocal(1.0 + jnp.exp(-acc), approx=True)
    out_ref[...] = h.astype(out_ref.dtype)


def _fuse_bottleneck(params):
    """Compose enc layer 4 (12->3, no activation) with dec layer 5 (3->12) in f32."""
    w4, b4, w5, b5 = params[8], params[9], params[10], params[11]
    w45 = jnp.dot(w4, w5, preferred_element_type=jnp.float32)
    b45 = jnp.dot(b4, w5, preferred_element_type=jnp.float32) + b5
    return list(params[:8]) + [w45, b45] + list(params[12:])


def _prepare_kernel_params(params):
    """Fuse the bottleneck, cast weights to bf16 (biases stay f32)."""
    fused = _fuse_bottleneck(list(params))
    out = []
    for li in range(len(fused) // 2):
        out.append(fused[2 * li].astype(jnp.bfloat16))    # weight
        out.append(fused[2 * li + 1].astype(jnp.float32))  # bias
    return out


def _choose_tile(B, batch_tile):
    """Pick a batch tile that is a multiple of 8 and yields >= 4 grid steps
    when the batch allows it (>= 2 steps per v7x TensorCore => DMA overlap)."""
    if B <= batch_tile:
        return B
    bt = max(8, (batch_tile // 8) * 8)
    while bt > 8 and pl.cdiv(B, bt) < 4:
        bt = max(8, ((bt // 2) // 8) * 8)
    return bt


@functools.partial(jax.jit, static_argnames=("batch_tile",))
def _forward_impl(x, params, *, batch_tile):
    B, D = x.shape
    assert D == IN_DIM
    kparams = _prepare_kernel_params(params)

    bt = _choose_tile(B, batch_tile)
    b_pad = pl.cdiv(B, bt) * bt
    if b_pad != B:
        x = jnp.pad(x, ((0, b_pad - B), (0, 0)))
    grid = (b_pad // bt,)

    in_specs = [pl.BlockSpec((bt, D), lambda i: (i, 0))]
    # Weights/biases (~1 MiB bf16 + small f32 biases) stay VMEM-resident: the
    # constant index_map means they are fetched once and never re-fetched.
    for p in kparams:
        in_specs.append(pl.BlockSpec(p.shape, lambda i: (0, 0)))
    out_spec = pl.BlockSpec((bt, D), lambda i: (i, 0))

    # VMEM budget derived from the tile: in/out tiles double-buffered (f32),
    # params double-buffered, plus headroom for compiler-managed intermediates.
    io_bytes = 2 * 2 * bt * D * 4
    param_bytes = 2 * sum(int(p.size) * p.dtype.itemsize for p in kparams)
    scratch_bytes = 4 * bt * D * 4 + (8 << 20)
    vmem_limit = min(_VMEM_CAP_BYTES, max(32 << 20,
                                          io_bytes + param_bytes + scratch_bytes))

    cost = pl.CostEstimate(
        flops=2 * b_pad * _FUSED_MACS,
        transcendentals=b_pad * D,                       # exp in the sigmoid
        bytes_accessed=2 * b_pad * D * 4 + param_bytes // 2,
    )

    out = pl.pallas_call(
        autoencoder_kernel,
        out_shape=jax.ShapeDtypeStruct((b_pad, D), jnp.float32),
        grid_spec=pltpu.PrefetchScalarGridSpec(
            num_scalar_prefetch=0,
            grid=grid,
            in_specs=in_specs,
            out_specs=out_spec,
        ),
        compiler_params=pltpu.CompilerParams(
            dimension_semantics=("parallel",),
            vmem_limit_bytes=vmem_limit,
        ),
        cost_estimate=cost,
    )(x, *kparams)

    return out[:B] if b_pad != B else out


def autoencoder_forward(x, params, *, batch_tile=128):
    """Forward pass. `params` = [w0, b0, ..., w9, b9] for the 10 original layers."""
    return _forward_impl(x, tuple(params), batch_tile=batch_tile)


def init_params(key):
    """Deterministic PyTorch-like (uniform +-1/sqrt(fan_in)) initialization."""
    params = []
    for (fan_in, fan_out) in LAYER_DIMS:
        key, kw, kb = jax.random.split(key, 3)
        bound = 1.0 / jnp.sqrt(jnp.float32(fan_in))
        w = jax.random.uniform(kw, (fan_in, fan_out), jnp.float32, -bound, bound)
        b = jax.random.uniform(kb, (1, fan_out), jnp.float32, -bound, bound)
        params += [w, b]
    return params


def reference_forward(x, params):
    """Pure-JAX f32 reference (original unfused 10-layer stack)."""
    h = x
    for li in range(len(LAYER_DIMS)):
        w, b = params[2 * li], params[2 * li + 1]
        h = h @ w + b
        if li in LEAKY_LAYERS:
            h = jnp.where(h > 0, h, NEG_SLOPE * h)
        elif li == len(LAYER_DIMS) - 1:
            h = jax.nn.sigmoid(h)
    return h


if __name__ == "__main__":
    key = jax.random.PRNGKey(0)
    kx, kp = jax.random.split(key)

    # B=512 with batch_tile=128 -> grid of 4 "parallel" steps: 2 steps per v7x
    # TensorCore, so input/output DMAs overlap with compute; M=128 also fully
    # fills a v5e MXU pass.
    B = 512
    x = jax.random.uniform(kx, (B, IN_DIM), jnp.float32)  # MNIST-like, in [0,1)
    params = init_params(kp)

    out = autoencoder_forward(x, params, batch_tile=128)
    out = jax.block_until_ready(out)

    ref = reference_forward(x, params)
    assert out.shape == (B, IN_DIM)
    # bf16 matmul operands (f32 accumulation) + approx reciprocal in the
    # sigmoid -> compare against the f32 reference with a relaxed tolerance
    # (outputs are bounded in [0,1]).
    assert jnp.allclose(out, ref, atol=5e-2, rtol=0.0), "mismatch vs reference"

    print("KERNEL_OK")
</pallas_src>

<mosaic_0001>
module attributes {stable_mosaic.version = 11 : i64} {
  func.func @autoencoder_kernel(%arg0: i32, %arg1: memref<128x784xf32, #tpu.memory_space<vmem>>, %arg2: memref<784x256xbf16, #tpu.memory_space<vmem>>, %arg3: memref<1x256xf32, #tpu.memory_space<vmem>>, %arg4: memref<256x128xbf16, #tpu.memory_space<vmem>>, %arg5: memref<1x128xf32, #tpu.memory_space<vmem>>, %arg6: memref<128x64xbf16, #tpu.memory_space<vmem>>, %arg7: memref<1x64xf32, #tpu.memory_space<vmem>>, %arg8: memref<64x12xbf16, #tpu.memory_space<vmem>>, %arg9: memref<1x12xf32, #tpu.memory_space<vmem>>, %arg10: memref<12x12xbf16, #tpu.memory_space<vmem>>, %arg11: memref<1x12xf32, #tpu.memory_space<vmem>>, %arg12: memref<12x64xbf16, #tpu.memory_space<vmem>>, %arg13: memref<1x64xf32, #tpu.memory_space<vmem>>, %arg14: memref<64x128xbf16, #tpu.memory_space<vmem>>, %arg15: memref<1x128xf32, #tpu.memory_space<vmem>>, %arg16: memref<128x256xbf16, #tpu.memory_space<vmem>>, %arg17: memref<1x256xf32, #tpu.memory_space<vmem>>, %arg18: memref<256x784xbf16, #tpu.memory_space<vmem>>, %arg19: memref<1x784xf32, #tpu.memory_space<vmem>>, %arg20: memref<128x784xf32, #tpu.memory_space<vmem>>) attributes {dimension_semantics = [#tpu.dimension_semantics<parallel>], iteration_bounds = array<i64: 4>, scalar_prefetch = 0 : i64, scratch_operands = 0 : i64, tpu.core_type = #tpu.core_type<tc>, window_params = [{transform_indices = @transform_0, window_bounds = array<i64: 128, 784>}, {pipeline_mode = #tpu.pipeline_mode<synchronous>, transform_indices = @transform_1, window_bounds = array<i64: 784, 256>}, {pipeline_mode = #tpu.pipeline_mode<synchronous>, transform_indices = @transform_2, window_bounds = array<i64: 1, 256>}, {pipeline_mode = #tpu.pipeline_mode<synchronous>, transform_indices = @transform_3, window_bounds = array<i64: 256, 128>}, {pipeline_mode = #tpu.pipeline_mode<synchronous>, transform_indices = @transform_4, window_bounds = array<i64: 1, 128>}, {pipeline_mode = #tpu.pipeline_mode<synchronous>, transform_indices = @transform_5, window_bounds = array<i64: 128, 64>}, {pipeline_mode = #tpu.pipeline_mode<synchronous>, transform_indices = @transform_6, window_bounds = array<i64: 1, 64>}, {pipeline_mode = #tpu.pipeline_mode<synchronous>, transform_indices = @transform_7, window_bounds = array<i64: 64, 12>}, {pipeline_mode = #tpu.pipeline_mode<synchronous>, transform_indices = @transform_8, window_bounds = array<i64: 1, 12>}, {pipeline_mode = #tpu.pipeline_mode<synchronous>, transform_indices = @transform_9, window_bounds = array<i64: 12, 12>}, {pipeline_mode = #tpu.pipeline_mode<synchronous>, transform_indices = @transform_10, window_bounds = array<i64: 1, 12>}, {pipeline_mode = #tpu.pipeline_mode<synchronous>, transform_indices = @transform_11, window_bounds = array<i64: 12, 64>}, {pipeline_mode = #tpu.pipeline_mode<synchronous>, transform_indices = @transform_12, window_bounds = array<i64: 1, 64>}, {pipeline_mode = #tpu.pipeline_mode<synchronous>, transform_indices = @transform_13, window_bounds = array<i64: 64, 128>}, {pipeline_mode = #tpu.pipeline_mode<synchronous>, transform_indices = @transform_14, window_bounds = array<i64: 1, 128>}, {pipeline_mode = #tpu.pipeline_mode<synchronous>, transform_indices = @transform_15, window_bounds = array<i64: 128, 256>}, {pipeline_mode = #tpu.pipeline_mode<synchronous>, transform_indices = @transform_16, window_bounds = array<i64: 1, 256>}, {pipeline_mode = #tpu.pipeline_mode<synchronous>, transform_indices = @transform_17, window_bounds = array<i64: 256, 784>}, {pipeline_mode = #tpu.pipeline_mode<synchronous>, transform_indices = @transform_18, window_bounds = array<i64: 1, 784>}, {transform_indices = @transform_19, window_bounds = array<i64: 128, 784>}]} {
    %c0 = arith.constant 0 : index
    %c0_0 = arith.constant 0 : index
    %0 = vector.load %arg1[%c0, %c0_0] : memref<128x784xf32, #tpu.memory_space<vmem>>, vector<128x784xf32>
    %1 = arith.truncf %0 : vector<128x784xf32> to vector<128x784xbf16>
    %c0_1 = arith.constant 0 : index
    %c0_2 = arith.constant 0 : index
    %2 = vector.load %arg2[%c0_1, %c0_2] : memref<784x256xbf16, #tpu.memory_space<vmem>>, vector<784x256xbf16>
    %c0_3 = arith.constant 0 : index
    %c0_4 = arith.constant 0 : index
    %3 = vector.load %arg3[%c0_3, %c0_4] : memref<1x256xf32, #tpu.memory_space<vmem>>, vector<1x256xf32>
    %cst = arith.constant dense<0.000000e+00> : vector<128x256xf32>
    %4 = tpu.matmul %1, %2, %cst {dimension_numbers = #tpu.dot_dimension_numbers<[1], [0], [0], [1], [0, 0, 1, 1], [], []>} : vector<128x784xbf16>, vector<784x256xbf16>, vector<128x256xf32> -> vector<128x256xf32>
    %5 = vector.broadcast %3 : vector<1x256xf32> to vector<128x256xf32>
    %6 = arith.addf %4, %5 : vector<128x256xf32>
    %cst_5 = arith.constant 0.00999999977 : f32
    %7 = vector.broadcast %cst_5 : f32 to vector<128x256xf32>
    %8 = arith.mulf %7, %6 : vector<128x256xf32>
    %9 = arith.maximumf %6, %8 : vector<128x256xf32>
    %10 = arith.truncf %9 : vector<128x256xf32> to vector<128x256xbf16>
    %c0_6 = arith.constant 0 : index
    %c0_7 = arith.constant 0 : index
    %11 = vector.load %arg4[%c0_6, %c0_7] : memref<256x128xbf16, #tpu.memory_space<vmem>>, vector<256x128xbf16>
    %c0_8 = arith.constant 0 : index
    %c0_9 = arith.constant 0 : index
    %12 = vector.load %arg5[%c0_8, %c0_9] : memref<1x128xf32, #tpu.memory_space<vmem>>, vector<1x128xf32>
    %cst_10 = arith.constant dense<0.000000e+00> : vector<128x128xf32>
    %13 = tpu.matmul %10, %11, %cst_10 {dimension_numbers = #tpu.dot_dimension_numbers<[1], [0], [0], [1], [0, 0, 1, 1], [], []>} : vector<128x256xbf16>, vector<256x128xbf16>, vector<128x128xf32> -> vector<128x128xf32>
    %14 = vector.broadcast %12 : vector<1x128xf32> to vector<128x128xf32>
    %15 = arith.addf %13, %14 : vector<128x128xf32>
    %cst_11 = arith.constant 0.00999999977 : f32
    %16 = vector.broadcast %cst_11 : f32 to vector<128x128xf32>
    %17 = arith.mulf %16, %15 : vector<128x128xf32>
    %18 = arith.maximumf %15, %17 : vector<128x128xf32>
    %19 = arith.truncf %18 : vector<128x128xf32> to vector<128x128xbf16>
    %c0_12 = arith.constant 0 : index
    %c0_13 = arith.constant 0 : index
    %20 = vector.load %arg6[%c0_12, %c0_13] : memref<128x64xbf16, #tpu.memory_space<vmem>>, vector<128x64xbf16>
    %c0_14 = arith.constant 0 : index
    %c0_15 = arith.constant 0 : index
    %21 = vector.load %arg7[%c0_14, %c0_15] : memref<1x64xf32, #tpu.memory_space<vmem>>, vector<1x64xf32>
    %cst_16 = arith.constant dense<0.000000e+00> : vector<128x64xf32>
    %22 = tpu.matmul %19, %20, %cst_16 {dimension_numbers = #tpu.dot_dimension_numbers<[1], [0], [0], [1], [0, 0, 1, 1], [], []>} : vector<128x128xbf16>, vector<128x64xbf16>, vector<128x64xf32> -> vector<128x64xf32>
    %23 = vector.broadcast %21 : vector<1x64xf32> to vector<128x64xf32>
    %24 = arith.addf %22, %23 : vector<128x64xf32>
    %cst_17 = arith.constant 0.00999999977 : f32
    %25 = vector.broadcast %cst_17 : f32 to vector<128x64xf32>
    %26 = arith.mulf %25, %24 : vector<128x64xf32>
    %27 = arith.maximumf %24, %26 : vector<128x64xf32>
    %28 = arith.truncf %27 : vector<128x64xf32> to vector<128x64xbf16>
    %c0_18 = arith.constant 0 : index
    %c0_19 = arith.constant 0 : index
    %29 = vector.load %arg8[%c0_18, %c0_19] : memref<64x12xbf16, #tpu.memory_space<vmem>>, vector<64x12xbf16>
    %c0_20 = arith.constant 0 : index
    %c0_21 = arith.constant 0 : index
    %30 = vector.load %arg9[%c0_20, %c0_21] : memref<1x12xf32, #tpu.memory_space<vmem>>, vector<1x12xf32>
    %cst_22 = arith.constant dense<0.000000e+00> : vector<128x12xf32>
    %31 = tpu.matmul %28, %29, %cst_22 {dimension_numbers = #tpu.dot_dimension_numbers<[1], [0], [0], [1], [0, 0, 1, 1], [], []>} : vector<128x64xbf16>, vector<64x12xbf16>, vector<128x12xf32> -> vector<128x12xf32>
    %32 = vector.broadcast %30 : vector<1x12xf32> to vector<128x12xf32>
    %33 = arith.addf %31, %32 : vector<128x12xf32>
    %cst_23 = arith.constant 0.00999999977 : f32
    %34 = vector.broadcast %cst_23 : f32 to vector<128x12xf32>
    %35 = arith.mulf %34, %33 : vector<128x12xf32>
    %36 = arith.maximumf %33, %35 : vector<128x12xf32>
    %37 = arith.truncf %36 : vector<128x12xf32> to vector<128x12xbf16>
    %c0_24 = arith.constant 0 : index
    %c0_25 = arith.constant 0 : index
    %38 = vector.load %arg10[%c0_24, %c0_25] : memref<12x12xbf16, #tpu.memory_space<vmem>>, vector<12x12xbf16>
    %c0_26 = arith.constant 0 : index
    %c0_27 = arith.constant 0 : index
    %39 = vector.load %arg11[%c0_26, %c0_27] : memref<1x12xf32, #tpu.memory_space<vmem>>, vector<1x12xf32>
    %cst_28 = arith.constant dense<0.000000e+00> : vector<128x12xf32>
    %40 = tpu.matmul %37, %38, %cst_28 {dimension_numbers = #tpu.dot_dimension_numbers<[1], [0], [0], [1], [0, 0, 1, 1], [], []>} : vector<128x12xbf16>, vector<12x12xbf16>, vector<128x12xf32> -> vector<128x12xf32>
    %41 = vector.broadcast %39 : vector<1x12xf32> to vector<128x12xf32>
    %42 = arith.addf %40, %41 : vector<128x12xf32>
    %cst_29 = arith.constant 0.00999999977 : f32
    %43 = vector.broadcast %cst_29 : f32 to vector<128x12xf32>
    %44 = arith.mulf %43, %42 : vector<128x12xf32>
    %45 = arith.maximumf %42, %44 : vector<128x12xf32>
    %46 = arith.truncf %45 : vector<128x12xf32> to vector<128x12xbf16>
    %c0_30 = arith.constant 0 : index
    %c0_31 = arith.constant 0 : index
    %47 = vector.load %arg12[%c0_30, %c0_31] : memref<12x64xbf16, #tpu.memory_space<vmem>>, vector<12x64xbf16>
    %c0_32 = arith.constant 0 : index
    %c0_33 = arith.constant 0 : index
    %48 = vector.load %arg13[%c0_32, %c0_33] : memref<1x64xf32, #tpu.memory_space<vmem>>, vector<1x64xf32>
    %cst_34 = arith.constant dense<0.000000e+00> : vector<128x64xf32>
    %49 = tpu.matmul %46, %47, %cst_34 {dimension_numbers = #tpu.dot_dimension_numbers<[1], [0], [0], [1], [0, 0, 1, 1], [], []>} : vector<128x12xbf16>, vector<12x64xbf16>, vector<128x64xf32> -> vector<128x64xf32>
    %50 = vector.broadcast %48 : vector<1x64xf32> to vector<128x64xf32>
    %51 = arith.addf %49, %50 : vector<128x64xf32>
    %cst_35 = arith.constant 0.00999999977 : f32
    %52 = vector.broadcast %cst_35 : f32 to vector<128x64xf32>
    %53 = arith.mulf %52, %51 : vector<128x64xf32>
    %54 = arith.maximumf %51, %53 : vector<128x64xf32>
    %55 = arith.truncf %54 : vector<128x64xf32> to vector<128x64xbf16>
    %c0_36 = arith.constant 0 : index
    %c0_37 = arith.constant 0 : index
    %56 = vector.load %arg14[%c0_36, %c0_37] : memref<64x128xbf16, #tpu.memory_space<vmem>>, vector<64x128xbf16>
    %c0_38 = arith.constant 0 : index
    %c0_39 = arith.constant 0 : index
    %57 = vector.load %arg15[%c0_38, %c0_39] : memref<1x128xf32, #tpu.memory_space<vmem>>, vector<1x128xf32>
    %cst_40 = arith.constant dense<0.000000e+00> : vector<128x128xf32>
    %58 = tpu.matmul %55, %56, %cst_40 {dimension_numbers = #tpu.dot_dimension_numbers<[1], [0], [0], [1], [0, 0, 1, 1], [], []>} : vector<128x64xbf16>, vector<64x128xbf16>, vector<128x128xf32> -> vector<128x128xf32>
    %59 = vector.broadcast %57 : vector<1x128xf32> to vector<128x128xf32>
    %60 = arith.addf %58, %59 : vector<128x128xf32>
    %cst_41 = arith.constant 0.00999999977 : f32
    %61 = vector.broadcast %cst_41 : f32 to vector<128x128xf32>
    %62 = arith.mulf %61, %60 : vector<128x128xf32>
    %63 = arith.maximumf %60, %62 : vector<128x128xf32>
    %64 = arith.truncf %63 : vector<128x128xf32> to vector<128x128xbf16>
    %c0_42 = arith.constant 0 : index
    %c0_43 = arith.constant 0 : index
    %65 = vector.load %arg16[%c0_42, %c0_43] : memref<128x256xbf16, #tpu.memory_space<vmem>>, vector<128x256xbf16>
    %c0_44 = arith.constant 0 : index
    %c0_45 = arith.constant 0 : index
    %66 = vector.load %arg17[%c0_44, %c0_45] : memref<1x256xf32, #tpu.memory_space<vmem>>, vector<1x256xf32>
    %cst_46 = arith.constant dense<0.000000e+00> : vector<128x256xf32>
    %67 = tpu.matmul %64, %65, %cst_46 {dimension_numbers = #tpu.dot_dimension_numbers<[1], [0], [0], [1], [0, 0, 1, 1], [], []>} : vector<128x128xbf16>, vector<128x256xbf16>, vector<128x256xf32> -> vector<128x256xf32>
    %68 = vector.broadcast %66 : vector<1x256xf32> to vector<128x256xf32>
    %69 = arith.addf %67, %68 : vector<128x256xf32>
    %cst_47 = arith.constant 0.00999999977 : f32
    %70 = vector.broadcast %cst_47 : f32 to vector<128x256xf32>
    %71 = arith.mulf %70, %69 : vector<128x256xf32>
    %72 = arith.maximumf %69, %71 : vector<128x256xf32>
    %73 = arith.truncf %72 : vector<128x256xf32> to vector<128x256xbf16>
    %c0_48 = arith.constant 0 : index
    %c0_49 = arith.constant 0 : index
    %74 = vector.load %arg18[%c0_48, %c0_49] : memref<256x784xbf16, #tpu.memory_space<vmem>>, vector<256x784xbf16>
    %c0_50 = arith.constant 0 : index
    %c0_51 = arith.constant 0 : index
    %75 = vector.load %arg19[%c0_50, %c0_51] : memref<1x784xf32, #tpu.memory_space<vmem>>, vector<1x784xf32>
    %cst_52 = arith.constant dense<0.000000e+00> : vector<128x784xf32>
    %76 = tpu.matmul %73, %74, %cst_52 {dimension_numbers = #tpu.dot_dimension_numbers<[1], [0], [0], [1], [0, 0, 1, 1], [], []>} : vector<128x256xbf16>, vector<256x784xbf16>, vector<128x784xf32> -> vector<128x784xf32>
    %77 = vector.broadcast %75 : vector<1x784xf32> to vector<128x784xf32>
    %78 = arith.addf %76, %77 : vector<128x784xf32>
    %cst_53 = arith.constant 0.000000e+00 : f32
    %79 = vector.broadcast %cst_53 : f32 to vector<128x784xf32>
    %80 = arith.subf %79, %78 : vector<128x784xf32>
    %81 = math.exp %80 : vector<128x784xf32>
    %cst_54 = arith.constant 1.000000e+00 : f32
    %82 = vector.broadcast %cst_54 : f32 to vector<128x784xf32>
    %83 = arith.addf %82, %81 : vector<128x784xf32>
    %84 = tpu.reciprocal %83 {approx = true} : vector<128x784xf32> -> vector<128x784xf32>
    %c0_55 = arith.constant 0 : index
    %c0_56 = arith.constant 0 : index
    %85 = vector.load %arg20[%c0_55, %c0_56] : memref<128x784xf32, #tpu.memory_space<vmem>>, vector<128x784xf32>
    tpu.vector_store %arg20[%c0_55, %c0_56], %84 {strides = array<i32>} : memref<128x784xf32, #tpu.memory_space<vmem>>, vector<128x784xf32>,
    return
  }
  func.func @transform_0(%arg0: i32) -> (i32, i32) {
    %c0_i32 = arith.constant 0 : i32
    %c0_i32_0 = arith.constant 0 : i32
    return %arg0, %c0_i32 : i32, i32
  }
  func.func @transform_1(%arg0: i32) -> (i32, i32) {
    %c0_i32 = arith.constant 0 : i32
    %c0_i32_0 = arith.constant 0 : i32
    %c0_i32_1 = arith.constant 0 : i32
    return %c0_i32, %c0_i32_0 : i32, i32
  }
  func.func @transform_2(%arg0: i32) -> (i32, i32) {
    %c0_i32 = arith.constant 0 : i32
    %c0_i32_0 = arith.constant 0 : i32
    %c0_i32_1 = arith.constant 0 : i32
    return %c0_i32, %c0_i32_0 : i32, i32
  }
  func.func @transform_3(%arg0: i32) -> (i32, i32) {
    %c0_i32 = arith.constant 0 : i32
    %c0_i32_0 = arith.constant 0 : i32
    %c0_i32_1 = arith.constant 0 : i32
    return %c0_i32, %c0_i32_0 : i32, i32
  }
  func.func @transform_4(%arg0: i32) -> (i32, i32) {
    %c0_i32 = arith.constant 0 : i32
    %c0_i32_0 = arith.constant 0 : i32
    %c0_i32_1 = arith.constant 0 : i32
    return %c0_i32, %c0_i32_0 : i32, i32
  }
  func.func @transform_5(%arg0: i32) -> (i32, i32) {
    %c0_i32 = arith.constant 0 : i32
    %c0_i32_0 = arith.constant 0 : i32
    %c0_i32_1 = arith.constant 0 : i32
    return %c0_i32, %c0_i32_0 : i32, i32
  }
  func.func @transform_6(%arg0: i32) -> (i32, i32) {
    %c0_i32 = arith.constant 0 : i32
    %c0_i32_0 = arith.constant 0 : i32
    %c0_i32_1 = arith.constant 0 : i32
    return %c0_i32, %c0_i32_0 : i32, i32
  }
  func.func @transform_7(%arg0: i32) -> (i32, i32) {
    %c0_i32 = arith.constant 0 : i32
    %c0_i32_0 = arith.constant 0 : i32
    %c0_i32_1 = arith.constant 0 : i32
    return %c0_i32, %c0_i32_0 : i32, i32
  }
  func.func @transform_8(%arg0: i32) -> (i32, i32) {
    %c0_i32 = arith.constant 0 : i32
    %c0_i32_0 = arith.constant 0 : i32
    %c0_i32_1 = arith.constant 0 : i32
    return %c0_i32, %c0_i32_0 : i32, i32
  }
  func.func @transform_9(%arg0: i32) -> (i32, i32) {
    %c0_i32 = arith.constant 0 : i32
    %c0_i32_0 = arith.constant 0 : i32
    %c0_i32_1 = arith.constant 0 : i32
    return %c0_i32, %c0_i32_0 : i32, i32
  }
  func.func @transform_10(%arg0: i32) -> (i32, i32) {
    %c0_i32 = arith.constant 0 : i32
    %c0_i32_0 = arith.constant 0 : i32
    %c0_i32_1 = arith.constant 0 : i32
    return %c0_i32, %c0_i32_0 : i32, i32
  }
  func.func @transform_11(%arg0: i32) -> (i32, i32) {
    %c0_i32 = arith.constant 0 : i32
    %c0_i32_0 = arith.constant 0 : i32
    %c0_i32_1 = arith.constant 0 : i32
    return %c0_i32, %c0_i32_0 : i32, i32
  }
  func.func @transform_12(%arg0: i32) -> (i32, i32) {
    %c0_i32 = arith.constant 0 : i32
    %c0_i32_0 = arith.constant 0 : i32
    %c0_i32_1 = arith.constant 0 : i32
    return %c0_i32, %c0_i32_0 : i32, i32
  }
  func.func @transform_13(%arg0: i32) -> (i32, i32) {
    %c0_i32 = arith.constant 0 : i32
    %c0_i32_0 = arith.constant 0 : i32
    %c0_i32_1 = arith.constant 0 : i32
    return %c0_i32, %c0_i32_0 : i32, i32
  }
  func.func @transform_14(%arg0: i32) -> (i32, i32) {
    %c0_i32 = arith.constant 0 : i32
    %c0_i32_0 = arith.constant 0 : i32
    %c0_i32_1 = arith.constant 0 : i32
    return %c0_i32, %c0_i32_0 : i32, i32
  }
  func.func @transform_15(%arg0: i32) -> (i32, i32) {
    %c0_i32 = arith.constant 0 : i32
    %c0_i32_0 = arith.constant 0 : i32
    %c0_i32_1 = arith.constant 0 : i32
    return %c0_i32, %c0_i32_0 : i32, i32
  }
  func.func @transform_16(%arg0: i32) -> (i32, i32) {
    %c0_i32 = arith.constant 0 : i32
    %c0_i32_0 = arith.constant 0 : i32
    %c0_i32_1 = arith.constant 0 : i32
    return %c0_i32, %c0_i32_0 : i32, i32
  }
  func.func @transform_17(%arg0: i32) -> (i32, i32) {
    %c0_i32 = arith.constant 0 : i32
    %c0_i32_0 = arith.constant 0 : i32
    %c0_i32_1 = arith.constant 0 : i32
    return %c0_i32, %c0_i32_0 : i32, i32
  }
  func.func @transform_18(%arg0: i32) -> (i32, i32) {
    %c0_i32 = arith.constant 0 : i32
    %c0_i32_0 = arith.constant 0 : i32
    %c0_i32_1 = arith.constant 0 : i32
    return %c0_i32, %c0_i32_0 : i32, i32
  }
  func.func @transform_19(%arg0: i32) -> (i32, i32) {
    %c0_i32 = arith.constant 0 : i32
    %c0_i32_0 = arith.constant 0 : i32
    return %arg0, %c0_i32 : i32, i32
  }
}

</mosaic_0001>

<llo_original>
// kernel: _forward_impl.1
$region0: #{_forward_impl.1}
  #allocation0 [shape = 'u32[]', space=smem, size = 0x4, offset = 0x4, fixed_abs, tag = 'smem constant byte address 0x4 - core index']
  #allocation1 [shape = 'u32[144,128]{1,0:T(1,128)}', space=vmem, size = 0x12000, scoped, tag = 'internal scratch']
  %s0 = inlined_call_operand.vmem [shape: f32[512,784], index: 0, kind: input, shape index: {}]
  %s1 = inlined_call_operand.vmem [shape: bf16[784,256], index: 1, kind: input, shape index: {}]
  %s2 = inlined_call_operand.vmem [shape: f32[1,256], index: 2, kind: input, shape index: {}]
  %s3 = inlined_call_operand.vmem [shape: bf16[256,128], index: 3, kind: input, shape index: {}]
  %s4 = inlined_call_operand.vmem [shape: f32[1,128], index: 4, kind: input, shape index: {}]
  %s5 = inlined_call_operand.vmem [shape: bf16[128,64], index: 5, kind: input, shape index: {}]
  %s6 = inlined_call_operand.vmem [shape: f32[1,64], index: 6, kind: input, shape index: {}]
  %s7 = inlined_call_operand.vmem [shape: bf16[64,12], index: 7, kind: input, shape index: {}]
  %s8 = inlined_call_operand.vmem [shape: f32[1,12], index: 8, kind: input, shape index: {}]
  %s9 = inlined_call_operand.vmem [shape: bf16[12,12], index: 9, kind: input, shape index: {}]
  %s10 = inlined_call_operand.vmem [shape: f32[1,12], index: 10, kind: input, shape index: {}]
  %s11 = inlined_call_operand.vmem [shape: bf16[12,64], index: 11, kind: input, shape index: {}]
  %s12 = inlined_call_operand.vmem [shape: f32[1,64], index: 12, kind: input, shape index: {}]
  %s13 = inlined_call_operand.vmem [shape: bf16[64,128], index: 13, kind: input, shape index: {}]
  %s14 = inlined_call_operand.vmem [shape: f32[1,128], index: 14, kind: input, shape index: {}]
  %s15 = inlined_call_operand.vmem [shape: bf16[128,256], index: 15, kind: input, shape index: {}]
  %s16 = inlined_call_operand.vmem [shape: f32[1,256], index: 16, kind: input, shape index: {}]
  %s17 = inlined_call_operand.vmem [shape: bf16[256,784], index: 17, kind: input, shape index: {}]
  %s18 = inlined_call_operand.vmem [shape: f32[1,784], index: 18, kind: input, shape index: {}]
  %s19 = inlined_call_operand.vmem [shape: f32[512,784], index: 19, kind: output, shape index: {}]
  %s20 = sld [smem:[#allocation0]]
  $region109: #{_forward_impl.1} parent=0
    _
  %s22 = ssub.s32 1, %s20
  %s23 = scalar_select 0, %s22, %s20
  loop: start=0, step=1, limit=6
  $region2: #{_forward_impl.1} parent=0 // loop_pre_header
    _
  $region3: #{_forward_impl.1} parent=0 // loop_header
    %s25 = sphi 0, %s29
    %p26 = scmp.ge.s32.totalorder %s25, 6
    %s35 = sphi 0, %s37
    %s38 = sphi 0, %s35
    %s39 = sphi 0, %s38
    %s55 = sphi 0, %s39
    %s59 = sphi 0, %s59
    %s61 = sphi 0, %s59
    %s62 = sphi 0, %s61
    %s76 = sphi 0, %s62
    %s80 = sphi 0, %s80
    %s82 = sphi 0, %s80
    %s83 = sphi 0, %s82
    %s97 = sphi 0, %s83
    %s101 = sphi 0, %s101
    %s103 = sphi 0, %s101
    %s104 = sphi 0, %s103
    %s118 = sphi 0, %s104
    %s122 = sphi 0, %s122
    %s124 = sphi 0, %s122
    %s125 = sphi 0, %s124
    %s139 = sphi 0, %s125
    %s143 = sphi 0, %s143
    %s145 = sphi 0, %s143
    %s146 = sphi 0, %s145
    %s160 = sphi 0, %s146
    %s164 = sphi 0, %s164
    %s166 = sphi 0, %s164
    %s167 = sphi 0, %s166
    %s181 = sphi 0, %s167
    %s185 = sphi 0, %s185
    %s187 = sphi 0, %s185
    %s188 = sphi 0, %s187
    %s202 = sphi 0, %s188
    %s206 = sphi 0, %s206
    %s208 = sphi 0, %s206
    %s209 = sphi 0, %s208
    %s223 = sphi 0, %s209
    %s227 = sphi 0, %s227
    %s229 = sphi 0, %s227
    %s230 = sphi 0, %s229
    %s244 = sphi 0, %s230
    %s248 = sphi 0, %s248
    %s250 = sphi 0, %s248
    %s251 = sphi 0, %s250
    %s265 = sphi 0, %s251
    %s269 = sphi 0, %s269
    %s271 = sphi 0, %s269
    %s272 = sphi 0, %s271
    %s286 = sphi 0, %s272
    %s290 = sphi 0, %s290
    %s292 = sphi 0, %s290
    %s293 = sphi 0, %s292
    %s307 = sphi 0, %s293
    %s311 = sphi 0, %s311
    %s313 = sphi 0, %s311
    %s314 = sphi 0, %s313
    %s328 = sphi 0, %s314
    %s332 = sphi 0, %s332
    %s334 = sphi 0, %s332
    %s335 = sphi 0, %s334
    %s349 = sphi 0, %s335
    %s353 = sphi 0, %s353
    %s355 = sphi 0, %s353
    %s356 = sphi 0, %s355
    %s370 = sphi 0, %s356
    %s374 = sphi 0, %s374
    %s376 = sphi 0, %s374
    %s377 = sphi 0, %s376
    %s391 = sphi 0, %s377
    %s395 = sphi 0, %s395
    %s397 = sphi 0, %s395
    %s398 = sphi 0, %s397
    %s412 = sphi 0, %s398
    %s416 = sphi 0, %s416
    %s418 = sphi 0, %s416
    %s419 = sphi 0, %s418
    %s433 = sphi 0, %s419
    %s439 = sphi 0, %s441
    %s442 = sphi 0, %s439
    %s443 = sphi 0, %s442
    %s459 = sphi 0, %s443
  $region4: #{_forward_impl.1} parent=0 // loop_header_branch
    %28 = sbr.rel (%p26) target = $region8
  $region5: #{_forward_impl.1} parent=0 // loop_body
    %s30 = ssub.s32 %s25, 1
    %s31 = ssub.s32 %s25, 2
    %s32 = sadd.s32 %s25, 1
    %s33 = ssub.s32 %s25, %s32
    %p34 = scmp.eq.s32.totalorder %s33, 0
    %s36 = sadd.s32 %s35, 1
    %s37 = scalar_select %p34, %s35, %s36
    %p40 = pneg %p34
    %p41 = scmp.eq.s32.totalorder %s25, 3
    %p42 = por %p40, %p41
    %p43 = scmp.ne.s32.totalorder %s35, %s38
    %p44 = scmp.eq.s32.totalorder %s25, 0
    %p45 = por %p43, %p44
    %p46 = scmp.ne.s32.totalorder %s35, %s38
    %p47 = scmp.eq.s32.totalorder %s30, 3
    %p48 = por %p46, %p47
    %p49 = scmp.ne.s32.totalorder %s38, %s39
    %p50 = scmp.eq.s32.totalorder %s30, 0
    %p51 = por %p49, %p50
    %p52 = scmp.ne.s32.totalorder %s38, %s39
    %p53 = scmp.eq.s32.totalorder %s31, 3
    %p54 = por %p52, %p53
    %p56 = scmp.ne.s32.totalorder %s39, %s55
    %p57 = scmp.eq.s32.totalorder %s31, 0
    %p58 = por %p56, %p57
    %s60 = sadd.s32 %s59, 1
    %p63 = scmp.eq.s32.totalorder %s25, 3
    %p64 = scmp.ne.s32.totalorder %s59, %s61
    %p65 = scmp.eq.s32.totalorder %s25, 0
    %p66 = por %p64, %p65
    %p67 = scmp.ne.s32.totalorder %s59, %s61
    %p68 = scmp.eq.s32.totalorder %s30, 3
    %p69 = por %p67, %p68
    %p70 = scmp.ne.s32.totalorder %s61, %s62
    %p71 = scmp.eq.s32.totalorder %s30, 0
    %p72 = por %p70, %p71
    %p73 = scmp.ne.s32.totalorder %s61, %s62
    %p74 = scmp.eq.s32.totalorder %s31, 3
    %p75 = por %p73, %p74
    %p77 = scmp.ne.s32.totalorder %s62, %s76
    %p78 = scmp.eq.s32.totalorder %s31, 0
    %p79 = por %p77, %p78
    %s81 = sadd.s32 %s80, 1
    %p84 = scmp.eq.s32.totalorder %s25, 3
    %p85 = scmp.ne.s32.totalorder %s80, %s82
    %p86 = scmp.eq.s32.totalorder %s25, 0
    %p87 = por %p85, %p86
    %p88 = scmp.ne.s32.totalorder %s80, %s82
    %p89 = scmp.eq.s32.totalorder %s30, 3
    %p90 = por %p88, %p89
    %p91 = scmp.ne.s32.totalorder %s82, %s83
    %p92 = scmp.eq.s32.totalorder %s30, 0
    %p93 = por %p91, %p92
    %p94 = scmp.ne.s32.totalorder %s82, %s83
    %p95 = scmp.eq.s32.totalorder %s31, 3
    %p96 = por %p94, %p95
    %p98 = scmp.ne.s32.totalorder %s83, %s97
    %p99 = scmp.eq.s32.totalorder %s31, 0
    %p100 = por %p98, %p99
    %s102 = sadd.s32 %s101, 1
    %p105 = scmp.eq.s32.totalorder %s25, 3
    %p106 = scmp.ne.s32.totalorder %s101, %s103
    %p107 = scmp.eq.s32.totalorder %s25, 0
    %p108 = por %p106, %p107
    %p109 = scmp.ne.s32.totalorder %s101, %s103
    %p110 = scmp.eq.s32.totalorder %s30, 3
    %p111 = por %p109, %p110
    %p112 = scmp.ne.s32.totalorder %s103, %s104
    %p113 = scmp.eq.s32.totalorder %s30, 0
    %p114 = por %p112, %p113
    %p115 = scmp.ne.s32.totalorder %s103, %s104
    %p116 = scmp.eq.s32.totalorder %s31, 3
    %p117 = por %p115, %p116
    %p119 = scmp.ne.s32.totalorder %s104, %s118
    %p120 = scmp.eq.s32.totalorder %s31, 0
    %p121 = por %p119, %p120
    %s123 = sadd.s32 %s122, 1
    %p126 = scmp.eq.s32.totalorder %s25, 3
    %p127 = scmp.ne.s32.totalorder %s122, %s124
    %p128 = scmp.eq.s32.totalorder %s25, 0
    %p129 = por %p127, %p128
    %p130 = scmp.ne.s32.totalorder %s122, %s124
    %p131 = scmp.eq.s32.totalorder %s30, 3
    %p132 = por %p130, %p131
    %p133 = scmp.ne.s32.totalorder %s124, %s125
    %p134 = scmp.eq.s32.totalorder %s30, 0
    %p135 = por %p133, %p134
    %p136 = scmp.ne.s32.totalorder %s124, %s125
    %p137 = scmp.eq.s32.totalorder %s31, 3
    %p138 = por %p136, %p137
    %p140 = scmp.ne.s32.totalorder %s125, %s139
    %p141 = scmp.eq.s32.totalorder %s31, 0
    %p142 = por %p140, %p141
    %s144 = sadd.s32 %s143, 1
    %p147 = scmp.eq.s32.totalorder %s25, 3
    %p148 = scmp.ne.s32.totalorder %s143, %s145
    %p149 = scmp.eq.s32.totalorder %s25, 0
    %p150 = por %p148, %p149
    %p151 = scmp.ne.s32.totalorder %s143, %s145
    %p152 = scmp.eq.s32.totalorder %s30, 3
    %p153 = por %p151, %p152
    %p154 = scmp.ne.s32.totalorder %s145, %s146
    %p155 = scmp.eq.s32.totalorder %s30, 0
    %p156 = por %p154, %p155
    %p157 = scmp.ne.s32.totalorder %s145, %s146
    %p158 = scmp.eq.s32.totalorder %s31, 3
    %p159 = por %p157, %p158
    %p161 = scmp.ne.s32.totalorder %s146, %s160
    %p162 = scmp.eq.s32.totalorder %s31, 0
    %p163 = por %p161, %p162
    %s165 = sadd.s32 %s164, 1
    %p168 = scmp.eq.s32.totalorder %s25, 3
    %p169 = scmp.ne.s32.totalorder %s164, %s166
    %p170 = scmp.eq.s32.totalorder %s25, 0
    %p171 = por %p169, %p170
    %p172 = scmp.ne.s32.totalorder %s164, %s166
    %p173 = scmp.eq.s32.totalorder %s30, 3
    %p174 = por %p172, %p173
    %p175 = scmp.ne.s32.totalorder %s166, %s167
    %p176 = scmp.eq.s32.totalorder %s30, 0
    %p177 = por %p175, %p176
    %p178 = scmp.ne.s32.totalorder %s166, %s167
    %p179 = scmp.eq.s32.totalorder %s31, 3
    %p180 = por %p178, %p179
    %p182 = scmp.ne.s32.totalorder %s167, %s181
    %p183 = scmp.eq.s32.totalorder %s31, 0
    %p184 = por %p182, %p183
    %s186 = sadd.s32 %s185, 1
    %p189 = scmp.eq.s32.totalorder %s25, 3
    %p190 = scmp.ne.s32.totalorder %s185, %s187
    %p191 = scmp.eq.s32.totalorder %s25, 0
    %p192 = por %p190, %p191
    %p193 = scmp.ne.s32.totalorder %s185, %s187
    %p194 = scmp.eq.s32.totalorder %s30, 3
    %p195 = por %p193, %p194
    %p196 = scmp.ne.s32.totalorder %s187, %s188
    %p197 = scmp.eq.s32.totalorder %s30, 0
    %p198 = por %p196, %p197
    %p199 = scmp.ne.s32.totalorder %s187, %s188
    %p200 = scmp.eq.s32.totalorder %s31, 3
    %p201 = por %p199, %p200
    %p203 = scmp.ne.s32.totalorder %s188, %s202
    %p204 = scmp.eq.s32.totalorder %s31, 0
    %p205 = por %p203, %p204
    %s207 = sadd.s32 %s206, 1
    %p210 = scmp.eq.s32.totalorder %s25, 3
    %p211 = scmp.ne.s32.totalorder %s206, %s208
    %p212 = scmp.eq.s32.totalorder %s25, 0
    %p213 = por %p211, %p212
    %p214 = scmp.ne.s32.totalorder %s206, %s208
    %p215 = scmp.eq.s32.totalorder %s30, 3
    %p216 = por %p214, %p215
    %p217 = scmp.ne.s32.totalorder %s208, %s209
    %p218 = scmp.eq.s32.totalorder %s30, 0
    %p219 = por %p217, %p218
    %p220 = scmp.ne.s32.totalorder %s208, %s209
    %p221 = scmp.eq.s32.totalorder %s31, 3
    %p222 = por %p220, %p221
    %p224 = scmp.ne.s32.totalorder %s209, %s223
    %p225 = scmp.eq.s32.totalorder %s31, 0
    %p226 = por %p224, %p225
    %s228 = sadd.s32 %s227, 1
    %p231 = scmp.eq.s32.totalorder %s25, 3
    %p232 = scmp.ne.s32.totalorder %s227, %s229
    %p233 = scmp.eq.s32.totalorder %s25, 0
    %p234 = por %p232, %p233
    %p235 = scmp.ne.s32.totalorder %s227, %s229
    %p236 = scmp.eq.s32.totalorder %s30, 3
    %p237 = por %p235, %p236
    %p238 = scmp.ne.s32.totalorder %s229, %s230
    %p239 = scmp.eq.s32.totalorder %s30, 0
    %p240 = por %p238, %p239
    %p241 = scmp.ne.s32.totalorder %s229, %s230
    %p242 = scmp.eq.s32.totalorder %s31, 3
    %p243 = por %p241, %p242
    %p245 = scmp.ne.s32.totalorder %s230, %s244
    %p246 = scmp.eq.s32.totalorder %s31, 0
    %p247 = por %p245, %p246
    %s249 = sadd.s32 %s248, 1
    %p252 = scmp.eq.s32.totalorder %s25, 3
    %p253 = scmp.ne.s32.totalorder %s248, %s250
    %p254 = scmp.eq.s32.totalorder %s25, 0
    %p255 = por %p253, %p254
    %p256 = scmp.ne.s32.totalorder %s248, %s250
    %p257 = scmp.eq.s32.totalorder %s30, 3
    %p258 = por %p256, %p257
    %p259 = scmp.ne.s32.totalorder %s250, %s251
    %p260 = scmp.eq.s32.totalorder %s30, 0
    %p261 = por %p259, %p260
    %p262 = scmp.ne.s32.totalorder %s250, %s251
    %p263 = scmp.eq.s32.totalorder %s31, 3
    %p264 = por %p262, %p263
    %p266 = scmp.ne.s32.totalorder %s251, %s265
    %p267 = scmp.eq.s32.totalorder %s31, 0
    %p268 = por %p266, %p267
    %s270 = sadd.s32 %s269, 1
    %p273 = scmp.eq.s32.totalorder %s25, 3
    %p274 = scmp.ne.s32.totalorder %s269, %s271
    %p275 = scmp.eq.s32.totalorder %s25, 0
    %p276 = por %p274, %p275
    %p277 = scmp.ne.s32.totalorder %s269, %s271
    %p278 = scmp.eq.s32.totalorder %s30, 3
    %p279 = por %p277, %p278
    %p280 = scmp.ne.s32.totalorder %s271, %s272
    %p281 = scmp.eq.s32.totalorder %s30, 0
    %p282 = por %p280, %p281
    %p283 = scmp.ne.s32.totalorder %s271, %s272
    %p284 = scmp.eq.s32.totalorder %s31, 3
    %p285 = por %p283, %p284
    %p287 = scmp.ne.s32.totalorder %s272, %s286
    %p288 = scmp.eq.s32.totalorder %s31, 0
    %p289 = por %p287, %p288
    %s291 = sadd.s32 %s290, 1
    %p294 = scmp.eq.s32.totalorder %s25, 3
    %p295 = scmp.ne.s32.totalorder %s290, %s292
    %p296 = scmp.eq.s32.totalorder %s25, 0
    %p297 = por %p295, %p296
    %p298 = scmp.ne.s32.totalorder %s290, %s292
    %p299 = scmp.eq.s32.totalorder %s30, 3
    %p300 = por %p298, %p299
    %p301 = scmp.ne.s32.totalorder %s292, %s293
    %p302 = scmp.eq.s32.totalorder %s30, 0
    %p303 = por %p301, %p302
    %p304 = scmp.ne.s32.totalorder %s292, %s293
    %p305 = scmp.eq.s32.totalorder %s31, 3
    %p306 = por %p304, %p305
    %p308 = scmp.ne.s32.totalorder %s293, %s307
    %p309 = scmp.eq.s32.totalorder %s31, 0
    %p310 = por %p308, %p309
    %s312 = sadd.s32 %s311, 1
    %p315 = scmp.eq.s32.totalorder %s25, 3
    %p316 = scmp.ne.s32.totalorder %s311, %s313
    %p317 = scmp.eq.s32.totalorder %s25, 0
    %p318 = por %p316, %p317
    %p319 = scmp.ne.s32.totalorder %s311, %s313
    %p320 = scmp.eq.s32.totalorder %s30, 3
    %p321 = por %p319, %p320
    %p322 = scmp.ne.s32.totalorder %s313, %s314
    %p323 = scmp.eq.s32.totalorder %s30, 0
    %p324 = por %p322, %p323
    %p325 = scmp.ne.s32.totalorder %s313, %s314
    %p326 = scmp.eq.s32.totalorder %s31, 3
    %p327 = por %p325, %p326
    %p329 = scmp.ne.s32.totalorder %s314, %s328
    %p330 = scmp.eq.s32.totalorder %s31, 0
    %p331 = por %p329, %p330
    %s333 = sadd.s32 %s332, 1
    %p336 = scmp.eq.s32.totalorder %s25, 3
    %p337 = scmp.ne.s32.totalorder %s332, %s334
    %p338 = scmp.eq.s32.totalorder %s25, 0
    %p339 = por %p337, %p338
    %p340 = scmp.ne.s32.totalorder %s332, %s334
    %p341 = scmp.eq.s32.totalorder %s30, 3
    %p342 = por %p340, %p341
    %p343 = scmp.ne.s32.totalorder %s334, %s335
    %p344 = scmp.eq.s32.totalorder %s30, 0
    %p345 = por %p343, %p344
    %p346 = scmp.ne.s32.totalorder %s334, %s335
    %p347 = scmp.eq.s32.totalorder %s31, 3
    %p348 = por %p346, %p347
    %p350 = scmp.ne.s32.totalorder %s335, %s349
    %p351 = scmp.eq.s32.totalorder %s31, 0
    %p352 = por %p350, %p351
    %s354 = sadd.s32 %s353, 1
    %p357 = scmp.eq.s32.totalorder %s25, 3
    %p358 = scmp.ne.s32.totalorder %s353, %s355
    %p359 = scmp.eq.s32.totalorder %s25, 0
    %p360 = por %p358, %p359
    %p361 = scmp.ne.s32.totalorder %s353, %s355
    %p362 = scmp.eq.s32.totalorder %s30, 3
    %p363 = por %p361, %p362
    %p364 = scmp.ne.s32.totalorder %s355, %s356
    %p365 = scmp.eq.s32.totalorder %s30, 0
    %p366 = por %p364, %p365
    %p367 = scmp.ne.s32.totalorder %s355, %s356
    %p368 = scmp.eq.s32.totalorder %s31, 3
    %p369 = por %p367, %p368
    %p371 = scmp.ne.s32.totalorder %s356, %s370
    %p372 = scmp.eq.s32.totalorder %s31, 0
    %p373 = por %p371, %p372
    %s375 = sadd.s32 %s374, 1
    %p378 = scmp.eq.s32.totalorder %s25, 3
    %p379 = scmp.ne.s32.totalorder %s374, %s376
    %p380 = scmp.eq.s32.totalorder %s25, 0
    %p381 = por %p379, %p380
    %p382 = scmp.ne.s32.totalorder %s374, %s376
    %p383 = scmp.eq.s32.totalorder %s30, 3
    %p384 = por %p382, %p383
    %p385 = scmp.ne.s32.totalorder %s376, %s377
    %p386 = scmp.eq.s32.totalorder %s30, 0
    %p387 = por %p385, %p386
    %p388 = scmp.ne.s32.totalorder %s376, %s377
    %p389 = scmp.eq.s32.totalorder %s31, 3
    %p390 = por %p388, %p389
    %p392 = scmp.ne.s32.totalorder %s377, %s391
    %p393 = scmp.eq.s32.totalorder %s31, 0
    %p394 = por %p392, %p393
    %s396 = sadd.s32 %s395, 1
    %p399 = scmp.eq.s32.totalorder %s25, 3
    %p400 = scmp.ne.s32.totalorder %s395, %s397
    %p401 = scmp.eq.s32.totalorder %s25, 0
    %p402 = por %p400, %p401
    %p403 = scmp.ne.s32.totalorder %s395, %s397
    %p404 = scmp.eq.s32.totalorder %s30, 3
    %p405 = por %p403, %p404
    %p406 = scmp.ne.s32.totalorder %s397, %s398
    %p407 = scmp.eq.s32.totalorder %s30, 0
    %p408 = por %p406, %p407
    %p409 = scmp.ne.s32.totalorder %s397, %s398
    %p410 = scmp.eq.s32.totalorder %s31, 3
    %p411 = por %p409, %p410
    %p413 = scmp.ne.s32.totalorder %s398, %s412
    %p414 = scmp.eq.s32.totalorder %s31, 0
    %p415 = por %p413, %p414
    %s417 = sadd.s32 %s416, 1
    %p420 = scmp.eq.s32.totalorder %s25, 3
    %p421 = scmp.ne.s32.totalorder %s416, %s418
    %p422 = scmp.eq.s32.totalorder %s25, 0
    %p423 = por %p421, %p422
    %p424 = scmp.ne.s32.totalorder %s416, %s418
    %p425 = scmp.eq.s32.totalorder %s30, 3
    %p426 = por %p424, %p425
    %p427 = scmp.ne.s32.totalorder %s418, %s419
    %p428 = scmp.eq.s32.totalorder %s30, 0
    %p429 = por %p427, %p428
    %p430 = scmp.ne.s32.totalorder %s418, %s419
    %p431 = scmp.eq.s32.totalorder %s31, 3
    %p432 = por %p430, %p431
    %p434 = scmp.ne.s32.totalorder %s419, %s433
    %p435 = scmp.eq.s32.totalorder %s31, 0
    %p436 = por %p434, %p435
    %s437 = ssub.s32 %s25, %s32
    %p438 = scmp.eq.s32.totalorder %s437, 0
    %s440 = sadd.s32 %s439, 1
    %s441 = scalar_select %p438, %s439, %s440
    %p444 = pneg %p438
    %p445 = scmp.eq.s32.totalorder %s25, 3
    %p446 = por %p444, %p445
    %p447 = scmp.ne.s32.totalorder %s439, %s442
    %p448 = scmp.eq.s32.totalorder %s25, 0
    %p449 = por %p447, %p448
    %p450 = scmp.ne.s32.totalorder %s439, %s442
    %p451 = scmp.eq.s32.totalorder %s30, 3
    %p452 = por %p450, %p451
    %p453 = scmp.ne.s32.totalorder %s442, %s443
    %p454 = scmp.eq.s32.totalorder %s30, 0
    %p455 = por %p453, %p454
    %p456 = scmp.ne.s32.totalorder %s442, %s443
    %p457 = scmp.eq.s32.totalorder %s31, 3
    %p458 = por %p456, %p457
    %p460 = scmp.ne.s32.totalorder %s443, %s459
    %p461 = scmp.eq.s32.totalorder %s31, 0
    %p462 = por %p460, %p461
    %p463 = scmp.le.s32.totalorder 1, %s25
    %p464 = scmp.lt.s32.totalorder %s25, 5
    %p465 = pnand %p463, %p464
    %p466 = pneg %p465
    // Predicated region
    $region9: #{_forward_impl.1} parent=5 // pred_check
      _
    $region10: #{_forward_impl.1} parent=5 // pred_check_branch
      %468 = sbr.rel (%p465) target = $region12
    $region11: #{_forward_impl.1} parent=5 // pred_region
      %s469 = ssub.s32 %s25, 1
      // Predicated region
      $region13: #{_forward_impl.1} parent=11 // pred_check
        %p470 = pneg %p72
      $region14: #{_forward_impl.1} parent=11 // pred_check_branch
        %472 = sbr.rel (%p470) target = $region16
      $region15: #{_forward_impl.1} parent=11 // pred_region
        _
      $region16: #{_forward_impl.1} parent=11 // pred_fallthru
        _
      // Predicated region
      $region17: #{_forward_impl.1} parent=11 // pred_check
        %p473 = pneg %p93
      $region18: #{_forward_impl.1} parent=11 // pred_check_branch
        %475 = sbr.rel (%p473) target = $region20
      $region19: #{_forward_impl.1} parent=11 // pred_region
        _
      $region20: #{_forward_impl.1} parent=11 // pred_fallthru
        _
      // Predicated region
      $region21: #{_forward_impl.1} parent=11 // pred_check
        %p476 = pneg %p114
      $region22: #{_forward_impl.1} parent=11 // pred_check_branch
        %478 = sbr.rel (%p476) target = $region24
      $region23: #{_forward_impl.1} parent=11 // pred_region
        _
      $region24: #{_forward_impl.1} parent=11 // pred_fallthru
        _
      // Predicated region
      $region25: #{_forward_impl.1} parent=11 // pred_check
        %p479 = pneg %p135
      $region26: #{_forward_impl.1} parent=11 // pred_check_branch
        %481 = sbr.rel (%p479) target = $region28
      $region27: #{_forward_impl.1} parent=11 // pred_region
        _
      $region28: #{_forward_impl.1} parent=11 // pred_fallthru
        _
      // Predicated region
      $region29: #{_forward_impl.1} parent=11 // pred_check
        %p482 = pneg %p156
      $region30: #{_forward_impl.1} parent=11 // pred_check_branch
        %484 = sbr.rel (%p482) target = $region32
      $region31: #{_forward_impl.1} parent=11 // pred_region
        _
      $region32: #{_forward_impl.1} parent=11 // pred_fallthru
        _
      // Predicated region
      $region33: #{_forward_impl.1} parent=11 // pred_check
        %p485 = pneg %p177
      $region34: #{_forward_impl.1} parent=11 // pred_check_branch
        %487 = sbr.rel (%p485) target = $region36
      $region35: #{_forward_impl.1} parent=11 // pred_region
        _
      $region36: #{_forward_impl.1} parent=11 // pred_fallthru
        _
      // Predicated region
      $region37: #{_forward_impl.1} parent=11 // pred_check
        %p488 = pneg %p198
      $region38: #{_forward_impl.1} parent=11 // pred_check_branch
        %490 = sbr.rel (%p488) target = $region40
      $region39: #{_forward_impl.1} parent=11 // pred_region
        _
      $region40: #{_forward_impl.1} parent=11 // pred_fallthru
        _
      // Predicated region
      $region41: #{_forward_impl.1} parent=11 // pred_check
        %p491 = pneg %p219
      $region42: #{_forward_impl.1} parent=11 // pred_check_branch
        %493 = sbr.rel (%p491) target = $region44
      $region43: #{_forward_impl.1} parent=11 // pred_region
        _
      $region44: #{_forward_impl.1} parent=11 // pred_fallthru
        _
      // Predicated region
      $region45: #{_forward_impl.1} parent=11 // pred_check
        %p494 = pneg %p240
      $region46: #{_forward_impl.1} parent=11 // pred_check_branch
        %496 = sbr.rel (%p494) target = $region48
      $region47: #{_forward_impl.1} parent=11 // pred_region
        _
      $region48: #{_forward_impl.1} parent=11 // pred_fallthru
        _
      // Predicated region
      $region49: #{_forward_impl.1} parent=11 // pred_check
        %p497 = pneg %p261
      $region50: #{_forward_impl.1} parent=11 // pred_check_branch
        %499 = sbr.rel (%p497) target = $region52
      $region51: #{_forward_impl.1} parent=11 // pred_region
        _
      $region52: #{_forward_impl.1} parent=11 // pred_fallthru
        _
      // Predicated region
      $region53: #{_forward_impl.1} parent=11 // pred_check
        %p500 = pneg %p282
      $region54: #{_forward_impl.1} parent=11 // pred_check_branch
        %502 = sbr.rel (%p500) target = $region56
      $region55: #{_forward_impl.1} parent=11 // pred_region
        _
      $region56: #{_forward_impl.1} parent=11 // pred_fallthru
        _
      // Predicated region
      $region57: #{_forward_impl.1} parent=11 // pred_check
        %p503 = pneg %p303
      $region58: #{_forward_impl.1} parent=11 // pred_check_branch
        %505 = sbr.rel (%p503) target = $region60
      $region59: #{_forward_impl.1} parent=11 // pred_region
        _
      $region60: #{_forward_impl.1} parent=11 // pred_fallthru
        _
      // Predicated region
      $region61: #{_forward_impl.1} parent=11 // pred_check
        %p506 = pneg %p324
      $region62: #{_forward_impl.1} parent=11 // pred_check_branch
        %508 = sbr.rel (%p506) target = $region64
      $region63: #{_forward_impl.1} parent=11 // pred_region
        _
      $region64: #{_forward_impl.1} parent=11 // pred_fallthru
        _
      // Predicated region
      $region65: #{_forward_impl.1} parent=11 // pred_check
        %p509 = pneg %p345
      $region66: #{_forward_impl.1} parent=11 // pred_check_branch
        %511 = sbr.rel (%p509) target = $region68
      $region67: #{_forward_impl.1} parent=11 // pred_region
        _
      $region68: #{_forward_impl.1} parent=11 // pred_fallthru
        _
      // Predicated region
      $region69: #{_forward_impl.1} parent=11 // pred_check
        %p512 = pneg %p366
      $region70: #{_forward_impl.1} parent=11 // pred_check_branch
        %514 = sbr.rel (%p512) target = $region72
      $region71: #{_forward_impl.1} parent=11 // pred_region
        _
      $region72: #{_forward_impl.1} parent=11 // pred_fallthru
        _
      // Predicated region
      $region73: #{_forward_impl.1} parent=11 // pred_check
        %p515 = pneg %p387
      $region74: #{_forward_impl.1} parent=11 // pred_check_branch
        %517 = sbr.rel (%p515) target = $region76
      $region75: #{_forward_impl.1} parent=11 // pred_region
        _
      $region76: #{_forward_impl.1} parent=11 // pred_fallthru
        _
      // Predicated region
      $region77: #{_forward_impl.1} parent=11 // pred_check
        %p518 = pneg %p408
      $region78: #{_forward_impl.1} parent=11 // pred_check_branch
        %520 = sbr.rel (%p518) target = $region80
      $region79: #{_forward_impl.1} parent=11 // pred_region
        _
      $region80: #{_forward_impl.1} parent=11 // pred_fallthru
        _
      // Predicated region
      $region81: #{_forward_impl.1} parent=11 // pred_check
        %p521 = pneg %p429
      $region82: #{_forward_impl.1} parent=11 // pred_check_branch
        %523 = sbr.rel (%p521) target = $region84
      $region83: #{_forward_impl.1} parent=11 // pred_region
        _
      $region84: #{_forward_impl.1} parent=11 // pred_fallthru
        _
    $region12: #{_forward_impl.1} parent=5 // pred_fallthru
      _
    %p524 = scmp.lt.s32.totalorder %s25, 4
    // Predicated region
    $region85: #{_forward_impl.1} parent=5 // pred_check
      %p525 = pneg %p524
    $region86: #{_forward_impl.1} parent=5 // pred_check_branch
      %527 = sbr.rel (%p525) target = $region88
    $region87: #{_forward_impl.1} parent=5 // pred_region
      // Predicated region
      $region89: #{_forward_impl.1} parent=87 // pred_check
        %p528 = pneg %p45
      $region90: #{_forward_impl.1} parent=87 // pred_check_branch
        %530 = sbr.rel (%p528) target = $region92
      $region91: #{_forward_impl.1} parent=87 // pred_region
        %s531 = smul.u32 16, %s25
        %p532 = scmp.lt.s32.totalorder %s531, 63
        %s533 = scalar_select %p532, %s531, 63
        %s534 = smul.addr %s533, 7
        %s535 = smul.addr %s534, 8
        %s536 = scalar_lea.vmem %s0, %s535
        %s537 = smul.u32 16, %s25
      $region92: #{_forward_impl.1} parent=87 // pred_fallthru
        _
    $region88: #{_forward_impl.1} parent=5 // pred_fallthru
      _
    %p538 = scmp.le.s32.totalorder 1, %s25
    %p539 = scmp.lt.s32.totalorder %s25, 5
    %p540 = pnand %p538, %p539
    %p541 = pneg %p540
    // Predicated region
    $region93: #{_forward_impl.1} parent=5 // pred_check
      _
    $region94: #{_forward_impl.1} parent=5 // pred_check_branch
      %543 = sbr.rel (%p540) target = $region96
    $region95: #{_forward_impl.1} parent=5 // pred_region
      %s544 = ssub.s32 %s25, 1
      %s545 = smul.u32 16, %s30
      %p546 = scmp.lt.s32.totalorder %s545, 63
      %s547 = scalar_select %p546, %s545, 63
      %s548 = smul.addr %s547, 7
      %s549 = smul.addr %s548, 8
      %s550 = scalar_lea.vmem %s0, %s549
      %p551 = pneg %p51
      %p552 = pneg %p48
      %p553 = pneg %p72
      %p554 = pneg %p69
      %p555 = pneg %p93
      %p556 = pneg %p90
      %p557 = pneg %p114
      %p558 = pneg %p111
      %p559 = pneg %p135
      %p560 = pneg %p132
      %p561 = pneg %p156
      %p562 = pneg %p153
      %p563 = pneg %p177
      %p564 = pneg %p174
      %p565 = pneg %p198
      %p566 = pneg %p195
      %p567 = pneg %p219
      %p568 = pneg %p216
      %p569 = pneg %p240
      %p570 = pneg %p237
      %p571 = pneg %p261
      %p572 = pneg %p258
      %p573 = pneg %p282
      %p574 = pneg %p279
      %p575 = pneg %p303
      %p576 = pneg %p300
      %p577 = pneg %p324
      %p578 = pneg %p321
      %p579 = pneg %p345
      %p580 = pneg %p342
      %p581 = pneg %p366
      %p582 = pneg %p363
      %p583 = pneg %p387
      %p584 = pneg %p384
      %p585 = pneg %p408
      %p586 = pneg %p405
      %p587 = pneg %p429
      %p588 = pneg %p426
      %p589 = pneg %p455
      %p590 = pneg %p452
      %s591 = smul.u32 16, %s30
      %p592 = scmp.lt.s32.totalorder %s591, 63
      %s593 = scalar_select %p592, %s591, 63
      %s594 = smul.addr %s593, 7
      %s595 = smul.addr %s594, 8
      %s596 = scalar_lea.vmem %s19, %s595
      %s597 = smul.u32 16, %s30
      %p598 = scmp.lt.s32.totalorder %s597, 63
      %s599 = scalar_select %p598, %s597, 63
      %s600 = smul.addr %s599, 7
      %s601 = smul.addr %s600, 8
      %s602 = scalar_lea.vmem %s0, %s601
      %s603 = smul.u32 16, %s30
      %s604 = smul.u32 16, %s30
      %p605 = scmp.lt.s32.totalorder %s604, 63
      %s606 = scalar_select %p605, %s604, 63
      %s607 = smul.addr %s606, 7
      %s608 = smul.addr %s607, 8
      %s609 = scalar_lea.vmem %s19, %s608
      %s610 = smul.u32 16, %s30
      %v612 = vld [vmem:[%s602] sm:$0xff]
      %v613 = vld [vmem:[%s602 + $0x8] sm:$0xff]
      %v614 = vld [vmem:[%s602 + $0x10] sm:$0xff]
      %v615 = vld [vmem:[%s602 + $0x18] sm:$0xff]
      %v616 = vld [vmem:[%s602 + $0x20] sm:$0xff]
      %v617 = vld [vmem:[%s602 + $0x28] sm:$0xff]
      %v618 = vld [vmem:[%s602 + $0x30] sm:$0xff]
      %v619 = vld [vmem:[%s602 + $0x38] sm:$0xff]
      %v620 = vld [vmem:[%s602 + $0x40] sm:$0xff]
      %v621 = vld [vmem:[%s602 + $0x48] sm:$0xff]
      %v622 = vld [vmem:[%s602 + $0x50] sm:$0xff]
      %v623 = vld [vmem:[%s602 + $0x58] sm:$0xff]
      %v624 = vld [vmem:[%s602 + $0x60] sm:$0xff]
      %v625 = vld [vmem:[%s602 + $0x68] sm:$0xff]
      %v626 = vld [vmem:[%s602 + $0x70] sm:$0xff]
      %v627 = vld [vmem:[%s602 + $0x78] sm:$0xff]
      %v628 = vld [vmem:[%s602 + $0x80] sm:$0xff]
      %v629 = vld [vmem:[%s602 + $0x88] sm:$0xff]
      %v630 = vld [vmem:[%s602 + $0x90] sm:$0xff]
      %v631 = vld [vmem:[%s602 + $0x98] sm:$0xff]
      %v632 = vld [vmem:[%s602 + $0xa0] sm:$0xff]
      %v633 = vld [vmem:[%s602 + $0xa8] sm:$0xff]
      %v634 = vld [vmem:[%s602 + $0xb0] sm:$0xff]
      %v635 = vld [vmem:[%s602 + $0xb8] sm:$0xff]
      %v636 = vld [vmem:[%s602 + $0xc0] sm:$0xff]
      %v637 = vld [vmem:[%s602 + $0xc8] sm:$0xff]
      %v638 = vld [vmem:[%s602 + $0xd0] sm:$0xff]
      %v639 = vld [vmem:[%s602 + $0xd8] sm:$0xff]
      %v640 = vld [vmem:[%s602 + $0xe0] sm:$0xff]
      %v641 = vld [vmem:[%s602 + $0xe8] sm:$0xff]
      %v642 = vld [vmem:[%s602 + $0xf0] sm:$0xff]
      %v643 = vld [vmem:[%s602 + $0xf8] sm:$0xff]
      %v644 = vld [vmem:[%s602 + $0x100] sm:$0xff]
      %v645 = vld [vmem:[%s602 + $0x108] sm:$0xff]
      %v646 = vld [vmem:[%s602 + $0x110] sm:$0xff]
      %v647 = vld [vmem:[%s602 + $0x118] sm:$0xff]
      %v648 = vld [vmem:[%s602 + $0x120] sm:$0xff]
      %v649 = vld [vmem:[%s602 + $0x128] sm:$0xff]
      %v650 = vld [vmem:[%s602 + $0x130] sm:$0xff]
      %v651 = vld [vmem:[%s602 + $0x138] sm:$0xff]
      %v652 = vld [vmem:[%s602 + $0x140] sm:$0xff]
      %v653 = vld [vmem:[%s602 + $0x148] sm:$0xff]
      %v654 = vld [vmem:[%s602 + $0x150] sm:$0xff]
      %v655 = vld [vmem:[%s602 + $0x158] sm:$0xff]
      %v656 = vld [vmem:[%s602 + $0x160] sm:$0xff]
      %v657 = vld [vmem:[%s602 + $0x168] sm:$0xff]
      %v658 = vld [vmem:[%s602 + $0x170] sm:$0xff]
      %v659 = vld [vmem:[%s602 + $0x178] sm:$0xff]
      %v660 = vld [vmem:[%s602 + $0x180] sm:$0xff]
      %v661 = vld [vmem:[%s602 + $0x188] sm:$0xff]
      %v662 = vld [vmem:[%s602 + $0x190] sm:$0xff]
      %v663 = vld [vmem:[%s602 + $0x198] sm:$0xff]
      %v664 = vld [vmem:[%s602 + $0x1a0] sm:$0xff]
      %v665 = vld [vmem:[%s602 + $0x1a8] sm:$0xff]
      %v666 = vld [vmem:[%s602 + $0x1b0] sm:$0xff]
      %v667 = vld [vmem:[%s602 + $0x1b8] sm:$0xff]
      %v668 = vld [vmem:[%s602 + $0x1c0] sm:$0xff]
      %v669 = vld [vmem:[%s602 + $0x1c8] sm:$0xff]
      %v670 = vld [vmem:[%s602 + $0x1d0] sm:$0xff]
      %v671 = vld [vmem:[%s602 + $0x1d8] sm:$0xff]
      %v672 = vld [vmem:[%s602 + $0x1e0] sm:$0xff]
      %v673 = vld [vmem:[%s602 + $0x1e8] sm:$0xff]
      %v674 = vld [vmem:[%s602 + $0x1f0] sm:$0xff]
      %v675 = vld [vmem:[%s602 + $0x1f8] sm:$0xff]
      %v676 = vld [vmem:[%s602 + $0x200] sm:$0xff]
      %v677 = vld [vmem:[%s602 + $0x208] sm:$0xff]
      %v678 = vld [vmem:[%s602 + $0x210] sm:$0xff]
      %v679 = vld [vmem:[%s602 + $0x218] sm:$0xff]
      %v680 = vld [vmem:[%s602 + $0x220] sm:$0xff]
      %v681 = vld [vmem:[%s602 + $0x228] sm:$0xff]
      %v682 = vld [vmem:[%s602 + $0x230] sm:$0xff]
      %v683 = vld [vmem:[%s602 + $0x238] sm:$0xff]
      %v684 = vld [vmem:[%s602 + $0x240] sm:$0xff]
      %v685 = vld [vmem:[%s602 + $0x248] sm:$0xff]
      %v686 = vld [vmem:[%s602 + $0x250] sm:$0xff]
      %v687 = vld [vmem:[%s602 + $0x258] sm:$0xff]
      %v688 = vld [vmem:[%s602 + $0x260] sm:$0xff]
      %v689 = vld [vmem:[%s602 + $0x268] sm:$0xff]
      %v690 = vld [vmem:[%s602 + $0x270] sm:$0xff]
      %v691 = vld [vmem:[%s602 + $0x278] sm:$0xff]
      %v692 = vld [vmem:[%s602 + $0x280] sm:$0xff]
      %v693 = vld [vmem:[%s602 + $0x288] sm:$0xff]
      %v694 = vld [vmem:[%s602 + $0x290] sm:$0xff]
      %v695 = vld [vmem:[%s602 + $0x298] sm:$0xff]
      %v696 = vld [vmem:[%s602 + $0x2a0] sm:$0xff]
      %v697 = vld [vmem:[%s602 + $0x2a8] sm:$0xff]
      %v698 = vld [vmem:[%s602 + $0x2b0] sm:$0xff]
      %v699 = vld [vmem:[%s602 + $0x2b8] sm:$0xff]
      %v700 = vld [vmem:[%s602 + $0x2c0] sm:$0xff]
      %v701 = vld [vmem:[%s602 + $0x2c8] sm:$0xff]
      %v702 = vld [vmem:[%s602 + $0x2d0] sm:$0xff]
      %v703 = vld [vmem:[%s602 + $0x2d8] sm:$0xff]
      %v704 = vld [vmem:[%s602 + $0x2e0] sm:$0xff]
      %v705 = vld [vmem:[%s602 + $0x2e8] sm:$0xff]
      %v706 = vld [vmem:[%s602 + $0x2f0] sm:$0xff]
      %v707 = vld [vmem:[%s602 + $0x2f8] sm:$0xff]
      %v708 = vld [vmem:[%s602 + $0x300] sm:$0xff]
      %v709 = vld [vmem:[%s602 + $0x308] sm:$0xff]
      %v710 = vld [vmem:[%s602 + $0x310] sm:$0xff]
      %v711 = vld [vmem:[%s602 + $0x318] sm:$0xff]
      %v712 = vld [vmem:[%s602 + $0x320] sm:$0xff]
      %v713 = vld [vmem:[%s602 + $0x328] sm:$0xff]
      %v714 = vld [vmem:[%s602 + $0x330] sm:$0xff]
      %v715 = vld [vmem:[%s602 + $0x338] sm:$0xff]
      %v716 = vld [vmem:[%s602 + $0x340] sm:$0xff]
      %v717 = vld [vmem:[%s602 + $0x348] sm:$0xff]
      %v718 = vld [vmem:[%s602 + $0x350] sm:$0xff]
      %v719 = vld [vmem:[%s602 + $0x358] sm:$0xff]
      %v720 = vld [vmem:[%s602 + $0x360] sm:$0xff]
      %v721 = vld [vmem:[%s602 + $0x368] sm:$0xff]
      %v722 = vld [vmem:[%s602 + $0x370] sm:$0xff]
      %v723 = vld [vmem:[%s602 + $0x378] sm:$0xff]
      %v724 = vpack.c.bf16 %v619, %v612
      %v725 = vpack.c.bf16 %v620, %v613
      %v726 = vpack.c.bf16 %v621, %v614
      %v727 = vpack.c.bf16 %v622, %v615
      %v728 = vpack.c.bf16 %v623, %v616
      %v729 = vpack.c.bf16 %v624, %v617
      %v730 = vpack.c.bf16 %v625, %v618
      %v731 = vpack.c.bf16 %v633, %v626
      %v732 = vpack.c.bf16 %v634, %v627
      %v733 = vpack.c.bf16 %v635, %v628
      %v734 = vpack.c.bf16 %v636, %v629
      %v735 = vpack.c.bf16 %v637, %v630
      %v736 = vpack.c.bf16 %v638, %v631
      %v737 = vpack.c.bf16 %v639, %v632
      %v738 = vpack.c.bf16 %v647, %v640
      %v739 = vpack.c.bf16 %v648, %v641
      %v740 = vpack.c.bf16 %v649, %v642
      %v741 = vpack.c.bf16 %v650, %v643
      %v742 = vpack.c.bf16 %v651, %v644
      %v743 = vpack.c.bf16 %v652, %v645
      %v744 = vpack.c.bf16 %v653, %v646
      %v745 = vpack.c.bf16 %v661, %v654
      %v746 = vpack.c.bf16 %v662, %v655
      %v747 = vpack.c.bf16 %v663, %v656
      %v748 = vpack.c.bf16 %v664, %v657
      %v749 = vpack.c.bf16 %v665, %v658
      %v750 = vpack.c.bf16 %v666, %v659
      %v751 = vpack.c.bf16 %v667, %v660
      %v752 = vpack.c.bf16 %v675, %v668
      %v753 = vpack.c.bf16 %v676, %v669
      %v754 = vpack.c.bf16 %v677, %v670
      %v755 = vpack.c.bf16 %v678, %v671
      %v756 = vpack.c.bf16 %v679, %v672
      %v757 = vpack.c.bf16 %v680, %v673
      %v758 = vpack.c.bf16 %v681, %v674
      %v759 = vpack.c.bf16 %v689, %v682
      %v760 = vpack.c.bf16 %v690, %v683
      %v761 = vpack.c.bf16 %v691, %v684
      %v762 = vpack.c.bf16 %v692, %v685
      %v763 = vpack.c.bf16 %v693, %v686
      %v764 = vpack.c.bf16 %v694, %v687
      %v765 = vpack.c.bf16 %v695, %v688
      %v766 = vpack.c.bf16 %v703, %v696
      %v767 = vpack.c.bf16 %v704, %v697
      %v768 = vpack.c.bf16 %v705, %v698
      %v769 = vpack.c.bf16 %v706, %v699
      %v770 = vpack.c.bf16 %v707, %v700
      %v771 = vpack.c.bf16 %v708, %v701
      %v772 = vpack.c.bf16 %v709, %v702
      %v773 = vpack.c.bf16 %v717, %v710
      %v774 = vpack.c.bf16 %v718, %v711
      %v775 = vpack.c.bf16 %v719, %v712
      %v776 = vpack.c.bf16 %v720, %v713
      %v777 = vpack.c.bf16 %v721, %v714
      %v778 = vpack.c.bf16 %v722, %v715
      %v779 = vpack.c.bf16 %v723, %v716
      %v780 = vld [vmem:[%s1] sm:$0xff]
      %v781 = vld [vmem:[%s1 + $0x8] sm:$0xff]
      %v782 = vld [vmem:[%s1 + $0x10] sm:$0xff]
      %v783 = vld [vmem:[%s1 + $0x18] sm:$0xff]
      %v784 = vld [vmem:[%s1 + $0x20] sm:$0xff]
      %v785 = vld [vmem:[%s1 + $0x28] sm:$0xff]
      %v786 = vld [vmem:[%s1 + $0x30] sm:$0xff]
      %v787 = vld [vmem:[%s1 + $0x38] sm:$0xff]
      %v788 = vld [vmem:[%s1 + $0x40] sm:$0xff]
      %v789 = vld [vmem:[%s1 + $0x48] sm:$0xff]
      %v790 = vld [vmem:[%s1 + $0x50] sm:$0xff]
      %v791 = vld [vmem:[%s1 + $0x58] sm:$0xff]
      %v792 = vld [vmem:[%s1 + $0x60] sm:$0xff]
      %v793 = vld [vmem:[%s1 + $0x68] sm:$0xff]
      %v794 = vld [vmem:[%s1 + $0x70] sm:$0xff]
      %v795 = vld [vmem:[%s1 + $0x78] sm:$0xff]
      %v796 = vld [vmem:[%s1 + $0x80] sm:$0xff]
      %v797 = vld [vmem:[%s1 + $0x88] sm:$0xff]
      %v798 = vld [vmem:[%s1 + $0x90] sm:$0xff]
      %v799 = vld [vmem:[%s1 + $0x98] sm:$0xff]
      %v800 = vld [vmem:[%s1 + $0xa0] sm:$0xff]
      %v801 = vld [vmem:[%s1 + $0xa8] sm:$0xff]
      %v802 = vld [vmem:[%s1 + $0xb0] sm:$0xff]
      %v803 = vld [vmem:[%s1 + $0xb8] sm:$0xff]
      %v804 = vld [vmem:[%s1 + $0xc0] sm:$0xff]
      %v805 = vld [vmem:[%s1 + $0xc8] sm:$0xff]
      %v806 = vld [vmem:[%s1 + $0xd0] sm:$0xff]
      %v807 = vld [vmem:[%s1 + $0xd8] sm:$0xff]
      %v808 = vld [vmem:[%s1 + $0xe0] sm:$0xff]
      %v809 = vld [vmem:[%s1 + $0xe8] sm:$0xff]
      %v810 = vld [vmem:[%s1 + $0xf0] sm:$0xff]
      %v811 = vld [vmem:[%s1 + $0xf8] sm:$0xff]
      %v812 = vld [vmem:[%s1 + $0x100] sm:$0xff]
      %v813 = vld [vmem:[%s1 + $0x108] sm:$0xff]
      %v814 = vld [vmem:[%s1 + $0x110] sm:$0xff]
      %v815 = vld [vmem:[%s1 + $0x118] sm:$0xff]
      %v816 = vld [vmem:[%s1 + $0x120] sm:$0xff]
      %v817 = vld [vmem:[%s1 + $0x128] sm:$0xff]
      %v818 = vld [vmem:[%s1 + $0x130] sm:$0xff]
      %v819 = vld [vmem:[%s1 + $0x138] sm:$0xff]
      %v820 = vld [vmem:[%s1 + $0x140] sm:$0xff]
      %v821 = vld [vmem:[%s1 + $0x148] sm:$0xff]
      %v822 = vld [vmem:[%s1 + $0x150] sm:$0xff]
      %v823 = vld [vmem:[%s1 + $0x158] sm:$0xff]
      %v824 = vld [vmem:[%s1 + $0x160] sm:$0xff]
      %v825 = vld [vmem:[%s1 + $0x168] sm:$0xff]
      %v826 = vld [vmem:[%s1 + $0x170] sm:$0xff]
      %v827 = vld [vmem:[%s1 + $0x178] sm:$0xff]
      %v828 = vld [vmem:[%s1 + $0x180] sm:$0xff]
      %v829 = vld [vmem:[%s1 + $0x188] sm:$0xff]
      %v830 = vld [vmem:[%s1 + $0x190] sm:$0xff]
      %v831 = vld [vmem:[%s1 + $0x198] sm:$0xff]
      %v832 = vld [vmem:[%s1 + $0x1a0] sm:$0xff]
      %v833 = vld [vmem:[%s1 + $0x1a8] sm:$0xff]
      %v834 = vld [vmem:[%s1 + $0x1b0] sm:$0xff]
      %v835 = vld [vmem:[%s1 + $0x1b8] sm:$0xff]
      %v836 = vld [vmem:[%s1 + $0x1c0] sm:$0xff]
      %v837 = vld [vmem:[%s1 + $0x1c8] sm:$0xff]
      %v838 = vld [vmem:[%s1 + $0x1d0] sm:$0xff]
      %v839 = vld [vmem:[%s1 + $0x1d8] sm:$0xff]
      %v840 = vld [vmem:[%s1 + $0x1e0] sm:$0xff]
      %v841 = vld [vmem:[%s1 + $0x1e8] sm:$0xff]
      %v842 = vld [vmem:[%s1 + $0x1f0] sm:$0xff]
      %v843 = vld [vmem:[%s1 + $0x1f8] sm:$0xff]
      %v844 = vld [vmem:[%s1 + $0x200] sm:$0xff]
      %v845 = vld [vmem:[%s1 + $0x208] sm:$0xff]
      %v846 = vld [vmem:[%s1 + $0x210] sm:$0xff]
      %v847 = vld [vmem:[%s1 + $0x218] sm:$0xff]
      %v848 = vld [vmem:[%s1 + $0x220] sm:$0xff]
      %v849 = vld [vmem:[%s1 + $0x228] sm:$0xff]
      %v850 = vld [vmem:[%s1 + $0x230] sm:$0xff]
      %v851 = vld [vmem:[%s1 + $0x238] sm:$0xff]
      %v852 = vld [vmem:[%s1 + $0x240] sm:$0xff]
      %v853 = vld [vmem:[%s1 + $0x248] sm:$0xff]
      %v854 = vld [vmem:[%s1 + $0x250] sm:$0xff]
      %v855 = vld [vmem:[%s1 + $0x258] sm:$0xff]
      %v856 = vld [vmem:[%s1 + $0x260] sm:$0xff]
      %v857 = vld [vmem:[%s1 + $0x268] sm:$0xff]
      %v858 = vld [vmem:[%s1 + $0x270] sm:$0xff]
      %v859 = vld [vmem:[%s1 + $0x278] sm:$0xff]
      %v860 = vld [vmem:[%s1 + $0x280] sm:$0xff]
      %v861 = vld [vmem:[%s1 + $0x288] sm:$0xff]
      %v862 = vld [vmem:[%s1 + $0x290] sm:$0xff]
      %v863 = vld [vmem:[%s1 + $0x298] sm:$0xff]
      %v864 = vld [vmem:[%s1 + $0x2a0] sm:$0xff]
      %v865 = vld [vmem:[%s1 + $0x2a8] sm:$0xff]
      %v866 = vld [vmem:[%s1 + $0x2b0] sm:$0xff]
      %v867 = vld [vmem:[%s1 + $0x2b8] sm:$0xff]
      %v868 = vld [vmem:[%s1 + $0x2c0] sm:$0xff]
      %v869 = vld [vmem:[%s1 + $0x2c8] sm:$0xff]
      %v870 = vld [vmem:[%s1 + $0x2d0] sm:$0xff]
      %v871 = vld [vmem:[%s1 + $0x2d8] sm:$0xff]
      %v872 = vld [vmem:[%s1 + $0x2e0] sm:$0xff]
      %v873 = vld [vmem:[%s1 + $0x2e8] sm:$0xff]
      %v874 = vld [vmem:[%s1 + $0x2f0] sm:$0xff]
      %v875 = vld [vmem:[%s1 + $0x2f8] sm:$0xff]
      %v876 = vld [vmem:[%s1 + $0x300] sm:$0xff]
      %v877 = vld [vmem:[%s1 + $0x308] sm:$0xff]
      %v878 = vld [vmem:[%s2] sm:$0x3]
      %v880 = vlaneseq
      %v881 = vshrl.u32 %v880, 7
      %v882 = vsub.s32 0, %v881
      %v883 = vrot.slane %v878, %v882
      %v884 = vlaneseq
      %v885 = vshrl.u32 %v884, 7
      %v886 = vsub.s32 1, %v885
      %v887 = vrot.slane %v878, %v886
      %v988 = vunpack.c.l.b16 %v780
      %v989 = vunpack.c.h.b16 %v780
      %v990 = vunpack.c.l.b16 %v781
      %v991 = vunpack.c.h.b16 %v781
      %v992 = vunpack.c.l.b16 %v782
      %v993 = vunpack.c.h.b16 %v782
      %v994 = vunpack.c.l.b16 %v783
      %v995 = vunpack.c.h.b16 %v783
      %v996 = vunpack.c.l.b16 %v784
      %v997 = vunpack.c.h.b16 %v784
      %v998 = vunpack.c.l.b16 %v785
      %v999 = vunpack.c.h.b16 %v785
      %v1000 = vunpack.c.l.b16 %v786
      %v1001 = vunpack.c.h.b16 %v786
      %v1002 = vunpack.c.l.b16 %v787
      %v1003 = vunpack.c.h.b16 %v787
      %v1004 = vunpack.c.l.b16 %v788
      %v1005 = vunpack.c.h.b16 %v788
      %v1006 = vunpack.c.l.b16 %v789
      %v1007 = vunpack.c.h.b16 %v789
      %v1008 = vunpack.c.l.b16 %v790
      %v1009 = vunpack.c.h.b16 %v790
      %v1010 = vunpack.c.l.b16 %v791
      %v1011 = vunpack.c.h.b16 %v791
      %v1012 = vunpack.c.l.b16 %v792
      %v1013 = vunpack.c.h.b16 %v792
      %v1014 = vunpack.c.l.b16 %v793
      %v1015 = vunpack.c.h.b16 %v793
      %v1016 = vunpack.c.l.b16 %v794
      %v1017 = vunpack.c.h.b16 %v794
      %v1018 = vunpack.c.l.b16 %v795
      %v1019 = vunpack.c.h.b16 %v795
      %v1020 = vunpack.c.l.b16 %v796
      %v1021 = vunpack.c.h.b16 %v796
      %v1022 = vunpack.c.l.b16 %v797
      %v1023 = vunpack.c.h.b16 %v797
      %v1024 = vunpack.c.l.b16 %v798
      %v1025 = vunpack.c.h.b16 %v798
      %v1026 = vunpack.c.l.b16 %v799
      %v1027 = vunpack.c.h.b16 %v799
      %v1028 = vunpack.c.l.b16 %v800
      %v1029 = vunpack.c.h.b16 %v800
      %v1030 = vunpack.c.l.b16 %v801
      %v1031 = vunpack.c.h.b16 %v801
      %v1032 = vunpack.c.l.b16 %v802
      %v1033 = vunpack.c.h.b16 %v802
      %v1034 = vunpack.c.l.b16 %v803
      %v1035 = vunpack.c.h.b16 %v803
      %v1036 = vunpack.c.l.b16 %v804
      %v1037 = vunpack.c.h.b16 %v804
      %v1038 = vunpack.c.l.b16 %v805
      %v1039 = vunpack.c.h.b16 %v805
      %v1040 = vunpack.c.l.b16 %v806
      %v1041 = vunpack.c.h.b16 %v806
      %v1042 = vunpack.c.l.b16 %v807
      %v1043 = vunpack.c.h.b16 %v807
      %v1044 = vunpack.c.l.b16 %v808
      %v1045 = vunpack.c.h.b16 %v808
      %v1046 = vunpack.c.l.b16 %v809
      %v1047 = vunpack.c.h.b16 %v809
      %v1048 = vunpack.c.l.b16 %v810
      %v1049 = vunpack.c.h.b16 %v810
      %v1050 = vunpack.c.l.b16 %v811
      %v1051 = vunpack.c.h.b16 %v811
      %v1052 = vunpack.c.l.b16 %v812
      %v1053 = vunpack.c.h.b16 %v812
      %v1054 = vunpack.c.l.b16 %v813
      %v1055 = vunpack.c.h.b16 %v813
      %v1056 = vunpack.c.l.b16 %v814
      %v1057 = vunpack.c.h.b16 %v814
      %v1058 = vunpack.c.l.b16 %v815
      %v1059 = vunpack.c.h.b16 %v815
      %v1060 = vunpack.c.l.b16 %v816
      %v1061 = vunpack.c.h.b16 %v816
      %v1062 = vunpack.c.l.b16 %v817
      %v1063 = vunpack.c.h.b16 %v817
      %v1064 = vunpack.c.l.b16 %v818
      %v1065 = vunpack.c.h.b16 %v818
      %v1066 = vunpack.c.l.b16 %v819
      %v1067 = vunpack.c.h.b16 %v819
      %v1068 = vunpack.c.l.b16 %v820
      %v1069 = vunpack.c.h.b16 %v820
      %v1070 = vunpack.c.l.b16 %v821
      %v1071 = vunpack.c.h.b16 %v821
      %v1072 = vunpack.c.l.b16 %v822
      %v1073 = vunpack.c.h.b16 %v822
      %v1074 = vunpack.c.l.b16 %v823
      %v1075 = vunpack.c.h.b16 %v823
      %v1076 = vunpack.c.l.b16 %v824
      %v1077 = vunpack.c.h.b16 %v824
      %v1078 = vunpack.c.l.b16 %v825
      %v1079 = vunpack.c.h.b16 %v825
      %v1080 = vunpack.c.l.b16 %v826
      %v1081 = vunpack.c.h.b16 %v826
      %v1082 = vunpack.c.l.b16 %v827
      %v1083 = vunpack.c.h.b16 %v827
      %v1084 = vunpack.c.l.b16 %v828
      %v1085 = vunpack.c.h.b16 %v828
      %v1086 = vunpack.c.l.b16 %v829
      %v1087 = vunpack.c.h.b16 %v829
      %v1088 = vunpack.c.l.b16 %v830
      %v1089 = vunpack.c.h.b16 %v830
      %v1090 = vunpack.c.l.b16 %v831
      %v1091 = vunpack.c.h.b16 %v831
      %v1092 = vunpack.c.l.b16 %v832
      %v1093 = vunpack.c.h.b16 %v832
      %v1094 = vunpack.c.l.b16 %v833
      %v1095 = vunpack.c.h.b16 %v833
      %v1096 = vunpack.c.l.b16 %v834
      %v1097 = vunpack.c.h.b16 %v834
      %v1098 = vunpack.c.l.b16 %v835
      %v1099 = vunpack.c.h.b16 %v835
      %v1100 = vunpack.c.l.b16 %v836
      %v1101 = vunpack.c.h.b16 %v836
      %v1102 = vunpack.c.l.b16 %v837
      %v1103 = vunpack.c.h.b16 %v837
      %v1104 = vunpack.c.l.b16 %v838
      %v1105 = vunpack.c.h.b16 %v838
      %v1106 = vunpack.c.l.b16 %v839
      %v1107 = vunpack.c.h.b16 %v839
      %v1108 = vunpack.c.l.b16 %v840
      %v1109 = vunpack.c.h.b16 %v840
      %v1110 = vunpack.c.l.b16 %v841
      %v1111 = vunpack.c.h.b16 %v841
      %v1112 = vunpack.c.l.b16 %v842
      %v1113 = vunpack.c.h.b16 %v842
      %v1114 = vunpack.c.l.b16 %v843
      %v1115 = vunpack.c.h.b16 %v843
      %v1116 = vunpack.c.l.b16 %v844
      %v1117 = vunpack.c.h.b16 %v844
      %v1118 = vunpack.c.l.b16 %v845
      %v1119 = vunpack.c.h.b16 %v845
      %v1120 = vunpack.c.l.b16 %v846
      %v1121 = vunpack.c.h.b16 %v846
      %v1122 = vunpack.c.l.b16 %v847
      %v1123 = vunpack.c.h.b16 %v847
      %v1124 = vunpack.c.l.b16 %v848
      %v1125 = vunpack.c.h.b16 %v848
      %v1126 = vunpack.c.l.b16 %v849
      %v1127 = vunpack.c.h.b16 %v849
      %v1128 = vunpack.c.l.b16 %v850
      %v1129 = vunpack.c.h.b16 %v850
      %v1130 = vunpack.c.l.b16 %v851
      %v1131 = vunpack.c.h.b16 %v851
      %v1132 = vunpack.c.l.b16 %v852
      %v1133 = vunpack.c.h.b16 %v852
      %v1134 = vunpack.c.l.b16 %v853
      %v1135 = vunpack.c.h.b16 %v853
      %v1136 = vunpack.c.l.b16 %v854
      %v1137 = vunpack.c.h.b16 %v854
      %v1138 = vunpack.c.l.b16 %v855
      %v1139 = vunpack.c.h.b16 %v855
      %v1140 = vunpack.c.l.b16 %v856
      %v1141 = vunpack.c.h.b16 %v856
      %v1142 = vunpack.c.l.b16 %v857
      %v1143 = vunpack.c.h.b16 %v857
      %v1144 = vunpack.c.l.b16 %v858
      %v1145 = vunpack.c.h.b16 %v858
      %v1146 = vunpack.c.l.b16 %v859
      %v1147 = vunpack.c.h.b16 %v859
      %v1148 = vunpack.c.l.b16 %v860
      %v1149 = vunpack.c.h.b16 %v860
      %v1150 = vunpack.c.l.b16 %v861
      %v1151 = vunpack.c.h.b16 %v861
      %v1152 = vunpack.c.l.b16 %v862
      %v1153 = vunpack.c.h.b16 %v862
      %v1154 = vunpack.c.l.b16 %v863
      %v1155 = vunpack.c.h.b16 %v863
      %v1156 = vunpack.c.l.b16 %v864
      %v1157 = vunpack.c.h.b16 %v864
      %v1158 = vunpack.c.l.b16 %v865
      %v1159 = vunpack.c.h.b16 %v865
      %v1160 = vunpack.c.l.b16 %v866
      %v1161 = vunpack.c.h.b16 %v866
      %v1162 = vunpack.c.l.b16 %v867
      %v1163 = vunpack.c.h.b16 %v867
      %v1164 = vunpack.c.l.b16 %v868
      %v1165 = vunpack.c.h.b16 %v868
      %v1166 = vunpack.c.l.b16 %v869
      %v1167 = vunpack.c.h.b16 %v869
      %v1168 = vunpack.c.l.b16 %v870
      %v1169 = vunpack.c.h.b16 %v870
      %v1170 = vunpack.c.l.b16 %v871
      %v1171 = vunpack.c.h.b16 %v871
      %v1172 = vunpack.c.l.b16 %v872
      %v1173 = vunpack.c.h.b16 %v872
      %v1174 = vunpack.c.l.b16 %v873
      %v1175 = vunpack.c.h.b16 %v873
      %v1176 = vunpack.c.l.b16 %v874
      %v1177 = vunpack.c.h.b16 %v874
      %v1178 = vunpack.c.l.b16 %v875
      %v1179 = vunpack.c.h.b16 %v875
      %v1180 = vunpack.c.l.b16 %v876
      %v1181 = vunpack.c.h.b16 %v876
      %v1182 = vunpack.c.l.b16 %v877
      %v1183 = vunpack.c.h.b16 %v877
      %v1184 = vpack.c.b16 %v990, %v988
      %v1185 = vpack.c.b16 %v991, %v989
      %v1186 = vpack.c.b16 %v994, %v992
      %v1187 = vpack.c.b16 %v995, %v993
      %v1188 = vpack.c.b16 %v998, %v996
      %v1189 = vpack.c.b16 %v999, %v997
      %v1190 = vpack.c.b16 %v1002, %v1000
      %v1191 = vpack.c.b16 %v1003, %v1001
      %v1192 = vpack.c.b16 %v1006, %v1004
      %v1193 = vpack.c.b16 %v1007, %v1005
      %v1194 = vpack.c.b16 %v1010, %v1008
      %v1195 = vpack.c.b16 %v1011, %v1009
      %v1196 = vpack.c.b16 %v1014, %v1012
      %v1197 = vpack.c.b16 %v1015, %v1013
      %v1198 = vpack.c.b16 %v1018, %v1016
      %v1199 = vpack.c.b16 %v1019, %v1017
      %v1200 = vpack.c.b16 %v1022, %v1020
      %v1201 = vpack.c.b16 %v1023, %v1021
      %v1202 = vpack.c.b16 %v1026, %v1024
      %v1203 = vpack.c.b16 %v1027, %v1025
      %v1204 = vpack.c.b16 %v1030, %v1028
      %v1205 = vpack.c.b16 %v1031, %v1029
      %v1206 = vpack.c.b16 %v1034, %v1032
      %v1207 = vpack.c.b16 %v1035, %v1033
      %v1208 = vpack.c.b16 %v1038, %v1036
      %v1209 = vpack.c.b16 %v1039, %v1037
      %v1210 = vpack.c.b16 %v1042, %v1040
      %v1211 = vpack.c.b16 %v1043, %v1041
      %v1212 = vpack.c.b16 %v1046, %v1044
      %v1213 = vpack.c.b16 %v1047, %v1045
      %v1214 = vpack.c.b16 %v1050, %v1048
      %v1215 = vpack.c.b16 %v1051, %v1049
      %v1216 = vpack.c.b16 %v1054, %v1052
      %v1217 = vpack.c.b16 %v1055, %v1053
      %v1218 = vpack.c.b16 %v1058, %v1056
      %v1219 = vpack.c.b16 %v1059, %v1057
      %v1220 = vpack.c.b16 %v1062, %v1060
      %v1221 = vpack.c.b16 %v1063, %v1061
      %v1222 = vpack.c.b16 %v1066, %v1064
      %v1223 = vpack.c.b16 %v1067, %v1065
      %v1224 = vpack.c.b16 %v1070, %v1068
      %v1225 = vpack.c.b16 %v1071, %v1069
      %v1226 = vpack.c.b16 %v1074, %v1072
      %v1227 = vpack.c.b16 %v1075, %v1073
      %v1228 = vpack.c.b16 %v1078, %v1076
      %v1229 = vpack.c.b16 %v1079, %v1077
      %v1230 = vpack.c.b16 %v1082, %v1080
      %v1231 = vpack.c.b16 %v1083, %v1081
      %v1232 = vpack.c.b16 %v1086, %v1084
      %v1233 = vpack.c.b16 %v1087, %v1085
      %v1234 = vpack.c.b16 %v1090, %v1088
      %v1235 = vpack.c.b16 %v1091, %v1089
      %v1236 = vpack.c.b16 %v1094, %v1092
      %v1237 = vpack.c.b16 %v1095, %v1093
      %v1238 = vpack.c.b16 %v1098, %v1096
      %v1239 = vpack.c.b16 %v1099, %v1097
      %v1240 = vpack.c.b16 %v1102, %v1100
      %v1241 = vpack.c.b16 %v1103, %v1101
      %v1242 = vpack.c.b16 %v1106, %v1104
      %v1243 = vpack.c.b16 %v1107, %v1105
      %v1244 = vpack.c.b16 %v1110, %v1108
      %v1245 = vpack.c.b16 %v1111, %v1109
      %v1246 = vpack.c.b16 %v1114, %v1112
      %v1247 = vpack.c.b16 %v1115, %v1113
      %v1248 = vpack.c.b16 %v1118, %v1116
      %v1249 = vpack.c.b16 %v1119, %v1117
      %v1250 = vpack.c.b16 %v1122, %v1120
      %v1251 = vpack.c.b16 %v1123, %v1121
      %v1252 = vpack.c.b16 %v1126, %v1124
      %v1253 = vpack.c.b16 %v1127, %v1125
      %v1254 = vpack.c.b16 %v1130, %v1128
      %v1255 = vpack.c.b16 %v1131, %v1129
      %v1256 = vpack.c.b16 %v1134, %v1132
      %v1257 = vpack.c.b16 %v1135, %v1133
      %v1258 = vpack.c.b16 %v1138, %v1136
      %v1259 = vpack.c.b16 %v1139, %v1137
      %v1260 = vpack.c.b16 %v1142, %v1140
      %v1261 = vpack.c.b16 %v1143, %v1141
      %v1262 = vpack.c.b16 %v1146, %v1144
      %v1263 = vpack.c.b16 %v1147, %v1145
      %v1264 = vpack.c.b16 %v1150, %v1148
      %v1265 = vpack.c.b16 %v1151, %v1149
      %v1266 = vpack.c.b16 %v1154, %v1152
      %v1267 = vpack.c.b16 %v1155, %v1153
      %v1268 = vpack.c.b16 %v1158, %v1156
      %v1269 = vpack.c.b16 %v1159, %v1157
      %v1270 = vpack.c.b16 %v1162, %v1160
      %v1271 = vpack.c.b16 %v1163, %v1161
      %v1272 = vpack.c.b16 %v1166, %v1164
      %v1273 = vpack.c.b16 %v1167, %v1165
      %v1274 = vpack.c.b16 %v1170, %v1168
      %v1275 = vpack.c.b16 %v1171, %v1169
      %v1276 = vpack.c.b16 %v1174, %v1172
      %v1277 = vpack.c.b16 %v1175, %v1173
      %v1278 = vpack.c.b16 %v1178, %v1176
      %v1279 = vpack.c.b16 %v1179, %v1177
      %v1280 = vpack.c.b16 %v1182, %v1180
      %v1281 = vpack.c.b16 %v1183, %v1181
      %vm1380 = vcmask 130048
      %v1382 = vsel %vm1380, %v730, 0
      %v1385 = vsel %vm1380, %v737, 0
      %v1388 = vsel %vm1380, %v744, 0
      %v1391 = vsel %vm1380, %v751, 0
      %v1394 = vsel %vm1380, %v758, 0
      %v1397 = vsel %vm1380, %v765, 0
      %v1400 = vsel %vm1380, %v772, 0
      %v1403 = vsel %vm1380, %v779, 0
      %1405 = vmatprep.subr.bf16.mxu0 %v1199
      %1406 = vmatpush1.bf16.msra.mxu0 %v1198
      %1407 = vmatprep.subr.bf16.mxu0 %v1197
      %1408 = vmatpush1.bf16.msra.mxu0 %v1196
      %1409 = vmatprep.subr.bf16.mxu0 %v1195
      %1410 = vmatpush1.bf16.msra.mxu0 %v1194
      %1411 = vmatprep.subr.bf16.mxu0 %v1193
      %1412 = vmatpush1.bf16.msra.mxu0 %v1192
      %1413 = vmatprep.subr.bf16.mxu0 %v1191
      %1414 = vmatpush1.bf16.msra.mxu0 %v1190
      %1415 = vmatprep.subr.bf16.mxu0 %v1189
      %1416 = vmatpush1.bf16.msra.mxu0 %v1188
      %1417 = vmatprep.subr.bf16.mxu0 %v1187
      %1418 = vmatpush1.bf16.msra.mxu0 %v1186
      %1419 = vmatprep.subr.bf16.mxu0 %v1185
      %1420 = vmatpush1.bf16.msra.mxu0 %v1184
      %1421 = vmatprep.subr.bf16.mxu0 %v1215
      %1422 = vmatpush2.bf16.msra.mxu0 %v1214
      %1423 = vmatprep.subr.bf16.mxu0 %v1213
      %1424 = vmatpush2.bf16.msra.mxu0 %v1212
      %1425 = vmatprep.subr.bf16.mxu0 %v1211
      %1426 = vmatpush2.bf16.msra.mxu0 %v1210
      %1427 = vmatprep.subr.bf16.mxu0 %v1209
      %1428 = vmatpush2.bf16.msra.mxu0 %v1208
      %1429 = vmatprep.subr.bf16.mxu0 %v1207
      %1430 = vmatpush2.bf16.msra.mxu0 %v1206
      %1431 = vmatprep.subr.bf16.mxu0 %v1205
      %1432 = vmatpush2.bf16.msra.mxu0 %v1204
      %1433 = vmatprep.subr.bf16.mxu0 %v1203
      %1434 = vmatpush2.bf16.msra.mxu0 %v1202
      %1435 = vmatprep.subr.bf16.mxu0 %v1201
      %1436 = vmatpush2.bf16.msra.mxu0 %v1200
      %1437 = vmatprep.mubr.bf16.mxu0 %v725
      %1438 = vmatmul.mubr.bf16.gmra.mxu0 %v724
      %v1439 = vpop.f32.mrf.mxu0
      %v1440 = vadd.f32 %v883, %v1439
      %v1441 = vpop.f32.mrf.mxu0
      %v1442 = vadd.f32 %v887, %v1441
      %v1443 = vpop.f32.mrf.mxu0
      %v1444 = vadd.f32 %v883, %v1443
      %v1445 = vpop.f32.mrf.mxu0
      %v1446 = vadd.f32 %v887, %v1445
      %1447 = vmatprep.mubr.bf16.mxu0 %v732
      %1448 = vmatmul.mubr.bf16.gmra.mxu0 %v731
      %v1449 = vpop.f32.mrf.mxu0
      %v1450 = vadd.f32 %v883, %v1449
      %v1451 = vpop.f32.mrf.mxu0
      %v1452 = vadd.f32 %v887, %v1451
      %v1453 = vpop.f32.mrf.mxu0
      %v1454 = vadd.f32 %v883, %v1453
      %v1455 = vpop.f32.mrf.mxu0
      %v1456 = vadd.f32 %v887, %v1455
      %1457 = vmatprep.mubr.bf16.mxu0 %v739
      %1458 = vmatmul.mubr.bf16.gmra.mxu0 %v738
      %v1459 = vpop.f32.mrf.mxu0
      %v1460 = vadd.f32 %v883, %v1459
      %v1461 = vpop.f32.mrf.mxu0
      %v1462 = vadd.f32 %v887, %v1461
      %v1463 = vpop.f32.mrf.mxu0
      %v1464 = vadd.f32 %v883, %v1463
      %v1465 = vpop.f32.mrf.mxu0
      %v1466 = vadd.f32 %v887, %v1465
      %1467 = vmatprep.mubr.bf16.mxu0 %v746
      %1468 = vmatmul.mubr.bf16.gmra.mxu0 %v745
      %v1469 = vpop.f32.mrf.mxu0
      %v1470 = vadd.f32 %v883, %v1469
      %v1471 = vpop.f32.mrf.mxu0
      %v1472 = vadd.f32 %v887, %v1471
      %v1473 = vpop.f32.mrf.mxu0
      %v1474 = vadd.f32 %v883, %v1473
      %v1475 = vpop.f32.mrf.mxu0
      %v1476 = vadd.f32 %v887, %v1475
      %1477 = vmatprep.mubr.bf16.mxu0 %v753
      %1478 = vmatmul.mubr.bf16.gmra.mxu0 %v752
      %v1479 = vpop.f32.mrf.mxu0
      %v1480 = vadd.f32 %v883, %v1479
      %v1481 = vpop.f32.mrf.mxu0
      %v1482 = vadd.f32 %v887, %v1481
      %v1483 = vpop.f32.mrf.mxu0
      %v1484 = vadd.f32 %v883, %v1483
      %v1485 = vpop.f32.mrf.mxu0
      %v1486 = vadd.f32 %v887, %v1485
      %1487 = vmatprep.mubr.bf16.mxu0 %v760
      %1488 = vmatmul.mubr.bf16.gmra.mxu0 %v759
      %v1489 = vpop.f32.mrf.mxu0
      %v1490 = vadd.f32 %v883, %v1489
      %v1491 = vpop.f32.mrf.mxu0
      %v1492 = vadd.f32 %v887, %v1491
      %v1493 = vpop.f32.mrf.mxu0
      %v1494 = vadd.f32 %v883, %v1493
      %v1495 = vpop.f32.mrf.mxu0
      %v1496 = vadd.f32 %v887, %v1495
      %1497 = vmatprep.mubr.bf16.mxu0 %v767
      %1498 = vmatmul.mubr.bf16.gmra.mxu0 %v766
      %v1499 = vpop.f32.mrf.mxu0
      %v1500 = vadd.f32 %v883, %v1499
      %v1501 = vpop.f32.mrf.mxu0
      %v1502 = vadd.f32 %v887, %v1501
      %v1503 = vpop.f32.mrf.mxu0
      %v1504 = vadd.f32 %v883, %v1503
      %v1505 = vpop.f32.mrf.mxu0
      %v1506 = vadd.f32 %v887, %v1505
      %1507 = vmatprep.mubr.bf16.mxu0 %v774
      %1508 = vmatmul.mubr.bf16.gmra.mxu0 %v773
      %v1509 = vpop.f32.mrf.mxu0
      %v1510 = vadd.f32 %v883, %v1509
      %v1511 = vpop.f32.mrf.mxu0
      %v1512 = vadd.f32 %v887, %v1511
      %v1513 = vpop.f32.mrf.mxu0
      %v1514 = vadd.f32 %v883, %v1513
      %v1515 = vpop.f32.mrf.mxu0
      %v1516 = vadd.f32 %v887, %v1515
      %1517 = vdwg.mxu0
      %1518 = vmatprep.subr.bf16.mxu0 %v1231
      %1519 = vmatpush1.bf16.msra.mxu0 %v1230
      %1520 = vmatprep.subr.bf16.mxu0 %v1229
      %1521 = vmatpush1.bf16.msra.mxu0 %v1228
      %1522 = vmatprep.subr.bf16.mxu0 %v1227
      %1523 = vmatpush1.bf16.msra.mxu0 %v1226
      %1524 = vmatprep.subr.bf16.mxu0 %v1225
      %1525 = vmatpush1.bf16.msra.mxu0 %v1224
      %1526 = vmatprep.subr.bf16.mxu0 %v1223
      %1527 = vmatpush1.bf16.msra.mxu0 %v1222
      %1528 = vmatprep.subr.bf16.mxu0 %v1221
      %1529 = vmatpush1.bf16.msra.mxu0 %v1220
      %1530 = vmatprep.subr.bf16.mxu0 %v1219
      %1531 = vmatpush1.bf16.msra.mxu0 %v1218
      %1532 = vmatprep.subr.bf16.mxu0 %v1217
      %1533 = vmatpush1.bf16.msra.mxu0 %v1216
      %1534 = vmatprep.subr.bf16.mxu0 %v1247
      %1535 = vmatpush2.bf16.msra.mxu0 %v1246
      %1536 = vmatprep.subr.bf16.mxu0 %v1245
      %1537 = vmatpush2.bf16.msra.mxu0 %v1244
      %1538 = vmatprep.subr.bf16.mxu0 %v1243
      %1539 = vmatpush2.bf16.msra.mxu0 %v1242
      %1540 = vmatprep.subr.bf16.mxu0 %v1241
      %1541 = vmatpush2.bf16.msra.mxu0 %v1240
      %1542 = vmatprep.subr.bf16.mxu0 %v1239
      %1543 = vmatpush2.bf16.msra.mxu0 %v1238
      %1544 = vmatprep.subr.bf16.mxu0 %v1237
      %1545 = vmatpush2.bf16.msra.mxu0 %v1236
      %1546 = vmatprep.subr.bf16.mxu0 %v1235
      %1547 = vmatpush2.bf16.msra.mxu0 %v1234
      %1548 = vmatprep.subr.bf16.mxu0 %v1233
      %1549 = vmatpush2.bf16.msra.mxu0 %v1232
      %1550 = vmatprep.mubr.bf16.mxu0 %v727
      %1551 = vmatmul.mubr.bf16.gmra.mxu0 %v726
      %v1552 = vpop.f32.mrf.mxu0
      %v1553 = vadd.f32 %v1440, %v1552
      %v1554 = vpop.f32.mrf.mxu0
      %v1555 = vadd.f32 %v1442, %v1554
      %v1556 = vpop.f32.mrf.mxu0
      %v1557 = vadd.f32 %v1444, %v1556
      %v1558 = vpop.f32.mrf.mxu0
      %v1559 = vadd.f32 %v1446, %v1558
      %1560 = vmatprep.mubr.bf16.mxu0 %v734
      %1561 = vmatmul.mubr.bf16.gmra.mxu0 %v733
      %v1562 = vpop.f32.mrf.mxu0
      %v1563 = vadd.f32 %v1450, %v1562
      %v1564 = vpop.f32.mrf.mxu0
      %v1565 = vadd.f32 %v1452, %v1564
      %v1566 = vpop.f32.mrf.mxu0
      %v1567 = vadd.f32 %v1454, %v1566
      %v1568 = vpop.f32.mrf.mxu0
      %v1569 = vadd.f32 %v1456, %v1568
      %1570 = vmatprep.mubr.bf16.mxu0 %v741
      %1571 = vmatmul.mubr.bf16.gmra.mxu0 %v740
      %v1572 = vpop.f32.mrf.mxu0
      %v1573 = vadd.f32 %v1460, %v1572
      %v1574 = vpop.f32.mrf.mxu0
      %v1575 = vadd.f32 %v1462, %v1574
      %v1576 = vpop.f32.mrf.mxu0
      %v1577 = vadd.f32 %v1464, %v1576
      %v1578 = vpop.f32.mrf.mxu0
      %v1579 = vadd.f32 %v1466, %v1578
      %1580 = vmatprep.mubr.bf16.mxu0 %v748
      %1581 = vmatmul.mubr.bf16.gmra.mxu0 %v747
      %v1582 = vpop.f32.mrf.mxu0
      %v1583 = vadd.f32 %v1470, %v1582
      %v1584 = vpop.f32.mrf.mxu0
      %v1585 = vadd.f32 %v1472, %v1584
      %v1586 = vpop.f32.mrf.mxu0
      %v1587 = vadd.f32 %v1474, %v1586
      %v1588 = vpop.f32.mrf.mxu0
      %v1589 = vadd.f32 %v1476, %v1588
      %1590 = vmatprep.mubr.bf16.mxu0 %v755
      %1591 = vmatmul.mubr.bf16.gmra.mxu0 %v754
      %v1592 = vpop.f32.mrf.mxu0
      %v1593 = vadd.f32 %v1480, %v1592
      %v1594 = vpop.f32.mrf.mxu0
      %v1595 = vadd.f32 %v1482, %v1594
      %v1596 = vpop.f32.mrf.mxu0
      %v1597 = vadd.f32 %v1484, %v1596
      %v1598 = vpop.f32.mrf.mxu0
      %v1599 = vadd.f32 %v1486, %v1598
      %1600 = vmatprep.mubr.bf16.mxu0 %v762
      %1601 = vmatmul.mubr.bf16.gmra.mxu0 %v761
      %v1602 = vpop.f32.mrf.mxu0
      %v1603 = vadd.f32 %v1490, %v1602
      %v1604 = vpop.f32.mrf.mxu0
      %v1605 = vadd.f32 %v1492, %v1604
      %v1606 = vpop.f32.mrf.mxu0
      %v1607 = vadd.f32 %v1494, %v1606
      %v1608 = vpop.f32.mrf.mxu0
      %v1609 = vadd.f32 %v1496, %v1608
      %1610 = vmatprep.mubr.bf16.mxu0 %v769
      %1611 = vmatmul.mubr.bf16.gmra.mxu0 %v768
      %v1612 = vpop.f32.mrf.mxu0
      %v1613 = vadd.f32 %v1500, %v1612
      %v1614 = vpop.f32.mrf.mxu0
      %v1615 = vadd.f32 %v1502, %v1614
      %v1616 = vpop.f32.mrf.mxu0
      %v1617 = vadd.f32 %v1504, %v1616
      %v1618 = vpop.f32.mrf.mxu0
      %v1619 = vadd.f32 %v1506, %v1618
      %1620 = vmatprep.mubr.bf16.mxu0 %v776
      %1621 = vmatmul.mubr.bf16.gmra.mxu0 %v775
      %v1622 = vpop.f32.mrf.mxu0
      %v1623 = vadd.f32 %v1510, %v1622
      %v1624 = vpop.f32.mrf.mxu0
      %v1625 = vadd.f32 %v1512, %v1624
      %v1626 = vpop.f32.mrf.mxu0
      %v1627 = vadd.f32 %v1514, %v1626
      %v1628 = vpop.f32.mrf.mxu0
      %v1629 = vadd.f32 %v1516, %v1628
      %1630 = vdwg.mxu0
      %1631 = vmatprep.subr.bf16.mxu0 %v1263
      %1632 = vmatpush1.bf16.msra.mxu0 %v1262
      %1633 = vmatprep.subr.bf16.mxu0 %v1261
      %1634 = vmatpush1.bf16.msra.mxu0 %v1260
      %1635 = vmatprep.subr.bf16.mxu0 %v1259
      %1636 = vmatpush1.bf16.msra.mxu0 %v1258
      %1637 = vmatprep.subr.bf16.mxu0 %v1257
      %1638 = vmatpush1.bf16.msra.mxu0 %v1256
      %1639 = vmatprep.subr.bf16.mxu0 %v1255
      %1640 = vmatpush1.bf16.msra.mxu0 %v1254
      %1641 = vmatprep.subr.bf16.mxu0 %v1253
      %1642 = vmatpush1.bf16.msra.mxu0 %v1252
      %1643 = vmatprep.subr.bf16.mxu0 %v1251
      %1644 = vmatpush1.bf16.msra.mxu0 %v1250
      %1645 = vmatprep.subr.bf16.mxu0 %v1249
      %1646 = vmatpush1.bf16.msra.mxu0 %v1248
      %1647 = vmatprep.subr.bf16.mxu0 %v1279
      %1648 = vmatpush2.bf16.msra.mxu0 %v1278
      %1649 = vmatprep.subr.bf16.mxu0 %v1277
      %1650 = vmatpush2.bf16.msra.mxu0 %v1276
      %1651 = vmatprep.subr.bf16.mxu0 %v1275
      %1652 = vmatpush2.bf16.msra.mxu0 %v1274
      %1653 = vmatprep.subr.bf16.mxu0 %v1273
      %1654 = vmatpush2.bf16.msra.mxu0 %v1272
      %1655 = vmatprep.subr.bf16.mxu0 %v1271
      %1656 = vmatpush2.bf16.msra.mxu0 %v1270
      %1657 = vmatprep.subr.bf16.mxu0 %v1269
      %1658 = vmatpush2.bf16.msra.mxu0 %v1268
      %1659 = vmatprep.subr.bf16.mxu0 %v1267
      %1660 = vmatpush2.bf16.msra.mxu0 %v1266
      %1661 = vmatprep.subr.bf16.mxu0 %v1265
      %1662 = vmatpush2.bf16.msra.mxu0 %v1264
      %1663 = vmatprep.mubr.bf16.mxu0 %v729
      %1664 = vmatmul.mubr.bf16.gmra.mxu0 %v728
      %v1665 = vpop.f32.mrf.mxu0
      %v1666 = vadd.f32 %v1553, %v1665
      %v1667 = vpop.f32.mrf.mxu0
      %v1668 = vadd.f32 %v1555, %v1667
      %v1669 = vpop.f32.mrf.mxu0
      %v1670 = vadd.f32 %v1557, %v1669
      %v1671 = vpop.f32.mrf.mxu0
      %v1672 = vadd.f32 %v1559, %v1671
      %1673 = vmatprep.mubr.bf16.mxu0 %v736
      %1674 = vmatmul.mubr.bf16.gmra.mxu0 %v735
      %v1675 = vpop.f32.mrf.mxu0
      %v1676 = vadd.f32 %v1563, %v1675
      %v1677 = vpop.f32.mrf.mxu0
      %v1678 = vadd.f32 %v1565, %v1677
      %v1679 = vpop.f32.mrf.mxu0
      %v1680 = vadd.f32 %v1567, %v1679
      %v1681 = vpop.f32.mrf.mxu0
      %v1682 = vadd.f32 %v1569, %v1681
      %1683 = vmatprep.mubr.bf16.mxu0 %v743
      %1684 = vmatmul.mubr.bf16.gmra.mxu0 %v742
      %v1685 = vpop.f32.mrf.mxu0
      %v1686 = vadd.f32 %v1573, %v1685
      %v1687 = vpop.f32.mrf.mxu0
      %v1688 = vadd.f32 %v1575, %v1687
      %v1689 = vpop.f32.mrf.mxu0
      %v1690 = vadd.f32 %v1577, %v1689
      %v1691 = vpop.f32.mrf.mxu0
      %v1692 = vadd.f32 %v1579, %v1691
      %1693 = vmatprep.mubr.bf16.mxu0 %v750
      %1694 = vmatmul.mubr.bf16.gmra.mxu0 %v749
      %v1695 = vpop.f32.mrf.mxu0
      %v1696 = vadd.f32 %v1583, %v1695
      %v1697 = vpop.f32.mrf.mxu0
      %v1698 = vadd.f32 %v1585, %v1697
      %v1699 = vpop.f32.mrf.mxu0
      %v1700 = vadd.f32 %v1587, %v1699
      %v1701 = vpop.f32.mrf.mxu0
      %v1702 = vadd.f32 %v1589, %v1701
      %1703 = vmatprep.mubr.bf16.mxu0 %v757
      %1704 = vmatmul.mubr.bf16.gmra.mxu0 %v756
      %v1705 = vpop.f32.mrf.mxu0
      %v1706 = vadd.f32 %v1593, %v1705
      %v1707 = vpop.f32.mrf.mxu0
      %v1708 = vadd.f32 %v1595, %v1707
      %v1709 = vpop.f32.mrf.mxu0
      %v1710 = vadd.f32 %v1597, %v1709
      %v1711 = vpop.f32.mrf.mxu0
      %v1712 = vadd.f32 %v1599, %v1711
      %1713 = vmatprep.mubr.bf16.mxu0 %v764
      %1714 = vmatmul.mubr.bf16.gmra.mxu0 %v763
      %v1715 = vpop.f32.mrf.mxu0
      %v1716 = vadd.f32 %v1603, %v1715
      %v1717 = vpop.f32.mrf.mxu0
      %v1718 = vadd.f32 %v1605, %v1717
      %v1719 = vpop.f32.mrf.mxu0
      %v1720 = vadd.f32 %v1607, %v1719
      %v1721 = vpop.f32.mrf.mxu0
      %v1722 = vadd.f32 %v1609, %v1721
      %1723 = vmatprep.mubr.bf16.mxu0 %v771
      %1724 = vmatmul.mubr.bf16.gmra.mxu0 %v770
      %v1725 = vpop.f32.mrf.mxu0
      %v1726 = vadd.f32 %v1613, %v1725
      %v1727 = vpop.f32.mrf.mxu0
      %v1728 = vadd.f32 %v1615, %v1727
      %v1729 = vpop.f32.mrf.mxu0
      %v1730 = vadd.f32 %v1617, %v1729
      %v1731 = vpop.f32.mrf.mxu0
      %v1732 = vadd.f32 %v1619, %v1731
      %1733 = vmatprep.mubr.bf16.mxu0 %v778
      %1734 = vmatmul.mubr.bf16.gmra.mxu0 %v777
      %v1735 = vpop.f32.mrf.mxu0
      %v1736 = vadd.f32 %v1623, %v1735
      %v1737 = vpop.f32.mrf.mxu0
      %v1738 = vadd.f32 %v1625, %v1737
      %v1739 = vpop.f32.mrf.mxu0
      %v1740 = vadd.f32 %v1627, %v1739
      %v1741 = vpop.f32.mrf.mxu0
      %v1742 = vadd.f32 %v1629, %v1741
      %1743 = vdwg.mxu0
      %1744 = vmatprep.subr.bf16.mxu0 0
      %1745 = vmatpush1.bf16.msra.mxu0 0
      %1746 = vmatprep.subr.bf16.mxu0 0
      %1747 = vmatpush1.bf16.msra.mxu0 0
      %1748 = vmatprep.subr.bf16.mxu0 0
      %1749 = vmatpush1.bf16.msra.mxu0 0
      %1750 = vmatprep.subr.bf16.mxu0 0
      %1751 = vmatpush1.bf16.msra.mxu0 0
      %1752 = vmatprep.subr.bf16.mxu0 0
      %1753 = vmatpush1.bf16.msra.mxu0 0
      %1754 = vmatprep.subr.bf16.mxu0 0
      %1755 = vmatpush1.bf16.msra.mxu0 0
      %1756 = vmatprep.subr.bf16.mxu0 0
      %1757 = vmatpush1.bf16.msra.mxu0 0
      %1758 = vmatprep.subr.bf16.mxu0 %v1281
      %1759 = vmatpush1.bf16.msra.mxu0 %v1280
      %1760 = vmatprep.subr.bf16.mxu0 0
      %1761 = vmatpush2.bf16.msra.mxu0 0
      %1762 = vmatprep.subr.bf16.mxu0 0
      %1763 = vmatpush2.bf16.msra.mxu0 0
      %1764 = vmatprep.subr.bf16.mxu0 0
      %1765 = vmatpush2.bf16.msra.mxu0 0
      %1766 = vmatprep.subr.bf16.mxu0 0
      %1767 = vmatpush2.bf16.msra.mxu0 0
      %1768 = vmatprep.subr.bf16.mxu0 0
      %1769 = vmatpush2.bf16.msra.mxu0 0
      %1770 = vmatprep.subr.bf16.mxu0 0
      %1771 = vmatpush2.bf16.msra.mxu0 0
      %1772 = vmatprep.subr.bf16.mxu0 0
      %1773 = vmatpush2.bf16.msra.mxu0 0
      %1774 = vmatprep.subr.bf16.mxu0 0
      %1775 = vmatpush2.bf16.msra.mxu0 0
      %1776 = vmatprep.mubr.bf16.mxu0 0
      %1777 = vmatmul.mubr.bf16.gmra.mxu0 %v1382
      %v1778 = vpop.f32.mrf.mxu0
      %v1779 = vadd.f32 %v1666, %v1778
      %v1780 = vpop.f32.mrf.mxu0
      %v1781 = vadd.f32 %v1668, %v1780
      %v1782 = vpop.f32.mrf.mxu0
      %v1783 = vadd.f32 %v1670, %v1782
      %v1784 = vpop.f32.mrf.mxu0
      %v1785 = vadd.f32 %v1672, %v1784
      %1786 = vmatprep.mubr.bf16.mxu0 0
      %1787 = vmatmul.mubr.bf16.gmra.mxu0 %v1385
      %v1788 = vpop.f32.mrf.mxu0
      %v1789 = vadd.f32 %v1676, %v1788
      %v1790 = vpop.f32.mrf.mxu0
      %v1791 = vadd.f32 %v1678, %v1790
      %v1792 = vpop.f32.mrf.mxu0
      %v1793 = vadd.f32 %v1680, %v1792
      %v1794 = vpop.f32.mrf.mxu0
      %v1795 = vadd.f32 %v1682, %v1794
      %1796 = vmatprep.mubr.bf16.mxu0 0
      %1797 = vmatmul.mubr.bf16.gmra.mxu0 %v1388
      %v1798 = vpop.f32.mrf.mxu0
      %v1799 = vadd.f32 %v1686, %v1798
      %v1800 = vpop.f32.mrf.mxu0
      %v1801 = vadd.f32 %v1688, %v1800
      %v1802 = vpop.f32.mrf.mxu0
      %v1803 = vadd.f32 %v1690, %v1802
      %v1804 = vpop.f32.mrf.mxu0
      %v1805 = vadd.f32 %v1692, %v1804
      %1806 = vmatprep.mubr.bf16.mxu0 0
      %1807 = vmatmul.mubr.bf16.gmra.mxu0 %v1391
      %v1808 = vpop.f32.mrf.mxu0
      %v1809 = vadd.f32 %v1696, %v1808
      %v1810 = vpop.f32.mrf.mxu0
      %v1811 = vadd.f32 %v1698, %v1810
      %v1812 = vpop.f32.mrf.mxu0
      %v1813 = vadd.f32 %v1700, %v1812
      %v1814 = vpop.f32.mrf.mxu0
      %v1815 = vadd.f32 %v1702, %v1814
      %1816 = vmatprep.mubr.bf16.mxu0 0
      %1817 = vmatmul.mubr.bf16.gmra.mxu0 %v1394
      %v1818 = vpop.f32.mrf.mxu0
      %v1819 = vadd.f32 %v1706, %v1818
      %v1820 = vpop.f32.mrf.mxu0
      %v1821 = vadd.f32 %v1708, %v1820
      %v1822 = vpop.f32.mrf.mxu0
      %v1823 = vadd.f32 %v1710, %v1822
      %v1824 = vpop.f32.mrf.mxu0
      %v1825 = vadd.f32 %v1712, %v1824
      %1826 = vmatprep.mubr.bf16.mxu0 0
      %1827 = vmatmul.mubr.bf16.gmra.mxu0 %v1397
      %v1828 = vpop.f32.mrf.mxu0
      %v1829 = vadd.f32 %v1716, %v1828
      %v1830 = vpop.f32.mrf.mxu0
      %v1831 = vadd.f32 %v1718, %v1830
      %v1832 = vpop.f32.mrf.mxu0
      %v1833 = vadd.f32 %v1720, %v1832
      %v1834 = vpop.f32.mrf.mxu0
      %v1835 = vadd.f32 %v1722, %v1834
      %1836 = vmatprep.mubr.bf16.mxu0 0
      %1837 = vmatmul.mubr.bf16.gmra.mxu0 %v1400
      %v1838 = vpop.f32.mrf.mxu0
      %v1839 = vadd.f32 %v1726, %v1838
      %v1840 = vpop.f32.mrf.mxu0
      %v1841 = vadd.f32 %v1728, %v1840
      %v1842 = vpop.f32.mrf.mxu0
      %v1843 = vadd.f32 %v1730, %v1842
      %v1844 = vpop.f32.mrf.mxu0
      %v1845 = vadd.f32 %v1732, %v1844
      %1846 = vmatprep.mubr.bf16.mxu0 0
      %1847 = vmatmul.mubr.bf16.gmra.mxu0 %v1403
      %v1848 = vpop.f32.mrf.mxu0
      %v1849 = vadd.f32 %v1736, %v1848
      %v1850 = vpop.f32.mrf.mxu0
      %v1851 = vadd.f32 %v1738, %v1850
      %v1852 = vpop.f32.mrf.mxu0
      %v1853 = vadd.f32 %v1740, %v1852
      %v1854 = vpop.f32.mrf.mxu0
      %v1855 = vadd.f32 %v1742, %v1854
      %1856 = vdwg.mxu0
      %v1857 = vmul.f32 %v1779, 0.01
      %v1858 = vmul.f32 %v1781, 0.01
      %v1859 = vmul.f32 %v1783, 0.01
      %v1860 = vmul.f32 %v1785, 0.01
      %v1861 = vmul.f32 %v1789, 0.01
      %v1862 = vmul.f32 %v1791, 0.01
      %v1863 = vmul.f32 %v1793, 0.01
      %v1864 = vmul.f32 %v1795, 0.01
      %v1865 = vmul.f32 %v1799, 0.01
      %v1866 = vmul.f32 %v1801, 0.01
      %v1867 = vmul.f32 %v1803, 0.01
      %v1868 = vmul.f32 %v1805, 0.01
      %v1869 = vmul.f32 %v1809, 0.01
      %v1870 = vmul.f32 %v1811, 0.01
      %v1871 = vmul.f32 %v1813, 0.01
      %v1872 = vmul.f32 %v1815, 0.01
      %v1873 = vmul.f32 %v1819, 0.01
      %v1874 = vmul.f32 %v1821, 0.01
      %v1875 = vmul.f32 %v1823, 0.01
      %v1876 = vmul.f32 %v1825, 0.01
      %v1877 = vmul.f32 %v1829, 0.01
      %v1878 = vmul.f32 %v1831, 0.01
      %v1879 = vmul.f32 %v1833, 0.01
      %v1880 = vmul.f32 %v1835, 0.01
      %v1881 = vmul.f32 %v1839, 0.01
      %v1882 = vmul.f32 %v1841, 0.01
      %v1883 = vmul.f32 %v1843, 0.01
      %v1884 = vmul.f32 %v1845, 0.01
      %v1885 = vmul.f32 %v1849, 0.01
      %v1886 = vmul.f32 %v1851, 0.01
      %v1887 = vmul.f32 %v1853, 0.01
      %v1888 = vmul.f32 %v1855, 0.01
      %v1889 = vmax.f32 %v1779, %v1857
      %v1890 = vmax.f32 %v1781, %v1858
      %v1891 = vmax.f32 %v1783, %v1859
      %v1892 = vmax.f32 %v1785, %v1860
      %v1893 = vmax.f32 %v1789, %v1861
      %v1894 = vmax.f32 %v1791, %v1862
      %v1895 = vmax.f32 %v1793, %v1863
      %v1896 = vmax.f32 %v1795, %v1864
      %v1897 = vmax.f32 %v1799, %v1865
      %v1898 = vmax.f32 %v1801, %v1866
      %v1899 = vmax.f32 %v1803, %v1867
      %v1900 = vmax.f32 %v1805, %v1868
      %v1901 = vmax.f32 %v1809, %v1869
      %v1902 = vmax.f32 %v1811, %v1870
      %v1903 = vmax.f32 %v1813, %v1871
      %v1904 = vmax.f32 %v1815, %v1872
      %v1905 = vmax.f32 %v1819, %v1873
      %v1906 = vmax.f32 %v1821, %v1874
      %v1907 = vmax.f32 %v1823, %v1875
      %v1908 = vmax.f32 %v1825, %v1876
      %v1909 = vmax.f32 %v1829, %v1877
      %v1910 = vmax.f32 %v1831, %v1878
      %v1911 = vmax.f32 %v1833, %v1879
      %v1912 = vmax.f32 %v1835, %v1880
      %v1913 = vmax.f32 %v1839, %v1881
      %v1914 = vmax.f32 %v1841, %v1882
      %v1915 = vmax.f32 %v1843, %v1883
      %v1916 = vmax.f32 %v1845, %v1884
      %v1917 = vmax.f32 %v1849, %v1885
      %v1918 = vmax.f32 %v1851, %v1886
      %v1919 = vmax.f32 %v1853, %v1887
      %v1920 = vmax.f32 %v1855, %v1888
      %v1921 = vpack.c.bf16 %v1891, %v1889
      %v1922 = vpack.c.bf16 %v1892, %v1890
      %v1923 = vpack.c.bf16 %v1895, %v1893
      %v1924 = vpack.c.bf16 %v1896, %v1894
      %v1925 = vpack.c.bf16 %v1899, %v1897
      %v1926 = vpack.c.bf16 %v1900, %v1898
      %v1927 = vpack.c.bf16 %v1903, %v1901
      %v1928 = vpack.c.bf16 %v1904, %v1902
      %v1929 = vpack.c.bf16 %v1907, %v1905
      %v1930 = vpack.c.bf16 %v1908, %v1906
      %v1931 = vpack.c.bf16 %v1911, %v1909
      %v1932 = vpack.c.bf16 %v1912, %v1910
      %v1933 = vpack.c.bf16 %v1915, %v1913
      %v1934 = vpack.c.bf16 %v1916, %v1914
      %v1935 = vpack.c.bf16 %v1919, %v1917
      %v1936 = vpack.c.bf16 %v1920, %v1918
      %v1937 = vld [vmem:[%s3] sm:$0xf]
      %v1938 = vld [vmem:[%s3 + $0x4] sm:$0xf]
      %v1939 = vld [vmem:[%s3 + $0x8] sm:$0xf]
      %v1940 = vld [vmem:[%s3 + $0xc] sm:$0xf]
      %v1941 = vld [vmem:[%s3 + $0x10] sm:$0xf]
      %v1942 = vld [vmem:[%s3 + $0x14] sm:$0xf]
      %v1943 = vld [vmem:[%s3 + $0x18] sm:$0xf]
      %v1944 = vld [vmem:[%s3 + $0x1c] sm:$0xf]
      %v1945 = vld [vmem:[%s3 + $0x20] sm:$0xf]
      %v1946 = vld [vmem:[%s3 + $0x24] sm:$0xf]
      %v1947 = vld [vmem:[%s3 + $0x28] sm:$0xf]
      %v1948 = vld [vmem:[%s3 + $0x2c] sm:$0xf]
      %v1949 = vld [vmem:[%s3 + $0x30] sm:$0xf]
      %v1950 = vld [vmem:[%s3 + $0x34] sm:$0xf]
      %v1951 = vld [vmem:[%s3 + $0x38] sm:$0xf]
      %v1952 = vld [vmem:[%s3 + $0x3c] sm:$0xf]
      %v1953 = vld [vmem:[%s3 + $0x40] sm:$0xf]
      %v1954 = vld [vmem:[%s3 + $0x44] sm:$0xf]
      %v1955 = vld [vmem:[%s3 + $0x48] sm:$0xf]
      %v1956 = vld [vmem:[%s3 + $0x4c] sm:$0xf]
      %v1957 = vld [vmem:[%s3 + $0x50] sm:$0xf]
      %v1958 = vld [vmem:[%s3 + $0x54] sm:$0xf]
      %v1959 = vld [vmem:[%s3 + $0x58] sm:$0xf]
      %v1960 = vld [vmem:[%s3 + $0x5c] sm:$0xf]
      %v1961 = vld [vmem:[%s3 + $0x60] sm:$0xf]
      %v1962 = vld [vmem:[%s3 + $0x64] sm:$0xf]
      %v1963 = vld [vmem:[%s3 + $0x68] sm:$0xf]
      %v1964 = vld [vmem:[%s3 + $0x6c] sm:$0xf]
      %v1965 = vld [vmem:[%s3 + $0x70] sm:$0xf]
      %v1966 = vld [vmem:[%s3 + $0x74] sm:$0xf]
      %v1967 = vld [vmem:[%s3 + $0x78] sm:$0xf]
      %v1968 = vld [vmem:[%s3 + $0x7c] sm:$0xf]
      %v1969 = vld [vmem:[%s4] sm:$0x1]
      %v1971 = vlaneseq
      %v1972 = vshrl.u32 %v1971, 7
      %v1973 = vsub.s32 0, %v1972
      %v1974 = vrot.slane %v1969, %v1973
      %v2008 = vunpack.c.l.b16 %v1937
      %v2009 = vunpack.c.l.b16 %v1938
      %v2010 = vunpack.c.l.b16 %v1939
      %v2011 = vunpack.c.l.b16 %v1940
      %v2012 = vunpack.c.l.b16 %v1941
      %v2013 = vunpack.c.l.b16 %v1942
      %v2014 = vunpack.c.l.b16 %v1943
      %v2015 = vunpack.c.l.b16 %v1944
      %v2016 = vunpack.c.l.b16 %v1945
      %v2017 = vunpack.c.l.b16 %v1946
      %v2018 = vunpack.c.l.b16 %v1947
      %v2019 = vunpack.c.l.b16 %v1948
      %v2020 = vunpack.c.l.b16 %v1949
      %v2021 = vunpack.c.l.b16 %v1950
      %v2022 = vunpack.c.l.b16 %v1951
      %v2023 = vunpack.c.l.b16 %v1952
      %v2024 = vunpack.c.l.b16 %v1953
      %v2025 = vunpack.c.l.b16 %v1954
      %v2026 = vunpack.c.l.b16 %v1955
      %v2027 = vunpack.c.l.b16 %v1956
      %v2028 = vunpack.c.l.b16 %v1957
      %v2029 = vunpack.c.l.b16 %v1958
      %v2030 = vunpack.c.l.b16 %v1959
      %v2031 = vunpack.c.l.b16 %v1960
      %v2032 = vunpack.c.l.b16 %v1961
      %v2033 = vunpack.c.l.b16 %v1962
      %v2034 = vunpack.c.l.b16 %v1963
      %v2035 = vunpack.c.l.b16 %v1964
      %v2036 = vunpack.c.l.b16 %v1965
      %v2037 = vunpack.c.l.b16 %v1966
      %v2038 = vunpack.c.l.b16 %v1967
      %v2039 = vunpack.c.l.b16 %v1968
      %v2040 = vpack.c.b16 %v2009, %v2008
      %v2041 = vpack.c.b16 %v2011, %v2010
      %v2042 = vpack.c.b16 %v2013, %v2012
      %v2043 = vpack.c.b16 %v2015, %v2014
      %v2044 = vpack.c.b16 %v2017, %v2016
      %v2045 = vpack.c.b16 %v2019, %v2018
      %v2046 = vpack.c.b16 %v2021, %v2020
      %v2047 = vpack.c.b16 %v2023, %v2022
      %v2048 = vpack.c.b16 %v2025, %v2024
      %v2049 = vpack.c.b16 %v2027, %v2026
      %v2050 = vpack.c.b16 %v2029, %v2028
      %v2051 = vpack.c.b16 %v2031, %v2030
      %v2052 = vpack.c.b16 %v2033, %v2032
      %v2053 = vpack.c.b16 %v2035, %v2034
      %v2054 = vpack.c.b16 %v2037, %v2036
      %v2055 = vpack.c.b16 %v2039, %v2038
      %2072 = vmatprep.subr.bf16.mxu0 0
      %2073 = vmatpush1.bf16.msra.mxu0 %v2047
      %2074 = vmatprep.subr.bf16.mxu0 0
      %2075 = vmatpush1.bf16.msra.mxu0 %v2046
      %2076 = vmatprep.subr.bf16.mxu0 0
      %2077 = vmatpush1.bf16.msra.mxu0 %v2045
      %2078 = vmatprep.subr.bf16.mxu0 0
      %2079 = vmatpush1.bf16.msra.mxu0 %v2044
      %2080 = vmatprep.subr.bf16.mxu0 0
      %2081 = vmatpush1.bf16.msra.mxu0 %v2043
      %2082 = vmatprep.subr.bf16.mxu0 0
      %2083 = vmatpush1.bf16.msra.mxu0 %v2042
      %2084 = vmatprep.subr.bf16.mxu0 0
      %2085 = vmatpush1.bf16.msra.mxu0 %v2041
      %2086 = vmatprep.subr.bf16.mxu0 0
      %2087 = vmatpush1.bf16.msra.mxu0 %v2040
      %2088 = vmatprep.subr.bf16.mxu0 0
      %2089 = vmatpush2.bf16.msra.mxu0 %v2055
      %2090 = vmatprep.subr.bf16.mxu0 0
      %2091 = vmatpush2.bf16.msra.mxu0 %v2054
      %2092 = vmatprep.subr.bf16.mxu0 0
      %2093 = vmatpush2.bf16.msra.mxu0 %v2053
      %2094 = vmatprep.subr.bf16.mxu0 0
      %2095 = vmatpush2.bf16.msra.mxu0 %v2052
      %2096 = vmatprep.subr.bf16.mxu0 0
      %2097 = vmatpush2.bf16.msra.mxu0 %v2051
      %2098 = vmatprep.subr.bf16.mxu0 0
      %2099 = vmatpush2.bf16.msra.mxu0 %v2050
      %2100 = vmatprep.subr.bf16.mxu0 0
      %2101 = vmatpush2.bf16.msra.mxu0 %v2049
      %2102 = vmatprep.subr.bf16.mxu0 0
      %2103 = vmatpush2.bf16.msra.mxu0 %v2048
      %2104 = vmatprep.mubr.bf16.mxu0 %v1922
      %2105 = vmatmul.mubr.bf16.gmra.mxu0 %v1921
      %v2106 = vpop.f32.mrf.mxu0
      %v2107 = vadd.f32 %v1974, %v2106
      %v2108 = vpop.f32.mrf.mxu0
      %v2109 = vpop.f32.mrf.mxu0
      %v2110 = vadd.f32 %v1974, %v2109
      %v2111 = vpop.f32.mrf.mxu0
      %2112 = vmatprep.mubr.bf16.mxu0 %v1924
      %2113 = vmatmul.mubr.bf16.gmra.mxu0 %v1923
      %v2114 = vpop.f32.mrf.mxu0
      %v2115 = vadd.f32 %v1974, %v2114
      %v2116 = vpop.f32.mrf.mxu0
      %v2117 = vpop.f32.mrf.mxu0
      %v2118 = vadd.f32 %v1974, %v2117
      %v2119 = vpop.f32.mrf.mxu0
      %2120 = vmatprep.mubr.bf16.mxu0 %v1926
      %2121 = vmatmul.mubr.bf16.gmra.mxu0 %v1925
      %v2122 = vpop.f32.mrf.mxu0
      %v2123 = vadd.f32 %v1974, %v2122
      %v2124 = vpop.f32.mrf.mxu0
      %v2125 = vpop.f32.mrf.mxu0
      %v2126 = vadd.f32 %v1974, %v2125
      %v2127 = vpop.f32.mrf.mxu0
      %2128 = vmatprep.mubr.bf16.mxu0 %v1928
      %2129 = vmatmul.mubr.bf16.gmra.mxu0 %v1927
      %v2130 = vpop.f32.mrf.mxu0
      %v2131 = vadd.f32 %v1974, %v2130
      %v2132 = vpop.f32.mrf.mxu0
      %v2133 = vpop.f32.mrf.mxu0
      %v2134 = vadd.f32 %v1974, %v2133
      %v2135 = vpop.f32.mrf.mxu0
      %2136 = vmatprep.mubr.bf16.mxu0 %v1930
      %2137 = vmatmul.mubr.bf16.gmra.mxu0 %v1929
      %v2138 = vpop.f32.mrf.mxu0
      %v2139 = vadd.f32 %v1974, %v2138
      %v2140 = vpop.f32.mrf.mxu0
      %v2141 = vpop.f32.mrf.mxu0
      %v2142 = vadd.f32 %v1974, %v2141
      %v2143 = vpop.f32.mrf.mxu0
      %2144 = vmatprep.mubr.bf16.mxu0 %v1932
      %2145 = vmatmul.mubr.bf16.gmra.mxu0 %v1931
      %v2146 = vpop.f32.mrf.mxu0
      %v2147 = vadd.f32 %v1974, %v2146
      %v2148 = vpop.f32.mrf.mxu0
      %v2149 = vpop.f32.mrf.mxu0
      %v2150 = vadd.f32 %v1974, %v2149
      %v2151 = vpop.f32.mrf.mxu0
      %2152 = vmatprep.mubr.bf16.mxu0 %v1934
      %2153 = vmatmul.mubr.bf16.gmra.mxu0 %v1933
      %v2154 = vpop.f32.mrf.mxu0
      %v2155 = vadd.f32 %v1974, %v2154
      %v2156 = vpop.f32.mrf.mxu0
      %v2157 = vpop.f32.mrf.mxu0
      %v2158 = vadd.f32 %v1974, %v2157
      %v2159 = vpop.f32.mrf.mxu0
      %2160 = vmatprep.mubr.bf16.mxu0 %v1936
      %2161 = vmatmul.mubr.bf16.gmra.mxu0 %v1935
      %v2162 = vpop.f32.mrf.mxu0
      %v2163 = vadd.f32 %v1974, %v2162
      %v2164 = vpop.f32.mrf.mxu0
      %v2165 = vpop.f32.mrf.mxu0
      %v2166 = vadd.f32 %v1974, %v2165
      %v2167 = vpop.f32.mrf.mxu0
      %2168 = vdwg.mxu0
      %v2169 = vmul.f32 %v2107, 0.01
      %v2170 = vmul.f32 %v2110, 0.01
      %v2171 = vmul.f32 %v2115, 0.01
      %v2172 = vmul.f32 %v2118, 0.01
      %v2173 = vmul.f32 %v2123, 0.01
      %v2174 = vmul.f32 %v2126, 0.01
      %v2175 = vmul.f32 %v2131, 0.01
      %v2176 = vmul.f32 %v2134, 0.01
      %v2177 = vmul.f32 %v2139, 0.01
      %v2178 = vmul.f32 %v2142, 0.01
      %v2179 = vmul.f32 %v2147, 0.01
      %v2180 = vmul.f32 %v2150, 0.01
      %v2181 = vmul.f32 %v2155, 0.01
      %v2182 = vmul.f32 %v2158, 0.01
      %v2183 = vmul.f32 %v2163, 0.01
      %v2184 = vmul.f32 %v2166, 0.01
      %v2185 = vmax.f32 %v2107, %v2169
      %v2186 = vmax.f32 %v2110, %v2170
      %v2187 = vmax.f32 %v2115, %v2171
      %v2188 = vmax.f32 %v2118, %v2172
      %v2189 = vmax.f32 %v2123, %v2173
      %v2190 = vmax.f32 %v2126, %v2174
      %v2191 = vmax.f32 %v2131, %v2175
      %v2192 = vmax.f32 %v2134, %v2176
      %v2193 = vmax.f32 %v2139, %v2177
      %v2194 = vmax.f32 %v2142, %v2178
      %v2195 = vmax.f32 %v2147, %v2179
      %v2196 = vmax.f32 %v2150, %v2180
      %v2197 = vmax.f32 %v2155, %v2181
      %v2198 = vmax.f32 %v2158, %v2182
      %v2199 = vmax.f32 %v2163, %v2183
      %v2200 = vmax.f32 %v2166, %v2184
      %v2201 = vpack.c.bf16 %v2186, %v2185
      %v2202 = vpack.c.bf16 %v2188, %v2187
      %v2203 = vpack.c.bf16 %v2190, %v2189
      %v2204 = vpack.c.bf16 %v2192, %v2191
      %v2205 = vpack.c.bf16 %v2194, %v2193
      %v2206 = vpack.c.bf16 %v2196, %v2195
      %v2207 = vpack.c.bf16 %v2198, %v2197
      %v2208 = vpack.c.bf16 %v2200, %v2199
      %v2209 = vld [vmem:[%s5] sm:$0xf]
      %v2210 = vld [vmem:[%s5 + $0x4] sm:$0xf]
      %v2211 = vld [vmem:[%s5 + $0x8] sm:$0xf]
      %v2212 = vld [vmem:[%s5 + $0xc] sm:$0xf]
      %v2213 = vld [vmem:[%s5 + $0x10] sm:$0xf]
      %v2214 = vld [vmem:[%s5 + $0x14] sm:$0xf]
      %v2215 = vld [vmem:[%s5 + $0x18] sm:$0xf]
      %v2216 = vld [vmem:[%s5 + $0x1c] sm:$0xf]
      %v2217 = vld [vmem:[%s5 + $0x20] sm:$0xf]
      %v2218 = vld [vmem:[%s5 + $0x24] sm:$0xf]
      %v2219 = vld [vmem:[%s5 + $0x28] sm:$0xf]
      %v2220 = vld [vmem:[%s5 + $0x2c] sm:$0xf]
      %v2221 = vld [vmem:[%s5 + $0x30] sm:$0xf]
      %v2222 = vld [vmem:[%s5 + $0x34] sm:$0xf]
      %v2223 = vld [vmem:[%s5 + $0x38] sm:$0xf]
      %v2224 = vld [vmem:[%s5 + $0x3c] sm:$0xf]
      %v2225 = vld [vmem:[%s6] sm:$0x1]
      %v2227 = vlaneseq
      %v2228 = vshrl.u32 %v2227, 7
      %v2229 = vsub.s32 0, %v2228
      %v2230 = vrot.slane %v2225, %v2229
      %v2248 = vunpack.c.l.b16 %v2209
      %v2249 = vunpack.c.l.b16 %v2210
      %v2250 = vunpack.c.l.b16 %v2211
      %v2251 = vunpack.c.l.b16 %v2212
      %v2252 = vunpack.c.l.b16 %v2213
      %v2253 = vunpack.c.l.b16 %v2214
      %v2254 = vunpack.c.l.b16 %v2215
      %v2255 = vunpack.c.l.b16 %v2216
      %v2256 = vunpack.c.l.b16 %v2217
      %v2257 = vunpack.c.l.b16 %v2218
      %v2258 = vunpack.c.l.b16 %v2219
      %v2259 = vunpack.c.l.b16 %v2220
      %v2260 = vunpack.c.l.b16 %v2221
      %v2261 = vunpack.c.l.b16 %v2222
      %v2262 = vunpack.c.l.b16 %v2223
      %v2263 = vunpack.c.l.b16 %v2224
      %v2264 = vpack.c.b16 %v2249, %v2248
      %v2265 = vpack.c.b16 %v2251, %v2250
      %v2266 = vpack.c.b16 %v2253, %v2252
      %v2267 = vpack.c.b16 %v2255, %v2254
      %v2268 = vpack.c.b16 %v2257, %v2256
      %v2269 = vpack.c.b16 %v2259, %v2258
      %v2270 = vpack.c.b16 %v2261, %v2260
      %v2271 = vpack.c.b16 %v2263, %v2262
      %2280 = vmatprep.subr.bf16.mxu0 0
      %2281 = vmatpush1.bf16.msra.mxu0 %v2271
      %2282 = vmatprep.subr.bf16.mxu0 0
      %2283 = vmatpush1.bf16.msra.mxu0 %v2270
      %2284 = vmatprep.subr.bf16.mxu0 0
      %2285 = vmatpush1.bf16.msra.mxu0 %v2269
      %2286 = vmatprep.subr.bf16.mxu0 0
      %2287 = vmatpush1.bf16.msra.mxu0 %v2268
      %2288 = vmatprep.subr.bf16.mxu0 0
      %2289 = vmatpush1.bf16.msra.mxu0 %v2267
      %2290 = vmatprep.subr.bf16.mxu0 0
      %2291 = vmatpush1.bf16.msra.mxu0 %v2266
      %2292 = vmatprep.subr.bf16.mxu0 0
      %2293 = vmatpush1.bf16.msra.mxu0 %v2265
      %2294 = vmatprep.subr.bf16.mxu0 0
      %2295 = vmatpush1.bf16.msra.mxu0 %v2264
      %2296 = vmatprep.subr.bf16.mxu0 0
      %2297 = vmatpush2.bf16.msra.mxu0 0
      %2298 = vmatprep.subr.bf16.mxu0 0
      %2299 = vmatpush2.bf16.msra.mxu0 0
      %2300 = vmatprep.subr.bf16.mxu0 0
      %2301 = vmatpush2.bf16.msra.mxu0 0
      %2302 = vmatprep.subr.bf16.mxu0 0
      %2303 = vmatpush2.bf16.msra.mxu0 0
      %2304 = vmatprep.subr.bf16.mxu0 0
      %2305 = vmatpush2.bf16.msra.mxu0 0
      %2306 = vmatprep.subr.bf16.mxu0 0
      %2307 = vmatpush2.bf16.msra.mxu0 0
      %2308 = vmatprep.subr.bf16.mxu0 0
      %2309 = vmatpush2.bf16.msra.mxu0 0
      %2310 = vmatprep.subr.bf16.mxu0 0
      %2311 = vmatpush2.bf16.msra.mxu0 0
      %2312 = vmatprep.mubr.bf16.mxu0 0
      %2313 = vmatmul.mubr.bf16.gmra.mxu0 %v2201
      %v2314 = vpop.f32.mrf.mxu0
      %v2315 = vadd.f32 %v2230, %v2314
      %v2316 = vpop.f32.mrf.mxu0
      %v2317 = vpop.f32.mrf.mxu0
      %v2318 = vadd.f32 %v2230, %v2317
      %v2319 = vpop.f32.mrf.mxu0
      %2320 = vmatprep.mubr.bf16.mxu0 0
      %2321 = vmatmul.mubr.bf16.gmra.mxu0 %v2202
      %v2322 = vpop.f32.mrf.mxu0
      %v2323 = vadd.f32 %v2230, %v2322
      %v2324 = vpop.f32.mrf.mxu0
      %v2325 = vpop.f32.mrf.mxu0
      %v2326 = vadd.f32 %v2230, %v2325
      %v2327 = vpop.f32.mrf.mxu0
      %2328 = vmatprep.mubr.bf16.mxu0 0
      %2329 = vmatmul.mubr.bf16.gmra.mxu0 %v2203
      %v2330 = vpop.f32.mrf.mxu0
      %v2331 = vadd.f32 %v2230, %v2330
      %v2332 = vpop.f32.mrf.mxu0
      %v2333 = vpop.f32.mrf.mxu0
      %v2334 = vadd.f32 %v2230, %v2333
      %v2335 = vpop.f32.mrf.mxu0
      %2336 = vmatprep.mubr.bf16.mxu0 0
      %2337 = vmatmul.mubr.bf16.gmra.mxu0 %v2204
      %v2338 = vpop.f32.mrf.mxu0
      %v2339 = vadd.f32 %v2230, %v2338
      %v2340 = vpop.f32.mrf.mxu0
      %v2341 = vpop.f32.mrf.mxu0
      %v2342 = vadd.f32 %v2230, %v2341
      %v2343 = vpop.f32.mrf.mxu0
      %2344 = vmatprep.mubr.bf16.mxu0 0
      %2345 = vmatmul.mubr.bf16.gmra.mxu0 %v2205
      %v2346 = vpop.f32.mrf.mxu0
      %v2347 = vadd.f32 %v2230, %v2346
      %v2348 = vpop.f32.mrf.mxu0
      %v2349 = vpop.f32.mrf.mxu0
      %v2350 = vadd.f32 %v2230, %v2349
      %v2351 = vpop.f32.mrf.mxu0
      %2352 = vmatprep.mubr.bf16.mxu0 0
      %2353 = vmatmul.mubr.bf16.gmra.mxu0 %v2206
      %v2354 = vpop.f32.mrf.mxu0
      %v2355 = vadd.f32 %v2230, %v2354
      %v2356 = vpop.f32.mrf.mxu0
      %v2357 = vpop.f32.mrf.mxu0
      %v2358 = vadd.f32 %v2230, %v2357
      %v2359 = vpop.f32.mrf.mxu0
      %2360 = vmatprep.mubr.bf16.mxu0 0
      %2361 = vmatmul.mubr.bf16.gmra.mxu0 %v2207
      %v2362 = vpop.f32.mrf.mxu0
      %v2363 = vadd.f32 %v2230, %v2362
      %v2364 = vpop.f32.mrf.mxu0
      %v2365 = vpop.f32.mrf.mxu0
      %v2366 = vadd.f32 %v2230, %v2365
      %v2367 = vpop.f32.mrf.mxu0
      %2368 = vmatprep.mubr.bf16.mxu0 0
      %2369 = vmatmul.mubr.bf16.gmra.mxu0 %v2208
      %v2370 = vpop.f32.mrf.mxu0
      %v2371 = vadd.f32 %v2230, %v2370
      %v2372 = vpop.f32.mrf.mxu0
      %v2373 = vpop.f32.mrf.mxu0
      %v2374 = vadd.f32 %v2230, %v2373
      %v2375 = vpop.f32.mrf.mxu0
      %2376 = vdwg.mxu0
      %v2377 = vmul.f32 %v2315, 0.01
      %v2378 = vmul.f32 %v2318, 0.01
      %v2379 = vmul.f32 %v2323, 0.01
      %v2380 = vmul.f32 %v2326, 0.01
      %v2381 = vmul.f32 %v2331, 0.01
      %v2382 = vmul.f32 %v2334, 0.01
      %v2383 = vmul.f32 %v2339, 0.01
      %v2384 = vmul.f32 %v2342, 0.01
      %v2385 = vmul.f32 %v2347, 0.01
      %v2386 = vmul.f32 %v2350, 0.01
      %v2387 = vmul.f32 %v2355, 0.01
      %v2388 = vmul.f32 %v2358, 0.01
      %v2389 = vmul.f32 %v2363, 0.01
      %v2390 = vmul.f32 %v2366, 0.01
      %v2391 = vmul.f32 %v2371, 0.01
      %v2392 = vmul.f32 %v2374, 0.01
      %v2393 = vmax.f32 %v2315, %v2377
      %v2394 = vmax.f32 %v2318, %v2378
      %v2395 = vmax.f32 %v2323, %v2379
      %v2396 = vmax.f32 %v2326, %v2380
      %v2397 = vmax.f32 %v2331, %v2381
      %v2398 = vmax.f32 %v2334, %v2382
      %v2399 = vmax.f32 %v2339, %v2383
      %v2400 = vmax.f32 %v2342, %v2384
      %v2401 = vmax.f32 %v2347, %v2385
      %v2402 = vmax.f32 %v2350, %v2386
      %v2403 = vmax.f32 %v2355, %v2387
      %v2404 = vmax.f32 %v2358, %v2388
      %v2405 = vmax.f32 %v2363, %v2389
      %v2406 = vmax.f32 %v2366, %v2390
      %v2407 = vmax.f32 %v2371, %v2391
      %v2408 = vmax.f32 %v2374, %v2392
      %v2409 = vpack.c.bf16 %v2394, %v2393
      %v2410 = vpack.c.bf16 %v2396, %v2395
      %v2411 = vpack.c.bf16 %v2398, %v2397
      %v2412 = vpack.c.bf16 %v2400, %v2399
      %v2413 = vpack.c.bf16 %v2402, %v2401
      %v2414 = vpack.c.bf16 %v2404, %v2403
      %v2415 = vpack.c.bf16 %v2406, %v2405
      %v2416 = vpack.c.bf16 %v2408, %v2407
      %v2417 = vld [vmem:[%s7] sm:$0xf]
      %v2418 = vld [vmem:[%s7 + $0x4] sm:$0xf]
      %v2419 = vld [vmem:[%s7 + $0x8] sm:$0xf]
      %v2420 = vld [vmem:[%s7 + $0xc] sm:$0xf]
      %v2421 = vld [vmem:[%s7 + $0x10] sm:$0xf]
      %v2422 = vld [vmem:[%s7 + $0x14] sm:$0xf]
      %v2423 = vld [vmem:[%s7 + $0x18] sm:$0xf]
      %v2424 = vld [vmem:[%s7 + $0x1c] sm:$0xf]
      %v2425 = vld [vmem:[%s8] sm:$0x1]
      %v2427 = vlaneseq
      %v2428 = vshrl.u32 %v2427, 7
      %v2429 = vsub.s32 0, %v2428
      %v2430 = vrot.slane %v2425, %v2429
      %v2440 = vunpack.c.l.b16 %v2417
      %v2441 = vunpack.c.l.b16 %v2418
      %v2442 = vunpack.c.l.b16 %v2419
      %v2443 = vunpack.c.l.b16 %v2420
      %v2444 = vunpack.c.l.b16 %v2421
      %v2445 = vunpack.c.l.b16 %v2422
      %v2446 = vunpack.c.l.b16 %v2423
      %v2447 = vunpack.c.l.b16 %v2424
      %v2448 = vpack.c.b16 %v2441, %v2440
      %v2449 = vpack.c.b16 %v2443, %v2442
      %v2450 = vpack.c.b16 %v2445, %v2444
      %v2451 = vpack.c.b16 %v2447, %v2446
      %vm2456 = vcmask 523264
      %v2458 = vsel %vm2456, %v2409, 0
      %v2461 = vsel %vm2456, %v2410, 0
      %v2464 = vsel %vm2456, %v2411, 0
      %v2467 = vsel %vm2456, %v2412, 0
      %v2470 = vsel %vm2456, %v2413, 0
      %v2473 = vsel %vm2456, %v2414, 0
      %v2476 = vsel %vm2456, %v2415, 0
      %v2479 = vsel %vm2456, %v2416, 0
      %2481 = vmatprep.subr.bf16.mxu0 0
      %2482 = vmatpush1.bf16.msra.mxu0 0
      %2483 = vmatprep.subr.bf16.mxu0 0
      %2484 = vmatpush1.bf16.msra.mxu0 0
      %2485 = vmatprep.subr.bf16.mxu0 0
      %2486 = vmatpush1.bf16.msra.mxu0 0
      %2487 = vmatprep.subr.bf16.mxu0 0
      %2488 = vmatpush1.bf16.msra.mxu0 0
      %2489 = vmatprep.subr.bf16.mxu0 0
      %2490 = vmatpush1.bf16.msra.mxu0 %v2451
      %2491 = vmatprep.subr.bf16.mxu0 0
      %2492 = vmatpush1.bf16.msra.mxu0 %v2450
      %2493 = vmatprep.subr.bf16.mxu0 0
      %2494 = vmatpush1.bf16.msra.mxu0 %v2449
      %2495 = vmatprep.subr.bf16.mxu0 0
      %2496 = vmatpush1.bf16.msra.mxu0 %v2448
      %2497 = vmatprep.subr.bf16.mxu0 0
      %2498 = vmatpush2.bf16.msra.mxu0 0
      %2499 = vmatprep.subr.bf16.mxu0 0
      %2500 = vmatpush2.bf16.msra.mxu0 0
      %2501 = vmatprep.subr.bf16.mxu0 0
      %2502 = vmatpush2.bf16.msra.mxu0 0
      %2503 = vmatprep.subr.bf16.mxu0 0
      %2504 = vmatpush2.bf16.msra.mxu0 0
      %2505 = vmatprep.subr.bf16.mxu0 0
      %2506 = vmatpush2.bf16.msra.mxu0 0
      %2507 = vmatprep.subr.bf16.mxu0 0
      %2508 = vmatpush2.bf16.msra.mxu0 0
      %2509 = vmatprep.subr.bf16.mxu0 0
      %2510 = vmatpush2.bf16.msra.mxu0 0
      %2511 = vmatprep.subr.bf16.mxu0 0
      %2512 = vmatpush2.bf16.msra.mxu0 0
      %2513 = vmatprep.mubr.bf16.mxu0 0
      %2514 = vmatmul.mubr.bf16.gmra.mxu0 %v2458
      %v2515 = vpop.f32.mrf.mxu0
      %v2516 = vadd.f32 %v2430, %v2515
      %v2517 = vpop.f32.mrf.mxu0
      %v2518 = vpop.f32.mrf.mxu0
      %v2519 = vadd.f32 %v2430, %v2518
      %v2520 = vpop.f32.mrf.mxu0
      %2521 = vmatprep.mubr.bf16.mxu0 0
      %2522 = vmatmul.mubr.bf16.gmra.mxu0 %v2461
      %v2523 = vpop.f32.mrf.mxu0
      %v2524 = vadd.f32 %v2430, %v2523
      %v2525 = vpop.f32.mrf.mxu0
      %v2526 = vpop.f32.mrf.mxu0
      %v2527 = vadd.f32 %v2430, %v2526
      %v2528 = vpop.f32.mrf.mxu0
      %2529 = vmatprep.mubr.bf16.mxu0 0
      %2530 = vmatmul.mubr.bf16.gmra.mxu0 %v2464
      %v2531 = vpop.f32.mrf.mxu0
      %v2532 = vadd.f32 %v2430, %v2531
      %v2533 = vpop.f32.mrf.mxu0
      %v2534 = vpop.f32.mrf.mxu0
      %v2535 = vadd.f32 %v2430, %v2534
      %v2536 = vpop.f32.mrf.mxu0
      %2537 = vmatprep.mubr.bf16.mxu0 0
      %2538 = vmatmul.mubr.bf16.gmra.mxu0 %v2467
      %v2539 = vpop.f32.mrf.mxu0
      %v2540 = vadd.f32 %v2430, %v2539
      %v2541 = vpop.f32.mrf.mxu0
      %v2542 = vpop.f32.mrf.mxu0
      %v2543 = vadd.f32 %v2430, %v2542
      %v2544 = vpop.f32.mrf.mxu0
      %2545 = vmatprep.mubr.bf16.mxu0 0
      %2546 = vmatmul.mubr.bf16.gmra.mxu0 %v2470
      %v2547 = vpop.f32.mrf.mxu0
      %v2548 = vadd.f32 %v2430, %v2547
      %v2549 = vpop.f32.mrf.mxu0
      %v2550 = vpop.f32.mrf.mxu0
      %v2551 = vadd.f32 %v2430, %v2550
      %v2552 = vpop.f32.mrf.mxu0
      %2553 = vmatprep.mubr.bf16.mxu0 0
      %2554 = vmatmul.mubr.bf16.gmra.mxu0 %v2473
      %v2555 = vpop.f32.mrf.mxu0
      %v2556 = vadd.f32 %v2430, %v2555
      %v2557 = vpop.f32.mrf.mxu0
      %v2558 = vpop.f32.mrf.mxu0
      %v2559 = vadd.f32 %v2430, %v2558
      %v2560 = vpop.f32.mrf.mxu0
      %2561 = vmatprep.mubr.bf16.mxu0 0
      %2562 = vmatmul.mubr.bf16.gmra.mxu0 %v2476
      %v2563 = vpop.f32.mrf.mxu0
      %v2564 = vadd.f32 %v2430, %v2563
      %v2565 = vpop.f32.mrf.mxu0
      %v2566 = vpop.f32.mrf.mxu0
      %v2567 = vadd.f32 %v2430, %v2566
      %v2568 = vpop.f32.mrf.mxu0
      %2569 = vmatprep.mubr.bf16.mxu0 0
      %2570 = vmatmul.mubr.bf16.gmra.mxu0 %v2479
      %v2571 = vpop.f32.mrf.mxu0
      %v2572 = vadd.f32 %v2430, %v2571
      %v2573 = vpop.f32.mrf.mxu0
      %v2574 = vpop.f32.mrf.mxu0
      %v2575 = vadd.f32 %v2430, %v2574
      %v2576 = vpop.f32.mrf.mxu0
      %2577 = vdwg.mxu0
      %v2578 = vmul.f32 %v2516, 0.01
      %v2579 = vmul.f32 %v2519, 0.01
      %v2580 = vmul.f32 %v2524, 0.01
      %v2581 = vmul.f32 %v2527, 0.01
      %v2582 = vmul.f32 %v2532, 0.01
      %v2583 = vmul.f32 %v2535, 0.01
      %v2584 = vmul.f32 %v2540, 0.01
      %v2585 = vmul.f32 %v2543, 0.01
      %v2586 = vmul.f32 %v2548, 0.01
      %v2587 = vmul.f32 %v2551, 0.01
      %v2588 = vmul.f32 %v2556, 0.01
      %v2589 = vmul.f32 %v2559, 0.01
      %v2590 = vmul.f32 %v2564, 0.01
      %v2591 = vmul.f32 %v2567, 0.01
      %v2592 = vmul.f32 %v2572, 0.01
      %v2593 = vmul.f32 %v2575, 0.01
      %v2594 = vmax.f32 %v2516, %v2578
      %v2595 = vmax.f32 %v2519, %v2579
      %v2596 = vmax.f32 %v2524, %v2580
      %v2597 = vmax.f32 %v2527, %v2581
      %v2598 = vmax.f32 %v2532, %v2582
      %v2599 = vmax.f32 %v2535, %v2583
      %v2600 = vmax.f32 %v2540, %v2584
      %v2601 = vmax.f32 %v2543, %v2585
      %v2602 = vmax.f32 %v2548, %v2586
      %v2603 = vmax.f32 %v2551, %v2587
      %v2604 = vmax.f32 %v2556, %v2588
      %v2605 = vmax.f32 %v2559, %v2589
      %v2606 = vmax.f32 %v2564, %v2590
      %v2607 = vmax.f32 %v2567, %v2591
      %v2608 = vmax.f32 %v2572, %v2592
      %v2609 = vmax.f32 %v2575, %v2593
      %v2610 = vpack.c.bf16 %v2595, %v2594
      %v2611 = vpack.c.bf16 %v2597, %v2596
      %v2612 = vpack.c.bf16 %v2599, %v2598
      %v2613 = vpack.c.bf16 %v2601, %v2600
      %v2614 = vpack.c.bf16 %v2603, %v2602
      %v2615 = vpack.c.bf16 %v2605, %v2604
      %v2616 = vpack.c.bf16 %v2607, %v2606
      %v2617 = vpack.c.bf16 %v2609, %v2608
      %v2618 = vld [vmem:[%s9] sm:$0xf]
      %v2619 = vld [vmem:[%s9 + $0x4] sm:$0x3]
      %v2620 = vld [vmem:[%s10] sm:$0x1]
      %v2622 = vlaneseq
      %v2623 = vshrl.u32 %v2622, 7
      %v2624 = vsub.s32 0, %v2623
      %v2625 = vrot.slane %v2620, %v2624
      %v2629 = vunpack.c.l.b16 %v2618
      %v2630 = vunpack.c.l.b16 %v2619
      %v2631 = vpack.c.b16 %v2630, %v2629
      %vm2632 = vcmask 97280
      %v2634 = vsel %vm2632, %v2610, 0
      %v2637 = vsel %vm2632, %v2611, 0
      %v2640 = vsel %vm2632, %v2612, 0
      %v2643 = vsel %vm2632, %v2613, 0
      %v2646 = vsel %vm2632, %v2614, 0
      %v2649 = vsel %vm2632, %v2615, 0
      %v2652 = vsel %vm2632, %v2616, 0
      %v2655 = vsel %vm2632, %v2617, 0
      %vm2657 = vcmask 1045504
      %v2659 = vsel %vm2657, %v2631, 0
      %2661 = vmatprep.subr.bf16.mxu0 0
      %2662 = vmatpush1.bf16.msra.mxu0 0
      %2663 = vmatprep.subr.bf16.mxu0 0
      %2664 = vmatpush1.bf16.msra.mxu0 0
      %2665 = vmatprep.subr.bf16.mxu0 0
      %2666 = vmatpush1.bf16.msra.mxu0 0
      %2667 = vmatprep.subr.bf16.mxu0 0
      %2668 = vmatpush1.bf16.msra.mxu0 0
      %2669 = vmatprep.subr.bf16.mxu0 0
      %2670 = vmatpush1.bf16.msra.mxu0 0
      %2671 = vmatprep.subr.bf16.mxu0 0
      %2672 = vmatpush1.bf16.msra.mxu0 0
      %2673 = vmatprep.subr.bf16.mxu0 0
      %2674 = vmatpush1.bf16.msra.mxu0 0
      %2675 = vmatprep.subr.bf16.mxu0 0
      %2676 = vmatpush1.bf16.msra.mxu0 %v2659
      %2677 = vmatprep.subr.bf16.mxu0 0
      %2678 = vmatpush2.bf16.msra.mxu0 0
      %2679 = vmatprep.subr.bf16.mxu0 0
      %2680 = vmatpush2.bf16.msra.mxu0 0
      %2681 = vmatprep.subr.bf16.mxu0 0
      %2682 = vmatpush2.bf16.msra.mxu0 0
      %2683 = vmatprep.subr.bf16.mxu0 0
      %2684 = vmatpush2.bf16.msra.mxu0 0
      %2685 = vmatprep.subr.bf16.mxu0 0
      %2686 = vmatpush2.bf16.msra.mxu0 0
      %2687 = vmatprep.subr.bf16.mxu0 0
      %2688 = vmatpush2.bf16.msra.mxu0 0
      %2689 = vmatprep.subr.bf16.mxu0 0
      %2690 = vmatpush2.bf16.msra.mxu0 0
      %2691 = vmatprep.subr.bf16.mxu0 0
      %2692 = vmatpush2.bf16.msra.mxu0 0
      %2693 = vmatprep.mubr.bf16.mxu0 0
      %2694 = vmatmul.mubr.bf16.gmra.mxu0 %v2634
      %v2695 = vpop.f32.mrf.mxu0
      %v2696 = vadd.f32 %v2625, %v2695
      %v2697 = vpop.f32.mrf.mxu0
      %v2698 = vpop.f32.mrf.mxu0
      %v2699 = vadd.f32 %v2625, %v2698
      %v2700 = vpop.f32.mrf.mxu0
      %2701 = vmatprep.mubr.bf16.mxu0 0
      %2702 = vmatmul.mubr.bf16.gmra.mxu0 %v2637
      %v2703 = vpop.f32.mrf.mxu0
      %v2704 = vadd.f32 %v2625, %v2703
      %v2705 = vpop.f32.mrf.mxu0
      %v2706 = vpop.f32.mrf.mxu0
      %v2707 = vadd.f32 %v2625, %v2706
      %v2708 = vpop.f32.mrf.mxu0
      %2709 = vmatprep.mubr.bf16.mxu0 0
      %2710 = vmatmul.mubr.bf16.gmra.mxu0 %v2640
      %v2711 = vpop.f32.mrf.mxu0
      %v2712 = vadd.f32 %v2625, %v2711
      %v2713 = vpop.f32.mrf.mxu0
      %v2714 = vpop.f32.mrf.mxu0
      %v2715 = vadd.f32 %v2625, %v2714
      %v2716 = vpop.f32.mrf.mxu0
      %2717 = vmatprep.mubr.bf16.mxu0 0
      %2718 = vmatmul.mubr.bf16.gmra.mxu0 %v2643
      %v2719 = vpop.f32.mrf.mxu0
      %v2720 = vadd.f32 %v2625, %v2719
      %v2721 = vpop.f32.mrf.mxu0
      %v2722 = vpop.f32.mrf.mxu0
      %v2723 = vadd.f32 %v2625, %v2722
      %v2724 = vpop.f32.mrf.mxu0
      %2725 = vmatprep.mubr.bf16.mxu0 0
      %2726 = vmatmul.mubr.bf16.gmra.mxu0 %v2646
      %v2727 = vpop.f32.mrf.mxu0
      %v2728 = vadd.f32 %v2625, %v2727
      %v2729 = vpop.f32.mrf.mxu0
      %v2730 = vpop.f32.mrf.mxu0
      %v2731 = vadd.f32 %v2625, %v2730
      %v2732 = vpop.f32.mrf.mxu0
      %2733 = vmatprep.mubr.bf16.mxu0 0
      %2734 = vmatmul.mubr.bf16.gmra.mxu0 %v2649
      %v2735 = vpop.f32.mrf.mxu0
      %v2736 = vadd.f32 %v2625, %v2735
      %v2737 = vpop.f32.mrf.mxu0
      %v2738 = vpop.f32.mrf.mxu0
      %v2739 = vadd.f32 %v2625, %v2738
      %v2740 = vpop.f32.mrf.mxu0
      %2741 = vmatprep.mubr.bf16.mxu0 0
      %2742 = vmatmul.mubr.bf16.gmra.mxu0 %v2652
      %v2743 = vpop.f32.mrf.mxu0
      %v2744 = vadd.f32 %v2625, %v2743
      %v2745 = vpop.f32.mrf.mxu0
      %v2746 = vpop.f32.mrf.mxu0
      %v2747 = vadd.f32 %v2625, %v2746
      %v2748 = vpop.f32.mrf.mxu0
      %2749 = vmatprep.mubr.bf16.mxu0 0
      %2750 = vmatmul.mubr.bf16.gmra.mxu0 %v2655
      %v2751 = vpop.f32.mrf.mxu0
      %v2752 = vadd.f32 %v2625, %v2751
      %v2753 = vpop.f32.mrf.mxu0
      %v2754 = vpop.f32.mrf.mxu0
      %v2755 = vadd.f32 %v2625, %v2754
      %v2756 = vpop.f32.mrf.mxu0
      %2757 = vdwg.mxu0
      %v2758 = vmul.f32 %v2696, 0.01
      %v2759 = vmul.f32 %v2699, 0.01
      %v2760 = vmul.f32 %v2704, 0.01
      %v2761 = vmul.f32 %v2707, 0.01
      %v2762 = vmul.f32 %v2712, 0.01
      %v2763 = vmul.f32 %v2715, 0.01
      %v2764 = vmul.f32 %v2720, 0.01
      %v2765 = vmul.f32 %v2723, 0.01
      %v2766 = vmul.f32 %v2728, 0.01
      %v2767 = vmul.f32 %v2731, 0.01
      %v2768 = vmul.f32 %v2736, 0.01
      %v2769 = vmul.f32 %v2739, 0.01
      %v2770 = vmul.f32 %v2744, 0.01
      %v2771 = vmul.f32 %v2747, 0.01
      %v2772 = vmul.f32 %v2752, 0.01
      %v2773 = vmul.f32 %v2755, 0.01
      %v2774 = vmax.f32 %v2696, %v2758
      %v2775 = vmax.f32 %v2699, %v2759
      %v2776 = vmax.f32 %v2704, %v2760
      %v2777 = vmax.f32 %v2707, %v2761
      %v2778 = vmax.f32 %v2712, %v2762
      %v2779 = vmax.f32 %v2715, %v2763
      %v2780 = vmax.f32 %v2720, %v2764
      %v2781 = vmax.f32 %v2723, %v2765
      %v2782 = vmax.f32 %v2728, %v2766
      %v2783 = vmax.f32 %v2731, %v2767
      %v2784 = vmax.f32 %v2736, %v2768
      %v2785 = vmax.f32 %v2739, %v2769
      %v2786 = vmax.f32 %v2744, %v2770
      %v2787 = vmax.f32 %v2747, %v2771
      %v2788 = vmax.f32 %v2752, %v2772
      %v2789 = vmax.f32 %v2755, %v2773
      %v2790 = vpack.c.bf16 %v2775, %v2774
      %v2791 = vpack.c.bf16 %v2777, %v2776
      %v2792 = vpack.c.bf16 %v2779, %v2778
      %v2793 = vpack.c.bf16 %v2781, %v2780
      %v2794 = vpack.c.bf16 %v2783, %v2782
      %v2795 = vpack.c.bf16 %v2785, %v2784
      %v2796 = vpack.c.bf16 %v2787, %v2786
      %v2797 = vpack.c.bf16 %v2789, %v2788
      %v2798 = vld [vmem:[%s11] sm:$0xf]
      %v2799 = vld [vmem:[%s11 + $0x4] sm:$0x3]
      %v2800 = vld [vmem:[%s12] sm:$0x1]
      %v2802 = vlaneseq
      %v2803 = vshrl.u32 %v2802, 7
      %v2804 = vsub.s32 0, %v2803
      %v2805 = vrot.slane %v2800, %v2804
      %v2809 = vunpack.c.l.b16 %v2798
      %v2810 = vunpack.c.l.b16 %v2799
      %v2811 = vpack.c.b16 %v2810, %v2809
      %v2813 = vsel %vm2632, %v2790, 0
      %v2816 = vsel %vm2632, %v2791, 0
      %v2819 = vsel %vm2632, %v2792, 0
      %v2822 = vsel %vm2632, %v2793, 0
      %v2825 = vsel %vm2632, %v2794, 0
      %v2828 = vsel %vm2632, %v2795, 0
      %v2831 = vsel %vm2632, %v2796, 0
      %v2834 = vsel %vm2632, %v2797, 0
      %v2837 = vsel %vm2657, %v2811, 0
      %2839 = vmatprep.subr.bf16.mxu0 0
      %2840 = vmatpush1.bf16.msra.mxu0 0
      %2841 = vmatprep.subr.bf16.mxu0 0
      %2842 = vmatpush1.bf16.msra.mxu0 0
      %2843 = vmatprep.subr.bf16.mxu0 0
      %2844 = vmatpush1.bf16.msra.mxu0 0
      %2845 = vmatprep.subr.bf16.mxu0 0
      %2846 = vmatpush1.bf16.msra.mxu0 0
      %2847 = vmatprep.subr.bf16.mxu0 0
      %2848 = vmatpush1.bf16.msra.mxu0 0
      %2849 = vmatprep.subr.bf16.mxu0 0
      %2850 = vmatpush1.bf16.msra.mxu0 0
      %2851 = vmatprep.subr.bf16.mxu0 0
      %2852 = vmatpush1.bf16.msra.mxu0 0
      %2853 = vmatprep.subr.bf16.mxu0 0
      %2854 = vmatpush1.bf16.msra.mxu0 %v2837
      %2855 = vmatprep.subr.bf16.mxu0 0
      %2856 = vmatpush2.bf16.msra.mxu0 0
      %2857 = vmatprep.subr.bf16.mxu0 0
      %2858 = vmatpush2.bf16.msra.mxu0 0
      %2859 = vmatprep.subr.bf16.mxu0 0
      %2860 = vmatpush2.bf16.msra.mxu0 0
      %2861 = vmatprep.subr.bf16.mxu0 0
      %2862 = vmatpush2.bf16.msra.mxu0 0
      %2863 = vmatprep.subr.bf16.mxu0 0
      %2864 = vmatpush2.bf16.msra.mxu0 0
      %2865 = vmatprep.subr.bf16.mxu0 0
      %2866 = vmatpush2.bf16.msra.mxu0 0
      %2867 = vmatprep.subr.bf16.mxu0 0
      %2868 = vmatpush2.bf16.msra.mxu0 0
      %2869 = vmatprep.subr.bf16.mxu0 0
      %2870 = vmatpush2.bf16.msra.mxu0 0
      %2871 = vmatprep.mubr.bf16.mxu0 0
      %2872 = vmatmul.mubr.bf16.gmra.mxu0 %v2813
      %v2873 = vpop.f32.mrf.mxu0
      %v2874 = vadd.f32 %v2805, %v2873
      %v2875 = vpop.f32.mrf.mxu0
      %v2876 = vpop.f32.mrf.mxu0
      %v2877 = vadd.f32 %v2805, %v2876
      %v2878 = vpop.f32.mrf.mxu0
      %2879 = vmatprep.mubr.bf16.mxu0 0
      %2880 = vmatmul.mubr.bf16.gmra.mxu0 %v2816
      %v2881 = vpop.f32.mrf.mxu0
      %v2882 = vadd.f32 %v2805, %v2881
      %v2883 = vpop.f32.mrf.mxu0
      %v2884 = vpop.f32.mrf.mxu0
      %v2885 = vadd.f32 %v2805, %v2884
      %v2886 = vpop.f32.mrf.mxu0
      %2887 = vmatprep.mubr.bf16.mxu0 0
      %2888 = vmatmul.mubr.bf16.gmra.mxu0 %v2819
      %v2889 = vpop.f32.mrf.mxu0
      %v2890 = vadd.f32 %v2805, %v2889
      %v2891 = vpop.f32.mrf.mxu0
      %v2892 = vpop.f32.mrf.mxu0
      %v2893 = vadd.f32 %v2805, %v2892
      %v2894 = vpop.f32.mrf.mxu0
      %2895 = vmatprep.mubr.bf16.mxu0 0
      %2896 = vmatmul.mubr.bf16.gmra.mxu0 %v2822
      %v2897 = vpop.f32.mrf.mxu0
      %v2898 = vadd.f32 %v2805, %v2897
      %v2899 = vpop.f32.mrf.mxu0
      %v2900 = vpop.f32.mrf.mxu0
      %v2901 = vadd.f32 %v2805, %v2900
      %v2902 = vpop.f32.mrf.mxu0
      %2903 = vmatprep.mubr.bf16.mxu0 0
      %2904 = vmatmul.mubr.bf16.gmra.mxu0 %v2825
      %v2905 = vpop.f32.mrf.mxu0
      %v2906 = vadd.f32 %v2805, %v2905
      %v2907 = vpop.f32.mrf.mxu0
      %v2908 = vpop.f32.mrf.mxu0
      %v2909 = vadd.f32 %v2805, %v2908
      %v2910 = vpop.f32.mrf.mxu0
      %2911 = vmatprep.mubr.bf16.mxu0 0
      %2912 = vmatmul.mubr.bf16.gmra.mxu0 %v2828
      %v2913 = vpop.f32.mrf.mxu0
      %v2914 = vadd.f32 %v2805, %v2913
      %v2915 = vpop.f32.mrf.mxu0
      %v2916 = vpop.f32.mrf.mxu0
      %v2917 = vadd.f32 %v2805, %v2916
      %v2918 = vpop.f32.mrf.mxu0
      %2919 = vmatprep.mubr.bf16.mxu0 0
      %2920 = vmatmul.mubr.bf16.gmra.mxu0 %v2831
      %v2921 = vpop.f32.mrf.mxu0
      %v2922 = vadd.f32 %v2805, %v2921
      %v2923 = vpop.f32.mrf.mxu0
      %v2924 = vpop.f32.mrf.mxu0
      %v2925 = vadd.f32 %v2805, %v2924
      %v2926 = vpop.f32.mrf.mxu0
      %2927 = vmatprep.mubr.bf16.mxu0 0
      %2928 = vmatmul.mubr.bf16.gmra.mxu0 %v2834
      %v2929 = vpop.f32.mrf.mxu0
      %v2930 = vadd.f32 %v2805, %v2929
      %v2931 = vpop.f32.mrf.mxu0
      %v2932 = vpop.f32.mrf.mxu0
      %v2933 = vadd.f32 %v2805, %v2932
      %v2934 = vpop.f32.mrf.mxu0
      %2935 = vdwg.mxu0
      %v2936 = vmul.f32 %v2874, 0.01
      %v2937 = vmul.f32 %v2877, 0.01
      %v2938 = vmul.f32 %v2882, 0.01
      %v2939 = vmul.f32 %v2885, 0.01
      %v2940 = vmul.f32 %v2890, 0.01
      %v2941 = vmul.f32 %v2893, 0.01
      %v2942 = vmul.f32 %v2898, 0.01
      %v2943 = vmul.f32 %v2901, 0.01
      %v2944 = vmul.f32 %v2906, 0.01
      %v2945 = vmul.f32 %v2909, 0.01
      %v2946 = vmul.f32 %v2914, 0.01
      %v2947 = vmul.f32 %v2917, 0.01
      %v2948 = vmul.f32 %v2922, 0.01
      %v2949 = vmul.f32 %v2925, 0.01
      %v2950 = vmul.f32 %v2930, 0.01
      %v2951 = vmul.f32 %v2933, 0.01
      %v2952 = vmax.f32 %v2874, %v2936
      %v2953 = vmax.f32 %v2877, %v2937
      %v2954 = vmax.f32 %v2882, %v2938
      %v2955 = vmax.f32 %v2885, %v2939
      %v2956 = vmax.f32 %v2890, %v2940
      %v2957 = vmax.f32 %v2893, %v2941
      %v2958 = vmax.f32 %v2898, %v2942
      %v2959 = vmax.f32 %v2901, %v2943
      %v2960 = vmax.f32 %v2906, %v2944
      %v2961 = vmax.f32 %v2909, %v2945
      %v2962 = vmax.f32 %v2914, %v2946
      %v2963 = vmax.f32 %v2917, %v2947
      %v2964 = vmax.f32 %v2922, %v2948
      %v2965 = vmax.f32 %v2925, %v2949
      %v2966 = vmax.f32 %v2930, %v2950
      %v2967 = vmax.f32 %v2933, %v2951
      %v2968 = vpack.c.bf16 %v2953, %v2952
      %v2969 = vpack.c.bf16 %v2955, %v2954
      %v2970 = vpack.c.bf16 %v2957, %v2956
      %v2971 = vpack.c.bf16 %v2959, %v2958
      %v2972 = vpack.c.bf16 %v2961, %v2960
      %v2973 = vpack.c.bf16 %v2963, %v2962
      %v2974 = vpack.c.bf16 %v2965, %v2964
      %v2975 = vpack.c.bf16 %v2967, %v2966
      %v2976 = vld [vmem:[%s13] sm:$0xf]
      %v2977 = vld [vmem:[%s13 + $0x4] sm:$0xf]
      %v2978 = vld [vmem:[%s13 + $0x8] sm:$0xf]
      %v2979 = vld [vmem:[%s13 + $0xc] sm:$0xf]
      %v2980 = vld [vmem:[%s13 + $0x10] sm:$0xf]
      %v2981 = vld [vmem:[%s13 + $0x14] sm:$0xf]
      %v2982 = vld [vmem:[%s13 + $0x18] sm:$0xf]
      %v2983 = vld [vmem:[%s13 + $0x1c] sm:$0xf]
      %v2984 = vld [vmem:[%s14] sm:$0x1]
      %v2986 = vlaneseq
      %v2987 = vshrl.u32 %v2986, 7
      %v2988 = vsub.s32 0, %v2987
      %v2989 = vrot.slane %v2984, %v2988
      %v2999 = vunpack.c.l.b16 %v2976
      %v3000 = vunpack.c.l.b16 %v2977
      %v3001 = vunpack.c.l.b16 %v2978
      %v3002 = vunpack.c.l.b16 %v2979
      %v3003 = vunpack.c.l.b16 %v2980
      %v3004 = vunpack.c.l.b16 %v2981
      %v3005 = vunpack.c.l.b16 %v2982
      %v3006 = vunpack.c.l.b16 %v2983
      %v3007 = vpack.c.b16 %v3000, %v2999
      %v3008 = vpack.c.b16 %v3002, %v3001
      %v3009 = vpack.c.b16 %v3004, %v3003
      %v3010 = vpack.c.b16 %v3006, %v3005
      %v3016 = vsel %vm2456, %v2968, 0
      %v3019 = vsel %vm2456, %v2969, 0
      %v3022 = vsel %vm2456, %v2970, 0
      %v3025 = vsel %vm2456, %v2971, 0
      %v3028 = vsel %vm2456, %v2972, 0
      %v3031 = vsel %vm2456, %v2973, 0
      %v3034 = vsel %vm2456, %v2974, 0
      %v3037 = vsel %vm2456, %v2975, 0
      %3039 = vmatprep.subr.bf16.mxu0 0
      %3040 = vmatpush1.bf16.msra.mxu0 0
      %3041 = vmatprep.subr.bf16.mxu0 0
      %3042 = vmatpush1.bf16.msra.mxu0 0
      %3043 = vmatprep.subr.bf16.mxu0 0
      %3044 = vmatpush1.bf16.msra.mxu0 0
      %3045 = vmatprep.subr.bf16.mxu0 0
      %3046 = vmatpush1.bf16.msra.mxu0 0
      %3047 = vmatprep.subr.bf16.mxu0 0
      %3048 = vmatpush1.bf16.msra.mxu0 %v3010
      %3049 = vmatprep.subr.bf16.mxu0 0
      %3050 = vmatpush1.bf16.msra.mxu0 %v3009
      %3051 = vmatprep.subr.bf16.mxu0 0
      %3052 = vmatpush1.bf16.msra.mxu0 %v3008
      %3053 = vmatprep.subr.bf16.mxu0 0
      %3054 = vmatpush1.bf16.msra.mxu0 %v3007
      %3055 = vmatprep.subr.bf16.mxu0 0
      %3056 = vmatpush2.bf16.msra.mxu0 0
      %3057 = vmatprep.subr.bf16.mxu0 0
      %3058 = vmatpush2.bf16.msra.mxu0 0
      %3059 = vmatprep.subr.bf16.mxu0 0
      %3060 = vmatpush2.bf16.msra.mxu0 0
      %3061 = vmatprep.subr.bf16.mxu0 0
      %3062 = vmatpush2.bf16.msra.mxu0 0
      %3063 = vmatprep.subr.bf16.mxu0 0
      %3064 = vmatpush2.bf16.msra.mxu0 0
      %3065 = vmatprep.subr.bf16.mxu0 0
      %3066 = vmatpush2.bf16.msra.mxu0 0
      %3067 = vmatprep.subr.bf16.mxu0 0
      %3068 = vmatpush2.bf16.msra.mxu0 0
      %3069 = vmatprep.subr.bf16.mxu0 0
      %3070 = vmatpush2.bf16.msra.mxu0 0
      %3071 = vmatprep.mubr.bf16.mxu0 0
      %3072 = vmatmul.mubr.bf16.gmra.mxu0 %v3016
      %v3073 = vpop.f32.mrf.mxu0
      %v3074 = vadd.f32 %v2989, %v3073
      %v3075 = vpop.f32.mrf.mxu0
      %v3076 = vpop.f32.mrf.mxu0
      %v3077 = vadd.f32 %v2989, %v3076
      %v3078 = vpop.f32.mrf.mxu0
      %3079 = vmatprep.mubr.bf16.mxu0 0
      %3080 = vmatmul.mubr.bf16.gmra.mxu0 %v3019
      %v3081 = vpop.f32.mrf.mxu0
      %v3082 = vadd.f32 %v2989, %v3081
      %v3083 = vpop.f32.mrf.mxu0
      %v3084 = vpop.f32.mrf.mxu0
      %v3085 = vadd.f32 %v2989, %v3084
      %v3086 = vpop.f32.mrf.mxu0
      %3087 = vmatprep.mubr.bf16.mxu0 0
      %3088 = vmatmul.mubr.bf16.gmra.mxu0 %v3022
      %v3089 = vpop.f32.mrf.mxu0
      %v3090 = vadd.f32 %v2989, %v3089
      %v3091 = vpop.f32.mrf.mxu0
      %v3092 = vpop.f32.mrf.mxu0
      %v3093 = vadd.f32 %v2989, %v3092
      %v3094 = vpop.f32.mrf.mxu0
      %3095 = vmatprep.mubr.bf16.mxu0 0
      %3096 = vmatmul.mubr.bf16.gmra.mxu0 %v3025
      %v3097 = vpop.f32.mrf.mxu0
      %v3098 = vadd.f32 %v2989, %v3097
      %v3099 = vpop.f32.mrf.mxu0
      %v3100 = vpop.f32.mrf.mxu0
      %v3101 = vadd.f32 %v2989, %v3100
      %v3102 = vpop.f32.mrf.mxu0
      %3103 = vmatprep.mubr.bf16.mxu0 0
      %3104 = vmatmul.mubr.bf16.gmra.mxu0 %v3028
      %v3105 = vpop.f32.mrf.mxu0
      %v3106 = vadd.f32 %v2989, %v3105
      %v3107 = vpop.f32.mrf.mxu0
      %v3108 = vpop.f32.mrf.mxu0
      %v3109 = vadd.f32 %v2989, %v3108
      %v3110 = vpop.f32.mrf.mxu0
      %3111 = vmatprep.mubr.bf16.mxu0 0
      %3112 = vmatmul.mubr.bf16.gmra.mxu0 %v3031
      %v3113 = vpop.f32.mrf.mxu0
      %v3114 = vadd.f32 %v2989, %v3113
      %v3115 = vpop.f32.mrf.mxu0
      %v3116 = vpop.f32.mrf.mxu0
      %v3117 = vadd.f32 %v2989, %v3116
      %v3118 = vpop.f32.mrf.mxu0
      %3119 = vmatprep.mubr.bf16.mxu0 0
      %3120 = vmatmul.mubr.bf16.gmra.mxu0 %v3034
      %v3121 = vpop.f32.mrf.mxu0
      %v3122 = vadd.f32 %v2989, %v3121
      %v3123 = vpop.f32.mrf.mxu0
      %v3124 = vpop.f32.mrf.mxu0
      %v3125 = vadd.f32 %v2989, %v3124
      %v3126 = vpop.f32.mrf.mxu0
      %3127 = vmatprep.mubr.bf16.mxu0 0
      %3128 = vmatmul.mubr.bf16.gmra.mxu0 %v3037
      %v3129 = vpop.f32.mrf.mxu0
      %v3130 = vadd.f32 %v2989, %v3129
      %v3131 = vpop.f32.mrf.mxu0
      %v3132 = vpop.f32.mrf.mxu0
      %v3133 = vadd.f32 %v2989, %v3132
      %v3134 = vpop.f32.mrf.mxu0
      %3135 = vdwg.mxu0
      %v3136 = vmul.f32 %v3074, 0.01
      %v3137 = vmul.f32 %v3077, 0.01
      %v3138 = vmul.f32 %v3082, 0.01
      %v3139 = vmul.f32 %v3085, 0.01
      %v3140 = vmul.f32 %v3090, 0.01
      %v3141 = vmul.f32 %v3093, 0.01
      %v3142 = vmul.f32 %v3098, 0.01
      %v3143 = vmul.f32 %v3101, 0.01
      %v3144 = vmul.f32 %v3106, 0.01
      %v3145 = vmul.f32 %v3109, 0.01
      %v3146 = vmul.f32 %v3114, 0.01
      %v3147 = vmul.f32 %v3117, 0.01
      %v3148 = vmul.f32 %v3122, 0.01
      %v3149 = vmul.f32 %v3125, 0.01
      %v3150 = vmul.f32 %v3130, 0.01
      %v3151 = vmul.f32 %v3133, 0.01
      %v3152 = vmax.f32 %v3074, %v3136
      %v3153 = vmax.f32 %v3077, %v3137
      %v3154 = vmax.f32 %v3082, %v3138
      %v3155 = vmax.f32 %v3085, %v3139
      %v3156 = vmax.f32 %v3090, %v3140
      %v3157 = vmax.f32 %v3093, %v3141
      %v3158 = vmax.f32 %v3098, %v3142
      %v3159 = vmax.f32 %v3101, %v3143
      %v3160 = vmax.f32 %v3106, %v3144
      %v3161 = vmax.f32 %v3109, %v3145
      %v3162 = vmax.f32 %v3114, %v3146
      %v3163 = vmax.f32 %v3117, %v3147
      %v3164 = vmax.f32 %v3122, %v3148
      %v3165 = vmax.f32 %v3125, %v3149
      %v3166 = vmax.f32 %v3130, %v3150
      %v3167 = vmax.f32 %v3133, %v3151
      %v3168 = vpack.c.bf16 %v3153, %v3152
      %v3169 = vpack.c.bf16 %v3155, %v3154
      %v3170 = vpack.c.bf16 %v3157, %v3156
      %v3171 = vpack.c.bf16 %v3159, %v3158
      %v3172 = vpack.c.bf16 %v3161, %v3160
      %v3173 = vpack.c.bf16 %v3163, %v3162
      %v3174 = vpack.c.bf16 %v3165, %v3164
      %v3175 = vpack.c.bf16 %v3167, %v3166
      %v3176 = vld [vmem:[%s15] sm:$0xff]
      %v3177 = vld [vmem:[%s15 + $0x8] sm:$0xff]
      %v3178 = vld [vmem:[%s15 + $0x10] sm:$0xff]
      %v3179 = vld [vmem:[%s15 + $0x18] sm:$0xff]
      %v3180 = vld [vmem:[%s15 + $0x20] sm:$0xff]
      %v3181 = vld [vmem:[%s15 + $0x28] sm:$0xff]
      %v3182 = vld [vmem:[%s15 + $0x30] sm:$0xff]
      %v3183 = vld [vmem:[%s15 + $0x38] sm:$0xff]
      %v3184 = vld [vmem:[%s15 + $0x40] sm:$0xff]
      %v3185 = vld [vmem:[%s15 + $0x48] sm:$0xff]
      %v3186 = vld [vmem:[%s15 + $0x50] sm:$0xff]
      %v3187 = vld [vmem:[%s15 + $0x58] sm:$0xff]
      %v3188 = vld [vmem:[%s15 + $0x60] sm:$0xff]
      %v3189 = vld [vmem:[%s15 + $0x68] sm:$0xff]
      %v3190 = vld [vmem:[%s15 + $0x70] sm:$0xff]
      %v3191 = vld [vmem:[%s15 + $0x78] sm:$0xff]
      %v3192 = vld [vmem:[%s16] sm:$0x3]
      %v3194 = vlaneseq
      %v3195 = vshrl.u32 %v3194, 7
      %v3196 = vsub.s32 0, %v3195
      %v3197 = vrot.slane %v3192, %v3196
      %v3198 = vlaneseq
      %v3199 = vshrl.u32 %v3198, 7
      %v3200 = vsub.s32 1, %v3199
      %v3201 = vrot.slane %v3192, %v3200
      %v3220 = vunpack.c.l.b16 %v3176
      %v3221 = vunpack.c.h.b16 %v3176
      %v3222 = vunpack.c.l.b16 %v3177
      %v3223 = vunpack.c.h.b16 %v3177
      %v3224 = vunpack.c.l.b16 %v3178
      %v3225 = vunpack.c.h.b16 %v3178
      %v3226 = vunpack.c.l.b16 %v3179
      %v3227 = vunpack.c.h.b16 %v3179
      %v3228 = vunpack.c.l.b16 %v3180
      %v3229 = vunpack.c.h.b16 %v3180
      %v3230 = vunpack.c.l.b16 %v3181
      %v3231 = vunpack.c.h.b16 %v3181
      %v3232 = vunpack.c.l.b16 %v3182
      %v3233 = vunpack.c.h.b16 %v3182
      %v3234 = vunpack.c.l.b16 %v3183
      %v3235 = vunpack.c.h.b16 %v3183
      %v3236 = vunpack.c.l.b16 %v3184
      %v3237 = vunpack.c.h.b16 %v3184
      %v3238 = vunpack.c.l.b16 %v3185
      %v3239 = vunpack.c.h.b16 %v3185
      %v3240 = vunpack.c.l.b16 %v3186
      %v3241 = vunpack.c.h.b16 %v3186
      %v3242 = vunpack.c.l.b16 %v3187
      %v3243 = vunpack.c.h.b16 %v3187
      %v3244 = vunpack.c.l.b16 %v3188
      %v3245 = vunpack.c.h.b16 %v3188
      %v3246 = vunpack.c.l.b16 %v3189
      %v3247 = vunpack.c.h.b16 %v3189
      %v3248 = vunpack.c.l.b16 %v3190
      %v3249 = vunpack.c.h.b16 %v3190
      %v3250 = vunpack.c.l.b16 %v3191
      %v3251 = vunpack.c.h.b16 %v3191
      %v3252 = vpack.c.b16 %v3222, %v3220
      %v3253 = vpack.c.b16 %v3223, %v3221
      %v3254 = vpack.c.b16 %v3226, %v3224
      %v3255 = vpack.c.b16 %v3227, %v3225
      %v3256 = vpack.c.b16 %v3230, %v3228
      %v3257 = vpack.c.b16 %v3231, %v3229
      %v3258 = vpack.c.b16 %v3234, %v3232
      %v3259 = vpack.c.b16 %v3235, %v3233
      %v3260 = vpack.c.b16 %v3238, %v3236
      %v3261 = vpack.c.b16 %v3239, %v3237
      %v3262 = vpack.c.b16 %v3242, %v3240
      %v3263 = vpack.c.b16 %v3243, %v3241
      %v3264 = vpack.c.b16 %v3246, %v3244
      %v3265 = vpack.c.b16 %v3247, %v3245
      %v3266 = vpack.c.b16 %v3250, %v3248
      %v3267 = vpack.c.b16 %v3251, %v3249
      %3284 = vmatprep.subr.bf16.mxu0 %v3267
      %3285 = vmatpush1.bf16.msra.mxu0 %v3266
      %3286 = vmatprep.subr.bf16.mxu0 %v3265
      %3287 = vmatpush1.bf16.msra.mxu0 %v3264
      %3288 = vmatprep.subr.bf16.mxu0 %v3263
      %3289 = vmatpush1.bf16.msra.mxu0 %v3262
      %3290 = vmatprep.subr.bf16.mxu0 %v3261
      %3291 = vmatpush1.bf16.msra.mxu0 %v3260
      %3292 = vmatprep.subr.bf16.mxu0 %v3259
      %3293 = vmatpush1.bf16.msra.mxu0 %v3258
      %3294 = vmatprep.subr.bf16.mxu0 %v3257
      %3295 = vmatpush1.bf16.msra.mxu0 %v3256
      %3296 = vmatprep.subr.bf16.mxu0 %v3255
      %3297 = vmatpush1.bf16.msra.mxu0 %v3254
      %3298 = vmatprep.subr.bf16.mxu0 %v3253
      %3299 = vmatpush1.bf16.msra.mxu0 %v3252
      %3300 = vmatprep.subr.bf16.mxu0 0
      %3301 = vmatpush2.bf16.msra.mxu0 0
      %3302 = vmatprep.subr.bf16.mxu0 0
      %3303 = vmatpush2.bf16.msra.mxu0 0
      %3304 = vmatprep.subr.bf16.mxu0 0
      %3305 = vmatpush2.bf16.msra.mxu0 0
      %3306 = vmatprep.subr.bf16.mxu0 0
      %3307 = vmatpush2.bf16.msra.mxu0 0
      %3308 = vmatprep.subr.bf16.mxu0 0
      %3309 = vmatpush2.bf16.msra.mxu0 0
      %3310 = vmatprep.subr.bf16.mxu0 0
      %3311 = vmatpush2.bf16.msra.mxu0 0
      %3312 = vmatprep.subr.bf16.mxu0 0
      %3313 = vmatpush2.bf16.msra.mxu0 0
      %3314 = vmatprep.subr.bf16.mxu0 0
      %3315 = vmatpush2.bf16.msra.mxu0 0
      %3316 = vmatprep.mubr.bf16.mxu0 0
      %3317 = vmatmul.mubr.bf16.gmra.mxu0 %v3168
      %v3318 = vpop.f32.mrf.mxu0
      %v3319 = vadd.f32 %v3197, %v3318
      %v3320 = vpop.f32.mrf.mxu0
      %v3321 = vadd.f32 %v3201, %v3320
      %v3322 = vpop.f32.mrf.mxu0
      %v3323 = vadd.f32 %v3197, %v3322
      %v3324 = vpop.f32.mrf.mxu0
      %v3325 = vadd.f32 %v3201, %v3324
      %3326 = vmatprep.mubr.bf16.mxu0 0
      %3327 = vmatmul.mubr.bf16.gmra.mxu0 %v3169
      %v3328 = vpop.f32.mrf.mxu0
      %v3329 = vadd.f32 %v3197, %v3328
      %v3330 = vpop.f32.mrf.mxu0
      %v3331 = vadd.f32 %v3201, %v3330
      %v3332 = vpop.f32.mrf.mxu0
      %v3333 = vadd.f32 %v3197, %v3332
      %v3334 = vpop.f32.mrf.mxu0
      %v3335 = vadd.f32 %v3201, %v3334
      %3336 = vmatprep.mubr.bf16.mxu0 0
      %3337 = vmatmul.mubr.bf16.gmra.mxu0 %v3170
      %v3338 = vpop.f32.mrf.mxu0
      %v3339 = vadd.f32 %v3197, %v3338
      %v3340 = vpop.f32.mrf.mxu0
      %v3341 = vadd.f32 %v3201, %v3340
      %v3342 = vpop.f32.mrf.mxu0
      %v3343 = vadd.f32 %v3197, %v3342
      %v3344 = vpop.f32.mrf.mxu0
      %v3345 = vadd.f32 %v3201, %v3344
      %3346 = vmatprep.mubr.bf16.mxu0 0
      %3347 = vmatmul.mubr.bf16.gmra.mxu0 %v3171
      %v3348 = vpop.f32.mrf.mxu0
      %v3349 = vadd.f32 %v3197, %v3348
      %v3350 = vpop.f32.mrf.mxu0
      %v3351 = vadd.f32 %v3201, %v3350
      %v3352 = vpop.f32.mrf.mxu0
      %v3353 = vadd.f32 %v3197, %v3352
      %v3354 = vpop.f32.mrf.mxu0
      %v3355 = vadd.f32 %v3201, %v3354
      %3356 = vmatprep.mubr.bf16.mxu0 0
      %3357 = vmatmul.mubr.bf16.gmra.mxu0 %v3172
      %v3358 = vpop.f32.mrf.mxu0
      %v3359 = vadd.f32 %v3197, %v3358
      %v3360 = vpop.f32.mrf.mxu0
      %v3361 = vadd.f32 %v3201, %v3360
      %v3362 = vpop.f32.mrf.mxu0
      %v3363 = vadd.f32 %v3197, %v3362
      %v3364 = vpop.f32.mrf.mxu0
      %v3365 = vadd.f32 %v3201, %v3364
      %3366 = vmatprep.mubr.bf16.mxu0 0
      %3367 = vmatmul.mubr.bf16.gmra.mxu0 %v3173
      %v3368 = vpop.f32.mrf.mxu0
      %v3369 = vadd.f32 %v3197, %v3368
      %v3370 = vpop.f32.mrf.mxu0
      %v3371 = vadd.f32 %v3201, %v3370
      %v3372 = vpop.f32.mrf.mxu0
      %v3373 = vadd.f32 %v3197, %v3372
      %v3374 = vpop.f32.mrf.mxu0
      %v3375 = vadd.f32 %v3201, %v3374
      %3376 = vmatprep.mubr.bf16.mxu0 0
      %3377 = vmatmul.mubr.bf16.gmra.mxu0 %v3174
      %v3378 = vpop.f32.mrf.mxu0
      %v3379 = vadd.f32 %v3197, %v3378
      %v3380 = vpop.f32.mrf.mxu0
      %v3381 = vadd.f32 %v3201, %v3380
      %v3382 = vpop.f32.mrf.mxu0
      %v3383 = vadd.f32 %v3197, %v3382
      %v3384 = vpop.f32.mrf.mxu0
      %v3385 = vadd.f32 %v3201, %v3384
      %3386 = vmatprep.mubr.bf16.mxu0 0
      %3387 = vmatmul.mubr.bf16.gmra.mxu0 %v3175
      %v3388 = vpop.f32.mrf.mxu0
      %v3389 = vadd.f32 %v3197, %v3388
      %v3390 = vpop.f32.mrf.mxu0
      %v3391 = vadd.f32 %v3201, %v3390
      %v3392 = vpop.f32.mrf.mxu0
      %v3393 = vadd.f32 %v3197, %v3392
      %v3394 = vpop.f32.mrf.mxu0
      %v3395 = vadd.f32 %v3201, %v3394
      %3396 = vdwg.mxu0
      %v3397 = vmul.f32 %v3319, 0.01
      %v3398 = vmul.f32 %v3321, 0.01
      %v3399 = vmul.f32 %v3323, 0.01
      %v3400 = vmul.f32 %v3325, 0.01
      %v3401 = vmul.f32 %v3329, 0.01
      %v3402 = vmul.f32 %v3331, 0.01
      %v3403 = vmul.f32 %v3333, 0.01
      %v3404 = vmul.f32 %v3335, 0.01
      %v3405 = vmul.f32 %v3339, 0.01
      %v3406 = vmul.f32 %v3341, 0.01
      %v3407 = vmul.f32 %v3343, 0.01
      %v3408 = vmul.f32 %v3345, 0.01
      %v3409 = vmul.f32 %v3349, 0.01
      %v3410 = vmul.f32 %v3351, 0.01
      %v3411 = vmul.f32 %v3353, 0.01
      %v3412 = vmul.f32 %v3355, 0.01
      %v3413 = vmul.f32 %v3359, 0.01
      %v3414 = vmul.f32 %v3361, 0.01
      %v3415 = vmul.f32 %v3363, 0.01
      %v3416 = vmul.f32 %v3365, 0.01
      %v3417 = vmul.f32 %v3369, 0.01
      %v3418 = vmul.f32 %v3371, 0.01
      %v3419 = vmul.f32 %v3373, 0.01
      %v3420 = vmul.f32 %v3375, 0.01
      %v3421 = vmul.f32 %v3379, 0.01
      %v3422 = vmul.f32 %v3381, 0.01
      %v3423 = vmul.f32 %v3383, 0.01
      %v3424 = vmul.f32 %v3385, 0.01
      %v3425 = vmul.f32 %v3389, 0.01
      %v3426 = vmul.f32 %v3391, 0.01
      %v3427 = vmul.f32 %v3393, 0.01
      %v3428 = vmul.f32 %v3395, 0.01
      %v3429 = vmax.f32 %v3319, %v3397
      %v3430 = vmax.f32 %v3321, %v3398
      %v3431 = vmax.f32 %v3323, %v3399
      %v3432 = vmax.f32 %v3325, %v3400
      %v3433 = vmax.f32 %v3329, %v3401
      %v3434 = vmax.f32 %v3331, %v3402
      %v3435 = vmax.f32 %v3333, %v3403
      %v3436 = vmax.f32 %v3335, %v3404
      %v3437 = vmax.f32 %v3339, %v3405
      %v3438 = vmax.f32 %v3341, %v3406
      %v3439 = vmax.f32 %v3343, %v3407
      %v3440 = vmax.f32 %v3345, %v3408
      %v3441 = vmax.f32 %v3349, %v3409
      %v3442 = vmax.f32 %v3351, %v3410
      %v3443 = vmax.f32 %v3353, %v3411
      %v3444 = vmax.f32 %v3355, %v3412
      %v3445 = vmax.f32 %v3359, %v3413
      %v3446 = vmax.f32 %v3361, %v3414
      %v3447 = vmax.f32 %v3363, %v3415
      %v3448 = vmax.f32 %v3365, %v3416
      %v3449 = vmax.f32 %v3369, %v3417
      %v3450 = vmax.f32 %v3371, %v3418
      %v3451 = vmax.f32 %v3373, %v3419
      %v3452 = vmax.f32 %v3375, %v3420
      %v3453 = vmax.f32 %v3379, %v3421
      %v3454 = vmax.f32 %v3381, %v3422
      %v3455 = vmax.f32 %v3383, %v3423
      %v3456 = vmax.f32 %v3385, %v3424
      %v3457 = vmax.f32 %v3389, %v3425
      %v3458 = vmax.f32 %v3391, %v3426
      %v3459 = vmax.f32 %v3393, %v3427
      %v3460 = vmax.f32 %v3395, %v3428
      %v3461 = vpack.c.bf16 %v3431, %v3429
      %v3462 = vpack.c.bf16 %v3432, %v3430
      %v3463 = vpack.c.bf16 %v3435, %v3433
      %v3464 = vpack.c.bf16 %v3436, %v3434
      %v3465 = vpack.c.bf16 %v3439, %v3437
      %v3466 = vpack.c.bf16 %v3440, %v3438
      %v3467 = vpack.c.bf16 %v3443, %v3441
      %v3468 = vpack.c.bf16 %v3444, %v3442
      %v3469 = vpack.c.bf16 %v3447, %v3445
      %v3470 = vpack.c.bf16 %v3448, %v3446
      %v3471 = vpack.c.bf16 %v3451, %v3449
      %v3472 = vpack.c.bf16 %v3452, %v3450
      %v3473 = vpack.c.bf16 %v3455, %v3453
      %v3474 = vpack.c.bf16 %v3456, %v3454
      %v3475 = vpack.c.bf16 %v3459, %v3457
      %v3476 = vpack.c.bf16 %v3460, %v3458
      %v3477 = vld [vmem:[%s17] sm:$0xff]
      %v3478 = vld [vmem:[%s17 + $0x8] sm:$0xff]
      %v3479 = vld [vmem:[%s17 + $0x10] sm:$0xff]
      %v3480 = vld [vmem:[%s17 + $0x18] sm:$0xf]
      %v3481 = vld [vmem:[%s17 + $0x1c] sm:$0xff]
      %v3482 = vld [vmem:[%s17 + $0x24] sm:$0xff]
      %v3483 = vld [vmem:[%s17 + $0x2c] sm:$0xff]
      %v3484 = vld [vmem:[%s17 + $0x34] sm:$0xf]
      %v3485 = vld [vmem:[%s17 + $0x38] sm:$0xff]
      %v3486 = vld [vmem:[%s17 + $0x40] sm:$0xff]
      %v3487 = vld [vmem:[%s17 + $0x48] sm:$0xff]
      %v3488 = vld [vmem:[%s17 + $0x50] sm:$0xf]
      %v3489 = vld [vmem:[%s17 + $0x54] sm:$0xff]
      %v3490 = vld [vmem:[%s17 + $0x5c] sm:$0xff]
      %v3491 = vld [vmem:[%s17 + $0x64] sm:$0xff]
      %v3492 = vld [vmem:[%s17 + $0x6c] sm:$0xf]
      %v3493 = vld [vmem:[%s17 + $0x70] sm:$0xff]
      %v3494 = vld [vmem:[%s17 + $0x78] sm:$0xff]
      %v3495 = vld [vmem:[%s17 + $0x80] sm:$0xff]
      %v3496 = vld [vmem:[%s17 + $0x88] sm:$0xf]
      %v3497 = vld [vmem:[%s17 + $0x8c] sm:$0xff]
      %v3498 = vld [vmem:[%s17 + $0x94] sm:$0xff]
      %v3499 = vld [vmem:[%s17 + $0x9c] sm:$0xff]
      %v3500 = vld [vmem:[%s17 + $0xa4] sm:$0xf]
      %v3501 = vld [vmem:[%s17 + $0xa8] sm:$0xff]
      %v3502 = vld [vmem:[%s17 + $0xb0] sm:$0xff]
      %v3503 = vld [vmem:[%s17 + $0xb8] sm:$0xff]
      %v3504 = vld [vmem:[%s17 + $0xc0] sm:$0xf]
      %v3505 = vld [vmem:[%s17 + $0xc4] sm:$0xff]
      %v3506 = vld [vmem:[%s17 + $0xcc] sm:$0xff]
      %v3507 = vld [vmem:[%s17 + $0xd4] sm:$0xff]
      %v3508 = vld [vmem:[%s17 + $0xdc] sm:$0xf]
      %v3509 = vld [vmem:[%s17 + $0xe0] sm:$0xff]
      %v3510 = vld [vmem:[%s17 + $0xe8] sm:$0xff]
      %v3511 = vld [vmem:[%s17 + $0xf0] sm:$0xff]
      %v3512 = vld [vmem:[%s17 + $0xf8] sm:$0xf]
      %v3513 = vld [vmem:[%s17 + $0xfc] sm:$0xff]
      %v3514 = vld [vmem:[%s17 + $0x104] sm:$0xff]
      %v3515 = vld [vmem:[%s17 + $0x10c] sm:$0xff]
      %v3516 = vld [vmem:[%s17 + $0x114] sm:$0xf]
      %v3517 = vld [vmem:[%s17 + $0x118] sm:$0xff]
      %v3518 = vld [vmem:[%s17 + $0x120] sm:$0xff]
      %v3519 = vld [vmem:[%s17 + $0x128] sm:$0xff]
      %v3520 = vld [vmem:[%s17 + $0x130] sm:$0xf]
      %v3521 = vld [vmem:[%s17 + $0x134] sm:$0xff]
      %v3522 = vld [vmem:[%s17 + $0x13c] sm:$0xff]
      %v3523 = vld [vmem:[%s17 + $0x144] sm:$0xff]
      %v3524 = vld [vmem:[%s17 + $0x14c] sm:$0xf]
      %v3525 = vld [vmem:[%s17 + $0x150] sm:$0xff]
      %v3526 = vld [vmem:[%s17 + $0x158] sm:$0xff]
      %v3527 = vld [vmem:[%s17 + $0x160] sm:$0xff]
      %v3528 = vld [vmem:[%s17 + $0x168] sm:$0xf]
      %v3529 = vld [vmem:[%s17 + $0x16c] sm:$0xff]
      %v3530 = vld [vmem:[%s17 + $0x174] sm:$0xff]
      %v3531 = vld [vmem:[%s17 + $0x17c] sm:$0xff]
      %v3532 = vld [vmem:[%s17 + $0x184] sm:$0xf]
      %v3533 = vld [vmem:[%s17 + $0x188] sm:$0xff]
      %v3534 = vld [vmem:[%s17 + $0x190] sm:$0xff]
      %v3535 = vld [vmem:[%s17 + $0x198] sm:$0xff]
      %v3536 = vld [vmem:[%s17 + $0x1a0] sm:$0xf]
      %v3537 = vld [vmem:[%s17 + $0x1a4] sm:$0xff]
      %v3538 = vld [vmem:[%s17 + $0x1ac] sm:$0xff]
      %v3539 = vld [vmem:[%s17 + $0x1b4] sm:$0xff]
      %v3540 = vld [vmem:[%s17 + $0x1bc] sm:$0xf]
      %v3541 = vld [vmem:[%s17 + $0x1c0] sm:$0xff]
      %v3542 = vld [vmem:[%s17 + $0x1c8] sm:$0xff]
      %v3543 = vld [vmem:[%s17 + $0x1d0] sm:$0xff]
      %v3544 = vld [vmem:[%s17 + $0x1d8] sm:$0xf]
      %v3545 = vld [vmem:[%s17 + $0x1dc] sm:$0xff]
      %v3546 = vld [vmem:[%s17 + $0x1e4] sm:$0xff]
      %v3547 = vld [vmem:[%s17 + $0x1ec] sm:$0xff]
      %v3548 = vld [vmem:[%s17 + $0x1f4] sm:$0xf]
      %v3549 = vld [vmem:[%s17 + $0x1f8] sm:$0xff]
      %v3550 = vld [vmem:[%s17 + $0x200] sm:$0xff]
      %v3551 = vld [vmem:[%s17 + $0x208] sm:$0xff]
      %v3552 = vld [vmem:[%s17 + $0x210] sm:$0xf]
      %v3553 = vld [vmem:[%s17 + $0x214] sm:$0xff]
      %v3554 = vld [vmem:[%s17 + $0x21c] sm:$0xff]
      %v3555 = vld [vmem:[%s17 + $0x224] sm:$0xff]
      %v3556 = vld [vmem:[%s17 + $0x22c] sm:$0xf]
      %v3557 = vld [vmem:[%s17 + $0x230] sm:$0xff]
      %v3558 = vld [vmem:[%s17 + $0x238] sm:$0xff]
      %v3559 = vld [vmem:[%s17 + $0x240] sm:$0xff]
      %v3560 = vld [vmem:[%s17 + $0x248] sm:$0xf]
      %v3561 = vld [vmem:[%s17 + $0x24c] sm:$0xff]
      %v3562 = vld [vmem:[%s17 + $0x254] sm:$0xff]
      %v3563 = vld [vmem:[%s17 + $0x25c] sm:$0xff]
      %v3564 = vld [vmem:[%s17 + $0x264] sm:$0xf]
      %v3565 = vld [vmem:[%s17 + $0x268] sm:$0xff]
      %v3566 = vld [vmem:[%s17 + $0x270] sm:$0xff]
      %v3567 = vld [vmem:[%s17 + $0x278] sm:$0xff]
      %v3568 = vld [vmem:[%s17 + $0x280] sm:$0xf]
      %v3569 = vld [vmem:[%s17 + $0x284] sm:$0xff]
      %v3570 = vld [vmem:[%s17 + $0x28c] sm:$0xff]
      %v3571 = vld [vmem:[%s17 + $0x294] sm:$0xff]
      %v3572 = vld [vmem:[%s17 + $0x29c] sm:$0xf]
      %v3573 = vld [vmem:[%s17 + $0x2a0] sm:$0xff]
      %v3574 = vld [vmem:[%s17 + $0x2a8] sm:$0xff]
      %v3575 = vld [vmem:[%s17 + $0x2b0] sm:$0xff]
      %v3576 = vld [vmem:[%s17 + $0x2b8] sm:$0xf]
      %v3577 = vld [vmem:[%s17 + $0x2bc] sm:$0xff]
      %v3578 = vld [vmem:[%s17 + $0x2c4] sm:$0xff]
      %v3579 = vld [vmem:[%s17 + $0x2cc] sm:$0xff]
      %v3580 = vld [vmem:[%s17 + $0x2d4] sm:$0xf]
      %v3581 = vld [vmem:[%s17 + $0x2d8] sm:$0xff]
      %v3582 = vld [vmem:[%s17 + $0x2e0] sm:$0xff]
      %v3583 = vld [vmem:[%s17 + $0x2e8] sm:$0xff]
      %v3584 = vld [vmem:[%s17 + $0x2f0] sm:$0xf]
      %v3585 = vld [vmem:[%s17 + $0x2f4] sm:$0xff]
      %v3586 = vld [vmem:[%s17 + $0x2fc] sm:$0xff]
      %v3587 = vld [vmem:[%s17 + $0x304] sm:$0xff]
      %v3588 = vld [vmem:[%s17 + $0x30c] sm:$0xf]
      %v3589 = vld [vmem:[%s17 + $0x310] sm:$0xff]
      %v3590 = vld [vmem:[%s17 + $0x318] sm:$0xff]
      %v3591 = vld [vmem:[%s17 + $0x320] sm:$0xff]
      %v3592 = vld [vmem:[%s17 + $0x328] sm:$0xf]
      %v3593 = vld [vmem:[%s17 + $0x32c] sm:$0xff]
      %v3594 = vld [vmem:[%s17 + $0x334] sm:$0xff]
      %v3595 = vld [vmem:[%s17 + $0x33c] sm:$0xff]
      %v3596 = vld [vmem:[%s17 + $0x344] sm:$0xf]
      %v3597 = vld [vmem:[%s17 + $0x348] sm:$0xff]
      %v3598 = vld [vmem:[%s17 + $0x350] sm:$0xff]
      %v3599 = vld [vmem:[%s17 + $0x358] sm:$0xff]
      %v3600 = vld [vmem:[%s17 + $0x360] sm:$0xf]
      %v3601 = vld [vmem:[%s17 + $0x364] sm:$0xff]
      %v3602 = vld [vmem:[%s17 + $0x36c] sm:$0xff]
      %v3603 = vld [vmem:[%s17 + $0x374] sm:$0xff]
      %v3604 = vld [vmem:[%s17 + $0x37c] sm:$0xf]
      %v3605 = vld [vmem:[%s18] sm:$0x7f]
      %v3607 = vlaneseq
      %v3608 = vshrl.u32 %v3607, 7
      %v3609 = vsub.s32 0, %v3608
      %v3610 = vrot.slane %v3605, %v3609
      %v3611 = vlaneseq
      %v3612 = vshrl.u32 %v3611, 7
      %v3613 = vsub.s32 1, %v3612
      %v3614 = vrot.slane %v3605, %v3613
      %v3615 = vlaneseq
      %v3616 = vshrl.u32 %v3615, 7
      %v3617 = vsub.s32 2, %v3616
      %v3618 = vrot.slane %v3605, %v3617
      %v3619 = vlaneseq
      %v3620 = vshrl.u32 %v3619, 7
      %v3621 = vsub.s32 3, %v3620
      %v3622 = vrot.slane %v3605, %v3621
      %v3623 = vlaneseq
      %v3624 = vshrl.u32 %v3623, 7
      %v3625 = vsub.s32 4, %v3624
      %v3626 = vrot.slane %v3605, %v3625
      %v3627 = vlaneseq
      %v3628 = vshrl.u32 %v3627, 7
      %v3629 = vsub.s32 5, %v3628
      %v3630 = vrot.slane %v3605, %v3629
      %v3631 = vlaneseq
      %v3632 = vshrl.u32 %v3631, 7
      %v3633 = vsub.s32 6, %v3632
      %v3634 = vrot.slane %v3605, %v3633
      %v3770 = vunpack.c.l.b16 %v3477
      %v3771 = vunpack.c.h.b16 %v3477
      %v3772 = vunpack.c.l.b16 %v3478
      %v3773 = vunpack.c.h.b16 %v3478
      %v3774 = vunpack.c.l.b16 %v3479
      %v3775 = vunpack.c.h.b16 %v3479
      %v3776 = vunpack.c.l.b16 %v3480
      %v3777 = vunpack.c.l.b16 %v3481
      %v3778 = vunpack.c.h.b16 %v3481
      %v3779 = vunpack.c.l.b16 %v3482
      %v3780 = vunpack.c.h.b16 %v3482
      %v3781 = vunpack.c.l.b16 %v3483
      %v3782 = vunpack.c.h.b16 %v3483
      %v3783 = vunpack.c.l.b16 %v3484
      %v3784 = vunpack.c.l.b16 %v3485
      %v3785 = vunpack.c.h.b16 %v3485
      %v3786 = vunpack.c.l.b16 %v3486
      %v3787 = vunpack.c.h.b16 %v3486
      %v3788 = vunpack.c.l.b16 %v3487
      %v3789 = vunpack.c.h.b16 %v3487
      %v3790 = vunpack.c.l.b16 %v3488
      %v3791 = vunpack.c.l.b16 %v3489
      %v3792 = vunpack.c.h.b16 %v3489
      %v3793 = vunpack.c.l.b16 %v3490
      %v3794 = vunpack.c.h.b16 %v3490
      %v3795 = vunpack.c.l.b16 %v3491
      %v3796 = vunpack.c.h.b16 %v3491
      %v3797 = vunpack.c.l.b16 %v3492
      %v3798 = vunpack.c.l.b16 %v3493
      %v3799 = vunpack.c.h.b16 %v3493
      %v3800 = vunpack.c.l.b16 %v3494
      %v3801 = vunpack.c.h.b16 %v3494
      %v3802 = vunpack.c.l.b16 %v3495
      %v3803 = vunpack.c.h.b16 %v3495
      %v3804 = vunpack.c.l.b16 %v3496
      %v3805 = vunpack.c.l.b16 %v3497
      %v3806 = vunpack.c.h.b16 %v3497
      %v3807 = vunpack.c.l.b16 %v3498
      %v3808 = vunpack.c.h.b16 %v3498
      %v3809 = vunpack.c.l.b16 %v3499
      %v3810 = vunpack.c.h.b16 %v3499
      %v3811 = vunpack.c.l.b16 %v3500
      %v3812 = vunpack.c.l.b16 %v3501
      %v3813 = vunpack.c.h.b16 %v3501
      %v3814 = vunpack.c.l.b16 %v3502
      %v3815 = vunpack.c.h.b16 %v3502
      %v3816 = vunpack.c.l.b16 %v3503
      %v3817 = vunpack.c.h.b16 %v3503
      %v3818 = vunpack.c.l.b16 %v3504
      %v3819 = vunpack.c.l.b16 %v3505
      %v3820 = vunpack.c.h.b16 %v3505
      %v3821 = vunpack.c.l.b16 %v3506
      %v3822 = vunpack.c.h.b16 %v3506
      %v3823 = vunpack.c.l.b16 %v3507
      %v3824 = vunpack.c.h.b16 %v3507
      %v3825 = vunpack.c.l.b16 %v3508
      %v3826 = vunpack.c.l.b16 %v3509
      %v3827 = vunpack.c.h.b16 %v3509
      %v3828 = vunpack.c.l.b16 %v3510
      %v3829 = vunpack.c.h.b16 %v3510
      %v3830 = vunpack.c.l.b16 %v3511
      %v3831 = vunpack.c.h.b16 %v3511
      %v3832 = vunpack.c.l.b16 %v3512
      %v3833 = vunpack.c.l.b16 %v3513
      %v3834 = vunpack.c.h.b16 %v3513
      %v3835 = vunpack.c.l.b16 %v3514
      %v3836 = vunpack.c.h.b16 %v3514
      %v3837 = vunpack.c.l.b16 %v3515
      %v3838 = vunpack.c.h.b16 %v3515
      %v3839 = vunpack.c.l.b16 %v3516
      %v3840 = vunpack.c.l.b16 %v3517
      %v3841 = vunpack.c.h.b16 %v3517
      %v3842 = vunpack.c.l.b16 %v3518
      %v3843 = vunpack.c.h.b16 %v3518
      %v3844 = vunpack.c.l.b16 %v3519
      %v3845 = vunpack.c.h.b16 %v3519
      %v3846 = vunpack.c.l.b16 %v3520
      %v3847 = vunpack.c.l.b16 %v3521
      %v3848 = vunpack.c.h.b16 %v3521
      %v3849 = vunpack.c.l.b16 %v3522
      %v3850 = vunpack.c.h.b16 %v3522
      %v3851 = vunpack.c.l.b16 %v3523
      %v3852 = vunpack.c.h.b16 %v3523
      %v3853 = vunpack.c.l.b16 %v3524
      %v3854 = vunpack.c.l.b16 %v3525
      %v3855 = vunpack.c.h.b16 %v3525
      %v3856 = vunpack.c.l.b16 %v3526
      %v3857 = vunpack.c.h.b16 %v3526
      %v3858 = vunpack.c.l.b16 %v3527
      %v3859 = vunpack.c.h.b16 %v3527
      %v3860 = vunpack.c.l.b16 %v3528
      %v3861 = vunpack.c.l.b16 %v3529
      %v3862 = vunpack.c.h.b16 %v3529
      %v3863 = vunpack.c.l.b16 %v3530
      %v3864 = vunpack.c.h.b16 %v3530
      %v3865 = vunpack.c.l.b16 %v3531
      %v3866 = vunpack.c.h.b16 %v3531
      %v3867 = vunpack.c.l.b16 %v3532
      %v3868 = vunpack.c.l.b16 %v3533
      %v3869 = vunpack.c.h.b16 %v3533
      %v3870 = vunpack.c.l.b16 %v3534
      %v3871 = vunpack.c.h.b16 %v3534
      %v3872 = vunpack.c.l.b16 %v3535
      %v3873 = vunpack.c.h.b16 %v3535
      %v3874 = vunpack.c.l.b16 %v3536
      %v3875 = vunpack.c.l.b16 %v3537
      %v3876 = vunpack.c.h.b16 %v3537
      %v3877 = vunpack.c.l.b16 %v3538
      %v3878 = vunpack.c.h.b16 %v3538
      %v3879 = vunpack.c.l.b16 %v3539
      %v3880 = vunpack.c.h.b16 %v3539
      %v3881 = vunpack.c.l.b16 %v3540
      %v3882 = vunpack.c.l.b16 %v3541
      %v3883 = vunpack.c.h.b16 %v3541
      %v3884 = vunpack.c.l.b16 %v3542
      %v3885 = vunpack.c.h.b16 %v3542
      %v3886 = vunpack.c.l.b16 %v3543
      %v3887 = vunpack.c.h.b16 %v3543
      %v3888 = vunpack.c.l.b16 %v3544
      %v3889 = vunpack.c.l.b16 %v3545
      %v3890 = vunpack.c.h.b16 %v3545
      %v3891 = vunpack.c.l.b16 %v3546
      %v3892 = vunpack.c.h.b16 %v3546
      %v3893 = vunpack.c.l.b16 %v3547
      %v3894 = vunpack.c.h.b16 %v3547
      %v3895 = vunpack.c.l.b16 %v3548
      %v3896 = vunpack.c.l.b16 %v3549
      %v3897 = vunpack.c.h.b16 %v3549
      %v3898 = vunpack.c.l.b16 %v3550
      %v3899 = vunpack.c.h.b16 %v3550
      %v3900 = vunpack.c.l.b16 %v3551
      %v3901 = vunpack.c.h.b16 %v3551
      %v3902 = vunpack.c.l.b16 %v3552
      %v3903 = vunpack.c.l.b16 %v3553
      %v3904 = vunpack.c.h.b16 %v3553
      %v3905 = vunpack.c.l.b16 %v3554
      %v3906 = vunpack.c.h.b16 %v3554
      %v3907 = vunpack.c.l.b16 %v3555
      %v3908 = vunpack.c.h.b16 %v3555
      %v3909 = vunpack.c.l.b16 %v3556
      %v3910 = vunpack.c.l.b16 %v3557
      %v3911 = vunpack.c.h.b16 %v3557
      %v3912 = vunpack.c.l.b16 %v3558
      %v3913 = vunpack.c.h.b16 %v3558
      %v3914 = vunpack.c.l.b16 %v3559
      %v3915 = vunpack.c.h.b16 %v3559
      %v3916 = vunpack.c.l.b16 %v3560
      %v3917 = vunpack.c.l.b16 %v3561
      %v3918 = vunpack.c.h.b16 %v3561
      %v3919 = vunpack.c.l.b16 %v3562
      %v3920 = vunpack.c.h.b16 %v3562
      %v3921 = vunpack.c.l.b16 %v3563
      %v3922 = vunpack.c.h.b16 %v3563
      %v3923 = vunpack.c.l.b16 %v3564
      %v3924 = vunpack.c.l.b16 %v3565
      %v3925 = vunpack.c.h.b16 %v3565
      %v3926 = vunpack.c.l.b16 %v3566
      %v3927 = vunpack.c.h.b16 %v3566
      %v3928 = vunpack.c.l.b16 %v3567
      %v3929 = vunpack.c.h.b16 %v3567
      %v3930 = vunpack.c.l.b16 %v3568
      %v3931 = vunpack.c.l.b16 %v3569
      %v3932 = vunpack.c.h.b16 %v3569
      %v3933 = vunpack.c.l.b16 %v3570
      %v3934 = vunpack.c.h.b16 %v3570
      %v3935 = vunpack.c.l.b16 %v3571
      %v3936 = vunpack.c.h.b16 %v3571
      %v3937 = vunpack.c.l.b16 %v3572
      %v3938 = vunpack.c.l.b16 %v3573
      %v3939 = vunpack.c.h.b16 %v3573
      %v3940 = vunpack.c.l.b16 %v3574
      %v3941 = vunpack.c.h.b16 %v3574
      %v3942 = vunpack.c.l.b16 %v3575
      %v3943 = vunpack.c.h.b16 %v3575
      %v3944 = vunpack.c.l.b16 %v3576
      %v3945 = vunpack.c.l.b16 %v3577
      %v3946 = vunpack.c.h.b16 %v3577
      %v3947 = vunpack.c.l.b16 %v3578
      %v3948 = vunpack.c.h.b16 %v3578
      %v3949 = vunpack.c.l.b16 %v3579
      %v3950 = vunpack.c.h.b16 %v3579
      %v3951 = vunpack.c.l.b16 %v3580
      %v3952 = vunpack.c.l.b16 %v3581
      %v3953 = vunpack.c.h.b16 %v3581
      %v3954 = vunpack.c.l.b16 %v3582
      %v3955 = vunpack.c.h.b16 %v3582
      %v3956 = vunpack.c.l.b16 %v3583
      %v3957 = vunpack.c.h.b16 %v3583
      %v3958 = vunpack.c.l.b16 %v3584
      %v3959 = vunpack.c.l.b16 %v3585
      %v3960 = vunpack.c.h.b16 %v3585
      %v3961 = vunpack.c.l.b16 %v3586
      %v3962 = vunpack.c.h.b16 %v3586
      %v3963 = vunpack.c.l.b16 %v3587
      %v3964 = vunpack.c.h.b16 %v3587
      %v3965 = vunpack.c.l.b16 %v3588
      %v3966 = vunpack.c.l.b16 %v3589
      %v3967 = vunpack.c.h.b16 %v3589
      %v3968 = vunpack.c.l.b16 %v3590
      %v3969 = vunpack.c.h.b16 %v3590
      %v3970 = vunpack.c.l.b16 %v3591
      %v3971 = vunpack.c.h.b16 %v3591
      %v3972 = vunpack.c.l.b16 %v3592
      %v3973 = vunpack.c.l.b16 %v3593
      %v3974 = vunpack.c.h.b16 %v3593
      %v3975 = vunpack.c.l.b16 %v3594
      %v3976 = vunpack.c.h.b16 %v3594
      %v3977 = vunpack.c.l.b16 %v3595
      %v3978 = vunpack.c.h.b16 %v3595
      %v3979 = vunpack.c.l.b16 %v3596
      %v3980 = vunpack.c.l.b16 %v3597
      %v3981 = vunpack.c.h.b16 %v3597
      %v3982 = vunpack.c.l.b16 %v3598
      %v3983 = vunpack.c.h.b16 %v3598
      %v3984 = vunpack.c.l.b16 %v3599
      %v3985 = vunpack.c.h.b16 %v3599
      %v3986 = vunpack.c.l.b16 %v3600
      %v3987 = vunpack.c.l.b16 %v3601
      %v3988 = vunpack.c.h.b16 %v3601
      %v3989 = vunpack.c.l.b16 %v3602
      %v3990 = vunpack.c.h.b16 %v3602
      %v3991 = vunpack.c.l.b16 %v3603
      %v3992 = vunpack.c.h.b16 %v3603
      %v3993 = vunpack.c.l.b16 %v3604
      %v3994 = vpack.c.b16 %v3777, %v3770
      %v3995 = vpack.c.b16 %v3778, %v3771
      %v3996 = vpack.c.b16 %v3779, %v3772
      %v3997 = vpack.c.b16 %v3780, %v3773
      %v3998 = vpack.c.b16 %v3781, %v3774
      %v3999 = vpack.c.b16 %v3782, %v3775
      %v4000 = vpack.c.b16 %v3783, %v3776
      %v4001 = vpack.c.b16 %v3791, %v3784
      %v4002 = vpack.c.b16 %v3792, %v3785
      %v4003 = vpack.c.b16 %v3793, %v3786
      %v4004 = vpack.c.b16 %v3794, %v3787
      %v4005 = vpack.c.b16 %v3795, %v3788
      %v4006 = vpack.c.b16 %v3796, %v3789
      %v4007 = vpack.c.b16 %v3797, %v3790
      %v4008 = vpack.c.b16 %v3805, %v3798
      %v4009 = vpack.c.b16 %v3806, %v3799
      %v4010 = vpack.c.b16 %v3807, %v3800
      %v4011 = vpack.c.b16 %v3808, %v3801
      %v4012 = vpack.c.b16 %v3809, %v3802
      %v4013 = vpack.c.b16 %v3810, %v3803
      %v4014 = vpack.c.b16 %v3811, %v3804
      %v4015 = vpack.c.b16 %v3819, %v3812
      %v4016 = vpack.c.b16 %v3820, %v3813
      %v4017 = vpack.c.b16 %v3821, %v3814
      %v4018 = vpack.c.b16 %v3822, %v3815
      %v4019 = vpack.c.b16 %v3823, %v3816
      %v4020 = vpack.c.b16 %v3824, %v3817
      %v4021 = vpack.c.b16 %v3825, %v3818
      %v4022 = vpack.c.b16 %v3833, %v3826
      %v4023 = vpack.c.b16 %v3834, %v3827
      %v4024 = vpack.c.b16 %v3835, %v3828
      %v4025 = vpack.c.b16 %v3836, %v3829
      %v4026 = vpack.c.b16 %v3837, %v3830
      %v4027 = vpack.c.b16 %v3838, %v3831
      %v4028 = vpack.c.b16 %v3839, %v3832
      %v4029 = vpack.c.b16 %v3847, %v3840
      %v4030 = vpack.c.b16 %v3848, %v3841
      %v4031 = vpack.c.b16 %v3849, %v3842
      %v4032 = vpack.c.b16 %v3850, %v3843
      %v4033 = vpack.c.b16 %v3851, %v3844
      %v4034 = vpack.c.b16 %v3852, %v3845
      %v4035 = vpack.c.b16 %v3853, %v3846
      %v4036 = vpack.c.b16 %v3861, %v3854
      %v4037 = vpack.c.b16 %v3862, %v3855
      %v4038 = vpack.c.b16 %v3863, %v3856
      %v4039 = vpack.c.b16 %v3864, %v3857
      %v4040 = vpack.c.b16 %v3865, %v3858
      %v4041 = vpack.c.b16 %v3866, %v3859
      %v4042 = vpack.c.b16 %v3867, %v3860
      %v4043 = vpack.c.b16 %v3875, %v3868
      %v4044 = vpack.c.b16 %v3876, %v3869
      %v4045 = vpack.c.b16 %v3877, %v3870
      %v4046 = vpack.c.b16 %v3878, %v3871
      %v4047 = vpack.c.b16 %v3879, %v3872
      %v4048 = vpack.c.b16 %v3880, %v3873
      %v4049 = vpack.c.b16 %v3881, %v3874
      %v4050 = vpack.c.b16 %v3889, %v3882
      %v4051 = vpack.c.b16 %v3890, %v3883
      %v4052 = vpack.c.b16 %v3891, %v3884
      %v4053 = vpack.c.b16 %v3892, %v3885
      %v4054 = vpack.c.b16 %v3893, %v3886
      %v4055 = vpack.c.b16 %v3894, %v3887
      %v4056 = vpack.c.b16 %v3895, %v3888
      %v4057 = vpack.c.b16 %v3903, %v3896
      %v4058 = vpack.c.b16 %v3904, %v3897
      %v4059 = vpack.c.b16 %v3905, %v3898
      %v4060 = vpack.c.b16 %v3906, %v3899
      %v4061 = vpack.c.b16 %v3907, %v3900
      %v4062 = vpack.c.b16 %v3908, %v3901
      %v4063 = vpack.c.b16 %v3909, %v3902
      %v4064 = vpack.c.b16 %v3917, %v3910
      %v4065 = vpack.c.b16 %v3918, %v3911
      %v4066 = vpack.c.b16 %v3919, %v3912
      %v4067 = vpack.c.b16 %v3920, %v3913
      %v4068 = vpack.c.b16 %v3921, %v3914
      %v4069 = vpack.c.b16 %v3922, %v3915
      %v4070 = vpack.c.b16 %v3923, %v3916
      %v4071 = vpack.c.b16 %v3931, %v3924
      %v4072 = vpack.c.b16 %v3932, %v3925
      %v4073 = vpack.c.b16 %v3933, %v3926
      %v4074 = vpack.c.b16 %v3934, %v3927
      %v4075 = vpack.c.b16 %v3935, %v3928
      %v4076 = vpack.c.b16 %v3936, %v3929
      %v4077 = vpack.c.b16 %v3937, %v3930
      %v4078 = vpack.c.b16 %v3945, %v3938
      %v4079 = vpack.c.b16 %v3946, %v3939
      %v4080 = vpack.c.b16 %v3947, %v3940
      %v4081 = vpack.c.b16 %v3948, %v3941
      %v4082 = vpack.c.b16 %v3949, %v3942
      %v4083 = vpack.c.b16 %v3950, %v3943
      %v4084 = vpack.c.b16 %v3951, %v3944
      %v4085 = vpack.c.b16 %v3959, %v3952
      %v4086 = vpack.c.b16 %v3960, %v3953
      %v4087 = vpack.c.b16 %v3961, %v3954
      %v4088 = vpack.c.b16 %v3962, %v3955
      %v4089 = vpack.c.b16 %v3963, %v3956
      %v4090 = vpack.c.b16 %v3964, %v3957
      %v4091 = vpack.c.b16 %v3965, %v3958
      %v4092 = vpack.c.b16 %v3973, %v3966
      %v4093 = vpack.c.b16 %v3974, %v3967
      %v4094 = vpack.c.b16 %v3975, %v3968
      %v4095 = vpack.c.b16 %v3976, %v3969
      %v4096 = vpack.c.b16 %v3977, %v3970
      %v4097 = vpack.c.b16 %v3978, %v3971
      %v4098 = vpack.c.b16 %v3979, %v3972
      %v4099 = vpack.c.b16 %v3987, %v3980
      %v4100 = vpack.c.b16 %v3988, %v3981
      %v4101 = vpack.c.b16 %v3989, %v3982
      %v4102 = vpack.c.b16 %v3990, %v3983
      %v4103 = vpack.c.b16 %v3991, %v3984
      %v4104 = vpack.c.b16 %v3992, %v3985
      %v4105 = vpack.c.b16 %v3993, %v3986
      %4218 = vmatprep.subr.bf16.mxu0 %v4044
      %4219 = vmatpush1.bf16.msra.mxu0 %v4043
      %4220 = vmatprep.subr.bf16.mxu0 %v4037
      %4221 = vmatpush1.bf16.msra.mxu0 %v4036
      %4222 = vmatprep.subr.bf16.mxu0 %v4030
      %4223 = vmatpush1.bf16.msra.mxu0 %v4029
      %4224 = vmatprep.subr.bf16.mxu0 %v4023
      %4225 = vmatpush1.bf16.msra.mxu0 %v4022
      %4226 = vmatprep.subr.bf16.mxu0 %v4016
      %4227 = vmatpush1.bf16.msra.mxu0 %v4015
      %4228 = vmatprep.subr.bf16.mxu0 %v4009
      %4229 = vmatpush1.bf16.msra.mxu0 %v4008
      %4230 = vmatprep.subr.bf16.mxu0 %v4002
      %4231 = vmatpush1.bf16.msra.mxu0 %v4001
      %4232 = vmatprep.subr.bf16.mxu0 %v3995
      %4233 = vmatpush1.bf16.msra.mxu0 %v3994
      %4234 = vmatprep.subr.bf16.mxu0 %v4100
      %4235 = vmatpush2.bf16.msra.mxu0 %v4099
      %4236 = vmatprep.subr.bf16.mxu0 %v4093
      %4237 = vmatpush2.bf16.msra.mxu0 %v4092
      %4238 = vmatprep.subr.bf16.mxu0 %v4086
      %4239 = vmatpush2.bf16.msra.mxu0 %v4085
      %4240 = vmatprep.subr.bf16.mxu0 %v4079
      %4241 = vmatpush2.bf16.msra.mxu0 %v4078
      %4242 = vmatprep.subr.bf16.mxu0 %v4072
      %4243 = vmatpush2.bf16.msra.mxu0 %v4071
      %4244 = vmatprep.subr.bf16.mxu0 %v4065
      %4245 = vmatpush2.bf16.msra.mxu0 %v4064
      %4246 = vmatprep.subr.bf16.mxu0 %v4058
      %4247 = vmatpush2.bf16.msra.mxu0 %v4057
      %4248 = vmatprep.subr.bf16.mxu0 %v4051
      %4249 = vmatpush2.bf16.msra.mxu0 %v4050
      %4250 = vmatprep.mubr.bf16.mxu0 %v3462
      %4251 = vmatmul.mubr.bf16.gmra.mxu0 %v3461
      %v4252 = vpop.f32.mrf.mxu0
      %v4253 = vadd.f32 %v3610, %v4252
      %v4254 = vpop.f32.mrf.mxu0
      %v4255 = vadd.f32 %v3614, %v4254
      %v4256 = vpop.f32.mrf.mxu0
      %v4257 = vadd.f32 %v3610, %v4256
      %v4258 = vpop.f32.mrf.mxu0
      %v4259 = vadd.f32 %v3614, %v4258
      %4260 = vmatprep.mubr.bf16.mxu0 %v3464
      %4261 = vmatmul.mubr.bf16.gmra.mxu0 %v3463
      %v4262 = vpop.f32.mrf.mxu0
      %v4263 = vadd.f32 %v3610, %v4262
      %v4264 = vpop.f32.mrf.mxu0
      %v4265 = vadd.f32 %v3614, %v4264
      %v4266 = vpop.f32.mrf.mxu0
      %v4267 = vadd.f32 %v3610, %v4266
      %v4268 = vpop.f32.mrf.mxu0
      %v4269 = vadd.f32 %v3614, %v4268
      %4270 = vmatprep.mubr.bf16.mxu0 %v3466
      %4271 = vmatmul.mubr.bf16.gmra.mxu0 %v3465
      %v4272 = vpop.f32.mrf.mxu0
      %v4273 = vadd.f32 %v3610, %v4272
      %v4274 = vpop.f32.mrf.mxu0
      %v4275 = vadd.f32 %v3614, %v4274
      %v4276 = vpop.f32.mrf.mxu0
      %v4277 = vadd.f32 %v3610, %v4276
      %v4278 = vpop.f32.mrf.mxu0
      %v4279 = vadd.f32 %v3614, %v4278
      %4280 = vmatprep.mubr.bf16.mxu0 %v3468
      %4281 = vmatmul.mubr.bf16.gmra.mxu0 %v3467
      %v4282 = vpop.f32.mrf.mxu0
      %v4283 = vadd.f32 %v3610, %v4282
      %v4284 = vpop.f32.mrf.mxu0
      %v4285 = vadd.f32 %v3614, %v4284
      %v4286 = vpop.f32.mrf.mxu0
      %v4287 = vadd.f32 %v3610, %v4286
      %v4288 = vpop.f32.mrf.mxu0
      %v4289 = vadd.f32 %v3614, %v4288
      %4290 = vmatprep.mubr.bf16.mxu0 %v3470
      %4291 = vmatmul.mubr.bf16.gmra.mxu0 %v3469
      %v4292 = vpop.f32.mrf.mxu0
      %v4293 = vadd.f32 %v3610, %v4292
      %v4294 = vpop.f32.mrf.mxu0
      %v4295 = vadd.f32 %v3614, %v4294
      %v4296 = vpop.f32.mrf.mxu0
      %v4297 = vadd.f32 %v3610, %v4296
      %v4298 = vpop.f32.mrf.mxu0
      %v4299 = vadd.f32 %v3614, %v4298
      %4300 = vmatprep.mubr.bf16.mxu0 %v3472
      %4301 = vmatmul.mubr.bf16.gmra.mxu0 %v3471
      %v4302 = vpop.f32.mrf.mxu0
      %v4303 = vadd.f32 %v3610, %v4302
      %v4304 = vpop.f32.mrf.mxu0
      %v4305 = vadd.f32 %v3614, %v4304
      %v4306 = vpop.f32.mrf.mxu0
      %v4307 = vadd.f32 %v3610, %v4306
      %v4308 = vpop.f32.mrf.mxu0
      %v4309 = vadd.f32 %v3614, %v4308
      %4310 = vmatprep.mubr.bf16.mxu0 %v3474
      %4311 = vmatmul.mubr.bf16.gmra.mxu0 %v3473
      %v4312 = vpop.f32.mrf.mxu0
      %v4313 = vadd.f32 %v3610, %v4312
      %v4314 = vpop.f32.mrf.mxu0
      %v4315 = vadd.f32 %v3614, %v4314
      %v4316 = vpop.f32.mrf.mxu0
      %v4317 = vadd.f32 %v3610, %v4316
      %v4318 = vpop.f32.mrf.mxu0
      %v4319 = vadd.f32 %v3614, %v4318
      %4320 = vmatprep.mubr.bf16.mxu0 %v3476
      %4321 = vmatmul.mubr.bf16.gmra.mxu0 %v3475
      %v4322 = vpop.f32.mrf.mxu0
      %v4323 = vadd.f32 %v3610, %v4322
      %v4324 = vpop.f32.mrf.mxu0
      %v4325 = vadd.f32 %v3614, %v4324
      %v4326 = vpop.f32.mrf.mxu0
      %v4327 = vadd.f32 %v3610, %v4326
      %v4328 = vpop.f32.mrf.mxu0
      %v4329 = vadd.f32 %v3614, %v4328
      %4330 = vdwg.mxu0
      %4331 = vmatprep.subr.bf16.mxu0 %v4046
      %4332 = vmatpush1.bf16.msra.mxu0 %v4045
      %4333 = vmatprep.subr.bf16.mxu0 %v4039
      %4334 = vmatpush1.bf16.msra.mxu0 %v4038
      %4335 = vmatprep.subr.bf16.mxu0 %v4032
      %4336 = vmatpush1.bf16.msra.mxu0 %v4031
      %4337 = vmatprep.subr.bf16.mxu0 %v4025
      %4338 = vmatpush1.bf16.msra.mxu0 %v4024
      %4339 = vmatprep.subr.bf16.mxu0 %v4018
      %4340 = vmatpush1.bf16.msra.mxu0 %v4017
      %4341 = vmatprep.subr.bf16.mxu0 %v4011
      %4342 = vmatpush1.bf16.msra.mxu0 %v4010
      %4343 = vmatprep.subr.bf16.mxu0 %v4004
      %4344 = vmatpush1.bf16.msra.mxu0 %v4003
      %4345 = vmatprep.subr.bf16.mxu0 %v3997
      %4346 = vmatpush1.bf16.msra.mxu0 %v3996
      %4347 = vmatprep.subr.bf16.mxu0 %v4102
      %4348 = vmatpush2.bf16.msra.mxu0 %v4101
      %4349 = vmatprep.subr.bf16.mxu0 %v4095
      %4350 = vmatpush2.bf16.msra.mxu0 %v4094
      %4351 = vmatprep.subr.bf16.mxu0 %v4088
      %4352 = vmatpush2.bf16.msra.mxu0 %v4087
      %4353 = vmatprep.subr.bf16.mxu0 %v4081
      %4354 = vmatpush2.bf16.msra.mxu0 %v4080
      %4355 = vmatprep.subr.bf16.mxu0 %v4074
      %4356 = vmatpush2.bf16.msra.mxu0 %v4073
      %4357 = vmatprep.subr.bf16.mxu0 %v4067
      %4358 = vmatpush2.bf16.msra.mxu0 %v4066
      %4359 = vmatprep.subr.bf16.mxu0 %v4060
      %4360 = vmatpush2.bf16.msra.mxu0 %v4059
      %4361 = vmatprep.subr.bf16.mxu0 %v4053
      %4362 = vmatpush2.bf16.msra.mxu0 %v4052
      %4363 = vmatprep.mubr.bf16.mxu0 %v3462
      %4364 = vmatmul.mubr.bf16.gmra.mxu0 %v3461
      %v4365 = vpop.f32.mrf.mxu0
      %v4366 = vadd.f32 %v3618, %v4365
      %v4367 = vpop.f32.mrf.mxu0
      %v4368 = vadd.f32 %v3622, %v4367
      %v4369 = vpop.f32.mrf.mxu0
      %v4370 = vadd.f32 %v3618, %v4369
      %v4371 = vpop.f32.mrf.mxu0
      %v4372 = vadd.f32 %v3622, %v4371
      %4373 = vmatprep.mubr.bf16.mxu0 %v3464
      %4374 = vmatmul.mubr.bf16.gmra.mxu0 %v3463
      %v4375 = vpop.f32.mrf.mxu0
      %v4376 = vadd.f32 %v3618, %v4375
      %v4377 = vpop.f32.mrf.mxu0
      %v4378 = vadd.f32 %v3622, %v4377
      %v4379 = vpop.f32.mrf.mxu0
      %v4380 = vadd.f32 %v3618, %v4379
      %v4381 = vpop.f32.mrf.mxu0
      %v4382 = vadd.f32 %v3622, %v4381
      %4383 = vmatprep.mubr.bf16.mxu0 %v3466
      %4384 = vmatmul.mubr.bf16.gmra.mxu0 %v3465
      %v4385 = vpop.f32.mrf.mxu0
      %v4386 = vadd.f32 %v3618, %v4385
      %v4387 = vpop.f32.mrf.mxu0
      %v4388 = vadd.f32 %v3622, %v4387
      %v4389 = vpop.f32.mrf.mxu0
      %v4390 = vadd.f32 %v3618, %v4389
      %v4391 = vpop.f32.mrf.mxu0
      %v4392 = vadd.f32 %v3622, %v4391
      %4393 = vmatprep.mubr.bf16.mxu0 %v3468
      %4394 = vmatmul.mubr.bf16.gmra.mxu0 %v3467
      %v4395 = vpop.f32.mrf.mxu0
      %v4396 = vadd.f32 %v3618, %v4395
      %v4397 = vpop.f32.mrf.mxu0
      %v4398 = vadd.f32 %v3622, %v4397
      %v4399 = vpop.f32.mrf.mxu0
      %v4400 = vadd.f32 %v3618, %v4399
      %v4401 = vpop.f32.mrf.mxu0
      %v4402 = vadd.f32 %v3622, %v4401
      %4403 = vmatprep.mubr.bf16.mxu0 %v3470
      %4404 = vmatmul.mubr.bf16.gmra.mxu0 %v3469
      %v4405 = vpop.f32.mrf.mxu0
      %v4406 = vadd.f32 %v3618, %v4405
      %v4407 = vpop.f32.mrf.mxu0
      %v4408 = vadd.f32 %v3622, %v4407
      %v4409 = vpop.f32.mrf.mxu0
      %v4410 = vadd.f32 %v3618, %v4409
      %v4411 = vpop.f32.mrf.mxu0
      %v4412 = vadd.f32 %v3622, %v4411
      %4413 = vmatprep.mubr.bf16.mxu0 %v3472
      %4414 = vmatmul.mubr.bf16.gmra.mxu0 %v3471
      %v4415 = vpop.f32.mrf.mxu0
      %v4416 = vadd.f32 %v3618, %v4415
      %v4417 = vpop.f32.mrf.mxu0
      %v4418 = vadd.f32 %v3622, %v4417
      %v4419 = vpop.f32.mrf.mxu0
      %v4420 = vadd.f32 %v3618, %v4419
      %v4421 = vpop.f32.mrf.mxu0
      %v4422 = vadd.f32 %v3622, %v4421
      %4423 = vmatprep.mubr.bf16.mxu0 %v3474
      %4424 = vmatmul.mubr.bf16.gmra.mxu0 %v3473
      %v4425 = vpop.f32.mrf.mxu0
      %v4426 = vadd.f32 %v3618, %v4425
      %v4427 = vpop.f32.mrf.mxu0
      %v4428 = vadd.f32 %v3622, %v4427
      %v4429 = vpop.f32.mrf.mxu0
      %v4430 = vadd.f32 %v3618, %v4429
      %v4431 = vpop.f32.mrf.mxu0
      %v4432 = vadd.f32 %v3622, %v4431
      %4433 = vmatprep.mubr.bf16.mxu0 %v3476
      %4434 = vmatmul.mubr.bf16.gmra.mxu0 %v3475
      %v4435 = vpop.f32.mrf.mxu0
      %v4436 = vadd.f32 %v3618, %v4435
      %v4437 = vpop.f32.mrf.mxu0
      %v4438 = vadd.f32 %v3622, %v4437
      %v4439 = vpop.f32.mrf.mxu0
      %v4440 = vadd.f32 %v3618, %v4439
      %v4441 = vpop.f32.mrf.mxu0
      %v4442 = vadd.f32 %v3622, %v4441
      %4443 = vdwg.mxu0
      %4444 = vmatprep.subr.bf16.mxu0 %v4048
      %4445 = vmatpush1.bf16.msra.mxu0 %v4047
      %4446 = vmatprep.subr.bf16.mxu0 %v4041
      %4447 = vmatpush1.bf16.msra.mxu0 %v4040
      %4448 = vmatprep.subr.bf16.mxu0 %v4034
      %4449 = vmatpush1.bf16.msra.mxu0 %v4033
      %4450 = vmatprep.subr.bf16.mxu0 %v4027
      %4451 = vmatpush1.bf16.msra.mxu0 %v4026
      %4452 = vmatprep.subr.bf16.mxu0 %v4020
      %4453 = vmatpush1.bf16.msra.mxu0 %v4019
      %4454 = vmatprep.subr.bf16.mxu0 %v4013
      %4455 = vmatpush1.bf16.msra.mxu0 %v4012
      %4456 = vmatprep.subr.bf16.mxu0 %v4006
      %4457 = vmatpush1.bf16.msra.mxu0 %v4005
      %4458 = vmatprep.subr.bf16.mxu0 %v3999
      %4459 = vmatpush1.bf16.msra.mxu0 %v3998
      %4460 = vmatprep.subr.bf16.mxu0 %v4104
      %4461 = vmatpush2.bf16.msra.mxu0 %v4103
      %4462 = vmatprep.subr.bf16.mxu0 %v4097
      %4463 = vmatpush2.bf16.msra.mxu0 %v4096
      %4464 = vmatprep.subr.bf16.mxu0 %v4090
      %4465 = vmatpush2.bf16.msra.mxu0 %v4089
      %4466 = vmatprep.subr.bf16.mxu0 %v4083
      %4467 = vmatpush2.bf16.msra.mxu0 %v4082
      %4468 = vmatprep.subr.bf16.mxu0 %v4076
      %4469 = vmatpush2.bf16.msra.mxu0 %v4075
      %4470 = vmatprep.subr.bf16.mxu0 %v4069
      %4471 = vmatpush2.bf16.msra.mxu0 %v4068
      %4472 = vmatprep.subr.bf16.mxu0 %v4062
      %4473 = vmatpush2.bf16.msra.mxu0 %v4061
      %4474 = vmatprep.subr.bf16.mxu0 %v4055
      %4475 = vmatpush2.bf16.msra.mxu0 %v4054
      %4476 = vmatprep.mubr.bf16.mxu0 %v3462
      %4477 = vmatmul.mubr.bf16.gmra.mxu0 %v3461
      %v4478 = vpop.f32.mrf.mxu0
      %v4479 = vadd.f32 %v3626, %v4478
      %v4480 = vpop.f32.mrf.mxu0
      %v4481 = vadd.f32 %v3630, %v4480
      %v4482 = vpop.f32.mrf.mxu0
      %v4483 = vadd.f32 %v3626, %v4482
      %v4484 = vpop.f32.mrf.mxu0
      %v4485 = vadd.f32 %v3630, %v4484
      %4486 = vmatprep.mubr.bf16.mxu0 %v3464
      %4487 = vmatmul.mubr.bf16.gmra.mxu0 %v3463
      %v4488 = vpop.f32.mrf.mxu0
      %v4489 = vadd.f32 %v3626, %v4488
      %v4490 = vpop.f32.mrf.mxu0
      %v4491 = vadd.f32 %v3630, %v4490
      %v4492 = vpop.f32.mrf.mxu0
      %v4493 = vadd.f32 %v3626, %v4492
      %v4494 = vpop.f32.mrf.mxu0
      %v4495 = vadd.f32 %v3630, %v4494
      %4496 = vmatprep.mubr.bf16.mxu0 %v3466
      %4497 = vmatmul.mubr.bf16.gmra.mxu0 %v3465
      %v4498 = vpop.f32.mrf.mxu0
      %v4499 = vadd.f32 %v3626, %v4498
      %v4500 = vpop.f32.mrf.mxu0
      %v4501 = vadd.f32 %v3630, %v4500
      %v4502 = vpop.f32.mrf.mxu0
      %v4503 = vadd.f32 %v3626, %v4502
      %v4504 = vpop.f32.mrf.mxu0
      %v4505 = vadd.f32 %v3630, %v4504
      %4506 = vmatprep.mubr.bf16.mxu0 %v3468
      %4507 = vmatmul.mubr.bf16.gmra.mxu0 %v3467
      %v4508 = vpop.f32.mrf.mxu0
      %v4509 = vadd.f32 %v3626, %v4508
      %v4510 = vpop.f32.mrf.mxu0
      %v4511 = vadd.f32 %v3630, %v4510
      %v4512 = vpop.f32.mrf.mxu0
      %v4513 = vadd.f32 %v3626, %v4512
      %v4514 = vpop.f32.mrf.mxu0
      %v4515 = vadd.f32 %v3630, %v4514
      %4516 = vmatprep.mubr.bf16.mxu0 %v3470
      %4517 = vmatmul.mubr.bf16.gmra.mxu0 %v3469
      %v4518 = vpop.f32.mrf.mxu0
      %v4519 = vadd.f32 %v3626, %v4518
      %v4520 = vpop.f32.mrf.mxu0
      %v4521 = vadd.f32 %v3630, %v4520
      %v4522 = vpop.f32.mrf.mxu0
      %v4523 = vadd.f32 %v3626, %v4522
      %v4524 = vpop.f32.mrf.mxu0
      %v4525 = vadd.f32 %v3630, %v4524
      %4526 = vmatprep.mubr.bf16.mxu0 %v3472
      %4527 = vmatmul.mubr.bf16.gmra.mxu0 %v3471
      %v4528 = vpop.f32.mrf.mxu0
      %v4529 = vadd.f32 %v3626, %v4528
      %v4530 = vpop.f32.mrf.mxu0
      %v4531 = vadd.f32 %v3630, %v4530
      %v4532 = vpop.f32.mrf.mxu0
      %v4533 = vadd.f32 %v3626, %v4532
      %v4534 = vpop.f32.mrf.mxu0
      %v4535 = vadd.f32 %v3630, %v4534
      %4536 = vmatprep.mubr.bf16.mxu0 %v3474
      %4537 = vmatmul.mubr.bf16.gmra.mxu0 %v3473
      %v4538 = vpop.f32.mrf.mxu0
      %v4539 = vadd.f32 %v3626, %v4538
      %v4540 = vpop.f32.mrf.mxu0
      %v4541 = vadd.f32 %v3630, %v4540
      %v4542 = vpop.f32.mrf.mxu0
      %v4543 = vadd.f32 %v3626, %v4542
      %v4544 = vpop.f32.mrf.mxu0
      %v4545 = vadd.f32 %v3630, %v4544
      %4546 = vmatprep.mubr.bf16.mxu0 %v3476
      %4547 = vmatmul.mubr.bf16.gmra.mxu0 %v3475
      %v4548 = vpop.f32.mrf.mxu0
      %v4549 = vadd.f32 %v3626, %v4548
      %v4550 = vpop.f32.mrf.mxu0
      %v4551 = vadd.f32 %v3630, %v4550
      %v4552 = vpop.f32.mrf.mxu0
      %v4553 = vadd.f32 %v3626, %v4552
      %v4554 = vpop.f32.mrf.mxu0
      %v4555 = vadd.f32 %v3630, %v4554
      %4556 = vdwg.mxu0
      %4557 = vmatprep.subr.bf16.mxu0 0
      %4558 = vmatpush1.bf16.msra.mxu0 %v4049
      %4559 = vmatprep.subr.bf16.mxu0 0
      %4560 = vmatpush1.bf16.msra.mxu0 %v4042
      %4561 = vmatprep.subr.bf16.mxu0 0
      %4562 = vmatpush1.bf16.msra.mxu0 %v4035
      %4563 = vmatprep.subr.bf16.mxu0 0
      %4564 = vmatpush1.bf16.msra.mxu0 %v4028
      %4565 = vmatprep.subr.bf16.mxu0 0
      %4566 = vmatpush1.bf16.msra.mxu0 %v4021
      %4567 = vmatprep.subr.bf16.mxu0 0
      %4568 = vmatpush1.bf16.msra.mxu0 %v4014
      %4569 = vmatprep.subr.bf16.mxu0 0
      %4570 = vmatpush1.bf16.msra.mxu0 %v4007
      %4571 = vmatprep.subr.bf16.mxu0 0
      %4572 = vmatpush1.bf16.msra.mxu0 %v4000
      %4573 = vmatprep.subr.bf16.mxu0 0
      %4574 = vmatpush2.bf16.msra.mxu0 %v4105
      %4575 = vmatprep.subr.bf16.mxu0 0
      %4576 = vmatpush2.bf16.msra.mxu0 %v4098
      %4577 = vmatprep.subr.bf16.mxu0 0
      %4578 = vmatpush2.bf16.msra.mxu0 %v4091
      %4579 = vmatprep.subr.bf16.mxu0 0
      %4580 = vmatpush2.bf16.msra.mxu0 %v4084
      %4581 = vmatprep.subr.bf16.mxu0 0
      %4582 = vmatpush2.bf16.msra.mxu0 %v4077
      %4583 = vmatprep.subr.bf16.mxu0 0
      %4584 = vmatpush2.bf16.msra.mxu0 %v4070
      %4585 = vmatprep.subr.bf16.mxu0 0
      %4586 = vmatpush2.bf16.msra.mxu0 %v4063
      %4587 = vmatprep.subr.bf16.mxu0 0
      %4588 = vmatpush2.bf16.msra.mxu0 %v4056
      %4589 = vmatprep.mubr.bf16.mxu0 %v3462
      %4590 = vmatmul.mubr.bf16.gmra.mxu0 %v3461
      %v4591 = vpop.f32.mrf.mxu0
      %v4592 = vadd.f32 %v3634, %v4591
      %v4593 = vpop.f32.mrf.mxu0
      %v4594 = vpop.f32.mrf.mxu0
      %v4595 = vadd.f32 %v3634, %v4594
      %v4596 = vpop.f32.mrf.mxu0
      %4597 = vmatprep.mubr.bf16.mxu0 %v3464
      %4598 = vmatmul.mubr.bf16.gmra.mxu0 %v3463
      %v4599 = vpop.f32.mrf.mxu0
      %v4600 = vadd.f32 %v3634, %v4599
      %v4601 = vpop.f32.mrf.mxu0
      %v4602 = vpop.f32.mrf.mxu0
      %v4603 = vadd.f32 %v3634, %v4602
      %v4604 = vpop.f32.mrf.mxu0
      %4605 = vmatprep.mubr.bf16.mxu0 %v3466
      %4606 = vmatmul.mubr.bf16.gmra.mxu0 %v3465
      %v4607 = vpop.f32.mrf.mxu0
      %v4608 = vadd.f32 %v3634, %v4607
      %v4609 = vpop.f32.mrf.mxu0
      %v4610 = vpop.f32.mrf.mxu0
      %v4611 = vadd.f32 %v3634, %v4610
      %v4612 = vpop.f32.mrf.mxu0
      %4613 = vmatprep.mubr.bf16.mxu0 %v3468
      %4614 = vmatmul.mubr.bf16.gmra.mxu0 %v3467
      %v4615 = vpop.f32.mrf.mxu0
      %v4616 = vadd.f32 %v3634, %v4615
      %v4617 = vpop.f32.mrf.mxu0
      %v4618 = vpop.f32.mrf.mxu0
      %v4619 = vadd.f32 %v3634, %v4618
      %v4620 = vpop.f32.mrf.mxu0
      %4621 = vmatprep.mubr.bf16.mxu0 %v3470
      %4622 = vmatmul.mubr.bf16.gmra.mxu0 %v3469
      %v4623 = vpop.f32.mrf.mxu0
      %v4624 = vadd.f32 %v3634, %v4623
      %v4625 = vpop.f32.mrf.mxu0
      %v4626 = vpop.f32.mrf.mxu0
      %v4627 = vadd.f32 %v3634, %v4626
      %v4628 = vpop.f32.mrf.mxu0
      %4629 = vmatprep.mubr.bf16.mxu0 %v3472
      %4630 = vmatmul.mubr.bf16.gmra.mxu0 %v3471
      %v4631 = vpop.f32.mrf.mxu0
      %v4632 = vadd.f32 %v3634, %v4631
      %v4633 = vpop.f32.mrf.mxu0
      %v4634 = vpop.f32.mrf.mxu0
      %v4635 = vadd.f32 %v3634, %v4634
      %v4636 = vpop.f32.mrf.mxu0
      %4637 = vmatprep.mubr.bf16.mxu0 %v3474
      %4638 = vmatmul.mubr.bf16.gmra.mxu0 %v3473
      %v4639 = vpop.f32.mrf.mxu0
      %v4640 = vadd.f32 %v3634, %v4639
      %v4641 = vpop.f32.mrf.mxu0
      %v4642 = vpop.f32.mrf.mxu0
      %v4643 = vadd.f32 %v3634, %v4642
      %v4644 = vpop.f32.mrf.mxu0
      %4645 = vmatprep.mubr.bf16.mxu0 %v3476
      %4646 = vmatmul.mubr.bf16.gmra.mxu0 %v3475
      %v4647 = vpop.f32.mrf.mxu0
      %v4648 = vadd.f32 %v3634, %v4647
      %v4649 = vpop.f32.mrf.mxu0
      %v4650 = vpop.f32.mrf.mxu0
      %v4651 = vadd.f32 %v3634, %v4650
      %v4652 = vpop.f32.mrf.mxu0
      %4653 = vdwg.mxu0
      %v4654 = vsub.f32 0.0, %v4253
      %v4655 = vsub.f32 0.0, %v4255
      %v4656 = vsub.f32 0.0, %v4366
      %v4657 = vsub.f32 0.0, %v4368
      %v4658 = vsub.f32 0.0, %v4479
      %v4659 = vsub.f32 0.0, %v4481
      %v4660 = vsub.f32 0.0, %v4592
      %v4661 = vsub.f32 0.0, %v4257
      %v4662 = vsub.f32 0.0, %v4259
      %v4663 = vsub.f32 0.0, %v4370
      %v4664 = vsub.f32 0.0, %v4372
      %v4665 = vsub.f32 0.0, %v4483
      %v4666 = vsub.f32 0.0, %v4485
      %v4667 = vsub.f32 0.0, %v4595
      %v4668 = vsub.f32 0.0, %v4263
      %v4669 = vsub.f32 0.0, %v4265
      %v4670 = vsub.f32 0.0, %v4376
      %v4671 = vsub.f32 0.0, %v4378
      %v4672 = vsub.f32 0.0, %v4489
      %v4673 = vsub.f32 0.0, %v4491
      %v4674 = vsub.f32 0.0, %v4600
      %v4675 = vsub.f32 0.0, %v4267
      %v4676 = vsub.f32 0.0, %v4269
      %v4677 = vsub.f32 0.0, %v4380
      %v4678 = vsub.f32 0.0, %v4382
      %v4679 = vsub.f32 0.0, %v4493
      %v4680 = vsub.f32 0.0, %v4495
      %v4681 = vsub.f32 0.0, %v4603
      %v4682 = vsub.f32 0.0, %v4273
      %v4683 = vsub.f32 0.0, %v4275
      %v4684 = vsub.f32 0.0, %v4386
      %v4685 = vsub.f32 0.0, %v4388
      %v4686 = vsub.f32 0.0, %v4499
      %v4687 = vsub.f32 0.0, %v4501
      %v4688 = vsub.f32 0.0, %v4608
      %v4689 = vsub.f32 0.0, %v4277
      %v4690 = vsub.f32 0.0, %v4279
      %v4691 = vsub.f32 0.0, %v4390
      %v4692 = vsub.f32 0.0, %v4392
      %v4693 = vsub.f32 0.0, %v4503
      %v4694 = vsub.f32 0.0, %v4505
      %v4695 = vsub.f32 0.0, %v4611
      %v4696 = vsub.f32 0.0, %v4283
      %v4697 = vsub.f32 0.0, %v4285
      %v4698 = vsub.f32 0.0, %v4396
      %v4699 = vsub.f32 0.0, %v4398
      %v4700 = vsub.f32 0.0, %v4509
      %v4701 = vsub.f32 0.0, %v4511
      %v4702 = vsub.f32 0.0, %v4616
      %v4703 = vsub.f32 0.0, %v4287
      %v4704 = vsub.f32 0.0, %v4289
      %v4705 = vsub.f32 0.0, %v4400
      %v4706 = vsub.f32 0.0, %v4402
      %v4707 = vsub.f32 0.0, %v4513
      %v4708 = vsub.f32 0.0, %v4515
      %v4709 = vsub.f32 0.0, %v4619
      %v4710 = vsub.f32 0.0, %v4293
      %v4711 = vsub.f32 0.0, %v4295
      %v4712 = vsub.f32 0.0, %v4406
      %v4713 = vsub.f32 0.0, %v4408
      %v4714 = vsub.f32 0.0, %v4519
      %v4715 = vsub.f32 0.0, %v4521
      %v4716 = vsub.f32 0.0, %v4624
      %v4717 = vsub.f32 0.0, %v4297
      %v4718 = vsub.f32 0.0, %v4299
      %v4719 = vsub.f32 0.0, %v4410
      %v4720 = vsub.f32 0.0, %v4412
      %v4721 = vsub.f32 0.0, %v4523
      %v4722 = vsub.f32 0.0, %v4525
      %v4723 = vsub.f32 0.0, %v4627
      %v4724 = vsub.f32 0.0, %v4303
      %v4725 = vsub.f32 0.0, %v4305
      %v4726 = vsub.f32 0.0, %v4416
      %v4727 = vsub.f32 0.0, %v4418
      %v4728 = vsub.f32 0.0, %v4529
      %v4729 = vsub.f32 0.0, %v4531
      %v4730 = vsub.f32 0.0, %v4632
      %v4731 = vsub.f32 0.0, %v4307
      %v4732 = vsub.f32 0.0, %v4309
      %v4733 = vsub.f32 0.0, %v4420
      %v4734 = vsub.f32 0.0, %v4422
      %v4735 = vsub.f32 0.0, %v4533
      %v4736 = vsub.f32 0.0, %v4535
      %v4737 = vsub.f32 0.0, %v4635
      %v4738 = vsub.f32 0.0, %v4313
      %v4739 = vsub.f32 0.0, %v4315
      %v4740 = vsub.f32 0.0, %v4426
      %v4741 = vsub.f32 0.0, %v4428
      %v4742 = vsub.f32 0.0, %v4539
      %v4743 = vsub.f32 0.0, %v4541
      %v4744 = vsub.f32 0.0, %v4640
      %v4745 = vsub.f32 0.0, %v4317
      %v4746 = vsub.f32 0.0, %v4319
      %v4747 = vsub.f32 0.0, %v4430
      %v4748 = vsub.f32 0.0, %v4432
      %v4749 = vsub.f32 0.0, %v4543
      %v4750 = vsub.f32 0.0, %v4545
      %v4751 = vsub.f32 0.0, %v4643
      %v4752 = vsub.f32 0.0, %v4323
      %v4753 = vsub.f32 0.0, %v4325
      %v4754 = vsub.f32 0.0, %v4436
      %v4755 = vsub.f32 0.0, %v4438
      %v4756 = vsub.f32 0.0, %v4549
      %v4757 = vsub.f32 0.0, %v4551
      %v4758 = vsub.f32 0.0, %v4648
      %v4759 = vsub.f32 0.0, %v4327
      %v4760 = vsub.f32 0.0, %v4329
      %v4761 = vsub.f32 0.0, %v4440
      %v4762 = vsub.f32 0.0, %v4442
      %v4763 = vsub.f32 0.0, %v4553
      %v4764 = vsub.f32 0.0, %v4555
      %v4765 = vsub.f32 0.0, %v4651
      %v4766 = vmul.f32 %v4654, 1.442695
      %v4767 = vpow.pop %v4766
      %v4768 = vmul.f32 %v4655, 1.442695
      %v4769 = vpow.pop %v4768
      %v4770 = vmul.f32 %v4656, 1.442695
      %v4771 = vpow.pop %v4770
      %v4772 = vmul.f32 %v4657, 1.442695
      %v4773 = vpow.pop %v4772
      %v4774 = vmul.f32 %v4658, 1.442695
      %v4775 = vpow.pop %v4774
      %v4776 = vmul.f32 %v4659, 1.442695
      %v4777 = vpow.pop %v4776
      %v4778 = vmul.f32 %v4660, 1.442695
      %v4779 = vpow.pop %v4778
      %v4780 = vmul.f32 %v4661, 1.442695
      %v4781 = vpow.pop %v4780
      %v4782 = vmul.f32 %v4662, 1.442695
      %v4783 = vpow.pop %v4782
      %v4784 = vmul.f32 %v4663, 1.442695
      %v4785 = vpow.pop %v4784
      %v4786 = vmul.f32 %v4664, 1.442695
      %v4787 = vpow.pop %v4786
      %v4788 = vmul.f32 %v4665, 1.442695
      %v4789 = vpow.pop %v4788
      %v4790 = vmul.f32 %v4666, 1.442695
      %v4791 = vpow.pop %v4790
      %v4792 = vmul.f32 %v4667, 1.442695
      %v4793 = vpow.pop %v4792
      %v4794 = vmul.f32 %v4668, 1.442695
      %v4795 = vpow.pop %v4794
      %v4796 = vmul.f32 %v4669, 1.442695
      %v4797 = vpow.pop %v4796
      %v4798 = vmul.f32 %v4670, 1.442695
      %v4799 = vpow.pop %v4798
      %v4800 = vmul.f32 %v4671, 1.442695
      %v4801 = vpow.pop %v4800
      %v4802 = vmul.f32 %v4672, 1.442695
      %v4803 = vpow.pop %v4802
      %v4804 = vmul.f32 %v4673, 1.442695
      %v4805 = vpow.pop %v4804
      %v4806 = vmul.f32 %v4674, 1.442695
      %v4807 = vpow.pop %v4806
      %v4808 = vmul.f32 %v4675, 1.442695
      %v4809 = vpow.pop %v4808
      %v4810 = vmul.f32 %v4676, 1.442695
      %v4811 = vpow.pop %v4810
      %v4812 = vmul.f32 %v4677, 1.442695
      %v4813 = vpow.pop %v4812
      %v4814 = vmul.f32 %v4678, 1.442695
      %v4815 = vpow.pop %v4814
      %v4816 = vmul.f32 %v4679, 1.442695
      %v4817 = vpow.pop %v4816
      %v4818 = vmul.f32 %v4680, 1.442695
      %v4819 = vpow.pop %v4818
      %v4820 = vmul.f32 %v4681, 1.442695
      %v4821 = vpow.pop %v4820
      %v4822 = vmul.f32 %v4682, 1.442695
      %v4823 = vpow.pop %v4822
      %v4824 = vmul.f32 %v4683, 1.442695
      %v4825 = vpow.pop %v4824
      %v4826 = vmul.f32 %v4684, 1.442695
      %v4827 = vpow.pop %v4826
      %v4828 = vmul.f32 %v4685, 1.442695
      %v4829 = vpow.pop %v4828
      %v4830 = vmul.f32 %v4686, 1.442695
      %v4831 = vpow.pop %v4830
      %v4832 = vmul.f32 %v4687, 1.442695
      %v4833 = vpow.pop %v4832
      %v4834 = vmul.f32 %v4688, 1.442695
      %v4835 = vpow.pop %v4834
      %v4836 = vmul.f32 %v4689, 1.442695
      %v4837 = vpow.pop %v4836
      %v4838 = vmul.f32 %v4690, 1.442695
      %v4839 = vpow.pop %v4838
      %v4840 = vmul.f32 %v4691, 1.442695
      %v4841 = vpow.pop %v4840
      %v4842 = vmul.f32 %v4692, 1.442695
      %v4843 = vpow.pop %v4842
      %v4844 = vmul.f32 %v4693, 1.442695
      %v4845 = vpow.pop %v4844
      %v4846 = vmul.f32 %v4694, 1.442695
      %v4847 = vpow.pop %v4846
      %v4848 = vmul.f32 %v4695, 1.442695
      %v4849 = vpow.pop %v4848
      %v4850 = vmul.f32 %v4696, 1.442695
      %v4851 = vpow.pop %v4850
      %v4852 = vmul.f32 %v4697, 1.442695
      %v4853 = vpow.pop %v4852
      %v4854 = vmul.f32 %v4698, 1.442695
      %v4855 = vpow.pop %v4854
      %v4856 = vmul.f32 %v4699, 1.442695
      %v4857 = vpow.pop %v4856
      %v4858 = vmul.f32 %v4700, 1.442695
      %v4859 = vpow.pop %v4858
      %v4860 = vmul.f32 %v4701, 1.442695
      %v4861 = vpow.pop %v4860
      %v4862 = vmul.f32 %v4702, 1.442695
      %v4863 = vpow.pop %v4862
      %v4864 = vmul.f32 %v4703, 1.442695
      %v4865 = vpow.pop %v4864
      %v4866 = vmul.f32 %v4704, 1.442695
      %v4867 = vpow.pop %v4866
      %v4868 = vmul.f32 %v4705, 1.442695
      %v4869 = vpow.pop %v4868
      %v4870 = vmul.f32 %v4706, 1.442695
      %v4871 = vpow.pop %v4870
      %v4872 = vmul.f32 %v4707, 1.442695
      %v4873 = vpow.pop %v4872
      %v4874 = vmul.f32 %v4708, 1.442695
      %v4875 = vpow.pop %v4874
      %v4876 = vmul.f32 %v4709, 1.442695
      %v4877 = vpow.pop %v4876
      %v4878 = vmul.f32 %v4710, 1.442695
      %v4879 = vpow.pop %v4878
      %v4880 = vmul.f32 %v4711, 1.442695
      %v4881 = vpow.pop %v4880
      %v4882 = vmul.f32 %v4712, 1.442695
      %v4883 = vpow.pop %v4882
      %v4884 = vmul.f32 %v4713, 1.442695
      %v4885 = vpow.pop %v4884
      %v4886 = vmul.f32 %v4714, 1.442695
      %v4887 = vpow.pop %v4886
      %v4888 = vmul.f32 %v4715, 1.442695
      %v4889 = vpow.pop %v4888
      %v4890 = vmul.f32 %v4716, 1.442695
      %v4891 = vpow.pop %v4890
      %v4892 = vmul.f32 %v4717, 1.442695
      %v4893 = vpow.pop %v4892
      %v4894 = vmul.f32 %v4718, 1.442695
      %v4895 = vpow.pop %v4894
      %v4896 = vmul.f32 %v4719, 1.442695
      %v4897 = vpow.pop %v4896
      %v4898 = vmul.f32 %v4720, 1.442695
      %v4899 = vpow.pop %v4898
      %v4900 = vmul.f32 %v4721, 1.442695
      %v4901 = vpow.pop %v4900
      %v4902 = vmul.f32 %v4722, 1.442695
      %v4903 = vpow.pop %v4902
      %v4904 = vmul.f32 %v4723, 1.442695
      %v4905 = vpow.pop %v4904
      %v4906 = vmul.f32 %v4724, 1.442695
      %v4907 = vpow.pop %v4906
      %v4908 = vmul.f32 %v4725, 1.442695
      %v4909 = vpow.pop %v4908
      %v4910 = vmul.f32 %v4726, 1.442695
      %v4911 = vpow.pop %v4910
      %v4912 = vmul.f32 %v4727, 1.442695
      %v4913 = vpow.pop %v4912
      %v4914 = vmul.f32 %v4728, 1.442695
      %v4915 = vpow.pop %v4914
      %v4916 = vmul.f32 %v4729, 1.442695
      %v4917 = vpow.pop %v4916
      %v4918 = vmul.f32 %v4730, 1.442695
      %v4919 = vpow.pop %v4918
      %v4920 = vmul.f32 %v4731, 1.442695
      %v4921 = vpow.pop %v4920
      %v4922 = vmul.f32 %v4732, 1.442695
      %v4923 = vpow.pop %v4922
      %v4924 = vmul.f32 %v4733, 1.442695
      %v4925 = vpow.pop %v4924
      %v4926 = vmul.f32 %v4734, 1.442695
      %v4927 = vpow.pop %v4926
      %v4928 = vmul.f32 %v4735, 1.442695
      %v4929 = vpow.pop %v4928
      %v4930 = vmul.f32 %v4736, 1.442695
      %v4931 = vpow.pop %v4930
      %v4932 = vmul.f32 %v4737, 1.442695
      %v4933 = vpow.pop %v4932
      %v4934 = vmul.f32 %v4738, 1.442695
      %v4935 = vpow.pop %v4934
      %v4936 = vmul.f32 %v4739, 1.442695
      %v4937 = vpow.pop %v4936
      %v4938 = vmul.f32 %v4740, 1.442695
      %v4939 = vpow.pop %v4938
      %v4940 = vmul.f32 %v4741, 1.442695
      %v4941 = vpow.pop %v4940
      %v4942 = vmul.f32 %v4742, 1.442695
      %v4943 = vpow.pop %v4942
      %v4944 = vmul.f32 %v4743, 1.442695
      %v4945 = vpow.pop %v4944
      %v4946 = vmul.f32 %v4744, 1.442695
      %v4947 = vpow.pop %v4946
      %v4948 = vmul.f32 %v4745, 1.442695
      %v4949 = vpow.pop %v4948
      %v4950 = vmul.f32 %v4746, 1.442695
      %v4951 = vpow.pop %v4950
      %v4952 = vmul.f32 %v4747, 1.442695
      %v4953 = vpow.pop %v4952
      %v4954 = vmul.f32 %v4748, 1.442695
      %v4955 = vpow.pop %v4954
      %v4956 = vmul.f32 %v4749, 1.442695
      %v4957 = vpow.pop %v4956
      %v4958 = vmul.f32 %v4750, 1.442695
      %v4959 = vpow.pop %v4958
      %v4960 = vmul.f32 %v4751, 1.442695
      %v4961 = vpow.pop %v4960
      %v4962 = vmul.f32 %v4752, 1.442695
      %v4963 = vpow.pop %v4962
      %v4964 = vmul.f32 %v4753, 1.442695
      %v4965 = vpow.pop %v4964
      %v4966 = vmul.f32 %v4754, 1.442695
      %v4967 = vpow.pop %v4966
      %v4968 = vmul.f32 %v4755, 1.442695
      %v4969 = vpow.pop %v4968
      %v4970 = vmul.f32 %v4756, 1.442695
      %v4971 = vpow.pop %v4970
      %v4972 = vmul.f32 %v4757, 1.442695
      %v4973 = vpow.pop %v4972
      %v4974 = vmul.f32 %v4758, 1.442695
      %v4975 = vpow.pop %v4974
      %v4976 = vmul.f32 %v4759, 1.442695
      %v4977 = vpow.pop %v4976
      %v4978 = vmul.f32 %v4760, 1.442695
      %v4979 = vpow.pop %v4978
      %v4980 = vmul.f32 %v4761, 1.442695
      %v4981 = vpow.pop %v4980
      %v4982 = vmul.f32 %v4762, 1.442695
      %v4983 = vpow.pop %v4982
      %v4984 = vmul.f32 %v4763, 1.442695
      %v4985 = vpow.pop %v4984
      %v4986 = vmul.f32 %v4764, 1.442695
      %v4987 = vpow.pop %v4986
      %v4988 = vmul.f32 %v4765, 1.442695
      %v4989 = vpow.pop %v4988
      %v4990 = vadd.f32 %v4767, 1.0
      %v4991 = vadd.f32 %v4769, 1.0
      %v4992 = vadd.f32 %v4771, 1.0
      %v4993 = vadd.f32 %v4773, 1.0
      %v4994 = vadd.f32 %v4775, 1.0
      %v4995 = vadd.f32 %v4777, 1.0
      %v4996 = vadd.f32 %v4779, 1.0
      %v4997 = vadd.f32 %v4781, 1.0
      %v4998 = vadd.f32 %v4783, 1.0
      %v4999 = vadd.f32 %v4785, 1.0
      %v5000 = vadd.f32 %v4787, 1.0
      %v5001 = vadd.f32 %v4789, 1.0
      %v5002 = vadd.f32 %v4791, 1.0
      %v5003 = vadd.f32 %v4793, 1.0
      %v5004 = vadd.f32 %v4795, 1.0
      %v5005 = vadd.f32 %v4797, 1.0
      %v5006 = vadd.f32 %v4799, 1.0
      %v5007 = vadd.f32 %v4801, 1.0
      %v5008 = vadd.f32 %v4803, 1.0
      %v5009 = vadd.f32 %v4805, 1.0
      %v5010 = vadd.f32 %v4807, 1.0
      %v5011 = vadd.f32 %v4809, 1.0
      %v5012 = vadd.f32 %v4811, 1.0
      %v5013 = vadd.f32 %v4813, 1.0
      %v5014 = vadd.f32 %v4815, 1.0
      %v5015 = vadd.f32 %v4817, 1.0
      %v5016 = vadd.f32 %v4819, 1.0
      %v5017 = vadd.f32 %v4821, 1.0
      %v5018 = vadd.f32 %v4823, 1.0
      %v5019 = vadd.f32 %v4825, 1.0
      %v5020 = vadd.f32 %v4827, 1.0
      %v5021 = vadd.f32 %v4829, 1.0
      %v5022 = vadd.f32 %v4831, 1.0
      %v5023 = vadd.f32 %v4833, 1.0
      %v5024 = vadd.f32 %v4835, 1.0
      %v5025 = vadd.f32 %v4837, 1.0
      %v5026 = vadd.f32 %v4839, 1.0
      %v5027 = vadd.f32 %v4841, 1.0
      %v5028 = vadd.f32 %v4843, 1.0
      %v5029 = vadd.f32 %v4845, 1.0
      %v5030 = vadd.f32 %v4847, 1.0
      %v5031 = vadd.f32 %v4849, 1.0
      %v5032 = vadd.f32 %v4851, 1.0
      %v5033 = vadd.f32 %v4853, 1.0
      %v5034 = vadd.f32 %v4855, 1.0
      %v5035 = vadd.f32 %v4857, 1.0
      %v5036 = vadd.f32 %v4859, 1.0
      %v5037 = vadd.f32 %v4861, 1.0
      %v5038 = vadd.f32 %v4863, 1.0
      %v5039 = vadd.f32 %v4865, 1.0
      %v5040 = vadd.f32 %v4867, 1.0
      %v5041 = vadd.f32 %v4869, 1.0
      %v5042 = vadd.f32 %v4871, 1.0
      %v5043 = vadd.f32 %v4873, 1.0
      %v5044 = vadd.f32 %v4875, 1.0
      %v5045 = vadd.f32 %v4877, 1.0
      %v5046 = vadd.f32 %v4879, 1.0
      %v5047 = vadd.f32 %v4881, 1.0
      %v5048 = vadd.f32 %v4883, 1.0
      %v5049 = vadd.f32 %v4885, 1.0
      %v5050 = vadd.f32 %v4887, 1.0
      %v5051 = vadd.f32 %v4889, 1.0
      %v5052 = vadd.f32 %v4891, 1.0
      %v5053 = vadd.f32 %v4893, 1.0
      %v5054 = vadd.f32 %v4895, 1.0
      %v5055 = vadd.f32 %v4897, 1.0
      %v5056 = vadd.f32 %v4899, 1.0
      %v5057 = vadd.f32 %v4901, 1.0
      %v5058 = vadd.f32 %v4903, 1.0
      %v5059 = vadd.f32 %v4905, 1.0
      %v5060 = vadd.f32 %v4907, 1.0
      %v5061 = vadd.f32 %v4909, 1.0
      %v5062 = vadd.f32 %v4911, 1.0
      %v5063 = vadd.f32 %v4913, 1.0
      %v5064 = vadd.f32 %v4915, 1.0
      %v5065 = vadd.f32 %v4917, 1.0
      %v5066 = vadd.f32 %v4919, 1.0
      %v5067 = vadd.f32 %v4921, 1.0
      %v5068 = vadd.f32 %v4923, 1.0
      %v5069 = vadd.f32 %v4925, 1.0
      %v5070 = vadd.f32 %v4927, 1.0
      %v5071 = vadd.f32 %v4929, 1.0
      %v5072 = vadd.f32 %v4931, 1.0
      %v5073 = vadd.f32 %v4933, 1.0
      %v5074 = vadd.f32 %v4935, 1.0
      %v5075 = vadd.f32 %v4937, 1.0
      %v5076 = vadd.f32 %v4939, 1.0
      %v5077 = vadd.f32 %v4941, 1.0
      %v5078 = vadd.f32 %v4943, 1.0
      %v5079 = vadd.f32 %v4945, 1.0
      %v5080 = vadd.f32 %v4947, 1.0
      %v5081 = vadd.f32 %v4949, 1.0
      %v5082 = vadd.f32 %v4951, 1.0
      %v5083 = vadd.f32 %v4953, 1.0
      %v5084 = vadd.f32 %v4955, 1.0
      %v5085 = vadd.f32 %v4957, 1.0
      %v5086 = vadd.f32 %v4959, 1.0
      %v5087 = vadd.f32 %v4961, 1.0
      %v5088 = vadd.f32 %v4963, 1.0
      %v5089 = vadd.f32 %v4965, 1.0
      %v5090 = vadd.f32 %v4967, 1.0
      %v5091 = vadd.f32 %v4969, 1.0
      %v5092 = vadd.f32 %v4971, 1.0
      %v5093 = vadd.f32 %v4973, 1.0
      %v5094 = vadd.f32 %v4975, 1.0
      %v5095 = vadd.f32 %v4977, 1.0
      %v5096 = vadd.f32 %v4979, 1.0
      %v5097 = vadd.f32 %v4981, 1.0
      %v5098 = vadd.f32 %v4983, 1.0
      %v5099 = vadd.f32 %v4985, 1.0
      %v5100 = vadd.f32 %v4987, 1.0
      %v5101 = vadd.f32 %v4989, 1.0
      %v5102 = vrcp.pop %v4990
      %v5103 = vrcp.pop %v4991
      %v5104 = vrcp.pop %v4992
      %v5105 = vrcp.pop %v4993
      %v5106 = vrcp.pop %v4994
      %v5107 = vrcp.pop %v4995
      %v5108 = vrcp.pop %v4996
      %v5109 = vrcp.pop %v4997
      %v5110 = vrcp.pop %v4998
      %v5111 = vrcp.pop %v4999
      %v5112 = vrcp.pop %v5000
      %v5113 = vrcp.pop %v5001
      %v5114 = vrcp.pop %v5002
      %v5115 = vrcp.pop %v5003
      %v5116 = vrcp.pop %v5004
      %v5117 = vrcp.pop %v5005
      %v5118 = vrcp.pop %v5006
      %v5119 = vrcp.pop %v5007
      %v5120 = vrcp.pop %v5008
      %v5121 = vrcp.pop %v5009
      %v5122 = vrcp.pop %v5010
      %v5123 = vrcp.pop %v5011
      %v5124 = vrcp.pop %v5012
      %v5125 = vrcp.pop %v5013
      %v5126 = vrcp.pop %v5014
      %v5127 = vrcp.pop %v5015
      %v5128 = vrcp.pop %v5016
      %v5129 = vrcp.pop %v5017
      %v5130 = vrcp.pop %v5018
      %v5131 = vrcp.pop %v5019
      %v5132 = vrcp.pop %v5020
      %v5133 = vrcp.pop %v5021
      %v5134 = vrcp.pop %v5022
      %v5135 = vrcp.pop %v5023
      %v5136 = vrcp.pop %v5024
      %v5137 = vrcp.pop %v5025
      %v5138 = vrcp.pop %v5026
      %v5139 = vrcp.pop %v5027
      %v5140 = vrcp.pop %v5028
      %v5141 = vrcp.pop %v5029
      %v5142 = vrcp.pop %v5030
      %v5143 = vrcp.pop %v5031
      %v5144 = vrcp.pop %v5032
      %v5145 = vrcp.pop %v5033
      %v5146 = vrcp.pop %v5034
      %v5147 = vrcp.pop %v5035
      %v5148 = vrcp.pop %v5036
      %v5149 = vrcp.pop %v5037
      %v5150 = vrcp.pop %v5038
      %v5151 = vrcp.pop %v5039
      %v5152 = vrcp.pop %v5040
      %v5153 = vrcp.pop %v5041
      %v5154 = vrcp.pop %v5042
      %v5155 = vrcp.pop %v5043
      %v5156 = vrcp.pop %v5044
      %v5157 = vrcp.pop %v5045
      %v5158 = vrcp.pop %v5046
      %v5159 = vrcp.pop %v5047
      %v5160 = vrcp.pop %v5048
      %v5161 = vrcp.pop %v5049
      %v5162 = vrcp.pop %v5050
      %v5163 = vrcp.pop %v5051
      %v5164 = vrcp.pop %v5052
      %v5165 = vrcp.pop %v5053
      %v5166 = vrcp.pop %v5054
      %v5167 = vrcp.pop %v5055
      %v5168 = vrcp.pop %v5056
      %v5169 = vrcp.pop %v5057
      %v5170 = vrcp.pop %v5058
      %v5171 = vrcp.pop %v5059
      %v5172 = vrcp.pop %v5060
      %v5173 = vrcp.pop %v5061
      %v5174 = vrcp.pop %v5062
      %v5175 = vrcp.pop %v5063
      %v5176 = vrcp.pop %v5064
      %v5177 = vrcp.pop %v5065
      %v5178 = vrcp.pop %v5066
      %v5179 = vrcp.pop %v5067
      %v5180 = vrcp.pop %v5068
      %v5181 = vrcp.pop %v5069
      %v5182 = vrcp.pop %v5070
      %v5183 = vrcp.pop %v5071
      %v5184 = vrcp.pop %v5072
      %v5185 = vrcp.pop %v5073
      %v5186 = vrcp.pop %v5074
      %v5187 = vrcp.pop %v5075
      %v5188 = vrcp.pop %v5076
      %v5189 = vrcp.pop %v5077
      %v5190 = vrcp.pop %v5078
      %v5191 = vrcp.pop %v5079
      %v5192 = vrcp.pop %v5080
      %v5193 = vrcp.pop %v5081
      %v5194 = vrcp.pop %v5082
      %v5195 = vrcp.pop %v5083
      %v5196 = vrcp.pop %v5084
      %v5197 = vrcp.pop %v5085
      %v5198 = vrcp.pop %v5086
      %v5199 = vrcp.pop %v5087
      %v5200 = vrcp.pop %v5088
      %v5201 = vrcp.pop %v5089
      %v5202 = vrcp.pop %v5090
      %v5203 = vrcp.pop %v5091
      %v5204 = vrcp.pop %v5092
      %v5205 = vrcp.pop %v5093
      %v5206 = vrcp.pop %v5094
      %v5207 = vrcp.pop %v5095
      %v5208 = vrcp.pop %v5096
      %v5209 = vrcp.pop %v5097
      %v5210 = vrcp.pop %v5098
      %v5211 = vrcp.pop %v5099
      %v5212 = vrcp.pop %v5100
      %v5213 = vrcp.pop %v5101
      %5214 = vst [vmem:[%s609] sm:$0xff] %v5102
      %5215 = vst [vmem:[%s609 + $0x8] sm:$0xff] %v5103
      %5216 = vst [vmem:[%s609 + $0x10] sm:$0xff] %v5104
      %5217 = vst [vmem:[%s609 + $0x18] sm:$0xff] %v5105
      %5218 = vst [vmem:[%s609 + $0x20] sm:$0xff] %v5106
      %5219 = vst [vmem:[%s609 + $0x28] sm:$0xff] %v5107
      %5220 = vst.msk [vmem:[%s609 + $0x30] sm:$0xff] %vm1380, %v5108
      %5221 = vst [vmem:[%s609 + $0x38] sm:$0xff] %v5109
      %5222 = vst [vmem:[%s609 + $0x40] sm:$0xff] %v5110
      %5223 = vst [vmem:[%s609 + $0x48] sm:$0xff] %v5111
      %5224 = vst [vmem:[%s609 + $0x50] sm:$0xff] %v5112
      %5225 = vst [vmem:[%s609 + $0x58] sm:$0xff] %v5113
      %5226 = vst [vmem:[%s609 + $0x60] sm:$0xff] %v5114
      %5227 = vst.msk [vmem:[%s609 + $0x68] sm:$0xff] %vm1380, %v5115
      %5228 = vst [vmem:[%s609 + $0x70] sm:$0xff] %v5116
      %5229 = vst [vmem:[%s609 + $0x78] sm:$0xff] %v5117
      %5230 = vst [vmem:[%s609 + $0x80] sm:$0xff] %v5118
      %5231 = vst [vmem:[%s609 + $0x88] sm:$0xff] %v5119
      %5232 = vst [vmem:[%s609 + $0x90] sm:$0xff] %v5120
      %5233 = vst [vmem:[%s609 + $0x98] sm:$0xff] %v5121
      %5234 = vst.msk [vmem:[%s609 + $0xa0] sm:$0xff] %vm1380, %v5122
      %5235 = vst [vmem:[%s609 + $0xa8] sm:$0xff] %v5123
      %5236 = vst [vmem:[%s609 + $0xb0] sm:$0xff] %v5124
      %5237 = vst [vmem:[%s609 + $0xb8] sm:$0xff] %v5125
      %5238 = vst [vmem:[%s609 + $0xc0] sm:$0xff] %v5126
      %5239 = vst [vmem:[%s609 + $0xc8] sm:$0xff] %v5127
      %5240 = vst [vmem:[%s609 + $0xd0] sm:$0xff] %v5128
      %5241 = vst.msk [vmem:[%s609 + $0xd8] sm:$0xff] %vm1380, %v5129
      %5242 = vst [vmem:[%s609 + $0xe0] sm:$0xff] %v5130
      %5243 = vst [vmem:[%s609 + $0xe8] sm:$0xff] %v5131
      %5244 = vst [vmem:[%s609 + $0xf0] sm:$0xff] %v5132
      %5245 = vst [vmem:[%s609 + $0xf8] sm:$0xff] %v5133
      %5246 = vst [vmem:[%s609 + $0x100] sm:$0xff] %v5134
      %5247 = vst [vmem:[%s609 + $0x108] sm:$0xff] %v5135
      %5248 = vst.msk [vmem:[%s609 + $0x110] sm:$0xff] %vm1380, %v5136
      %5249 = vst [vmem:[%s609 + $0x118] sm:$0xff] %v5137
      %5250 = vst [vmem:[%s609 + $0x120] sm:$0xff] %v5138
      %5251 = vst [vmem:[%s609 + $0x128] sm:$0xff] %v5139
      %5252 = vst [vmem:[%s609 + $0x130] sm:$0xff] %v5140
      %5253 = vst [vmem:[%s609 + $0x138] sm:$0xff] %v5141
      %5254 = vst [vmem:[%s609 + $0x140] sm:$0xff] %v5142
      %5255 = vst.msk [vmem:[%s609 + $0x148] sm:$0xff] %vm1380, %v5143
      %5256 = vst [vmem:[%s609 + $0x150] sm:$0xff] %v5144
      %5257 = vst [vmem:[%s609 + $0x158] sm:$0xff] %v5145
      %5258 = vst [vmem:[%s609 + $0x160] sm:$0xff] %v5146
      %5259 = vst [vmem:[%s609 + $0x168] sm:$0xff] %v5147
      %5260 = vst [vmem:[%s609 + $0x170] sm:$0xff] %v5148
      %5261 = vst [vmem:[%s609 + $0x178] sm:$0xff] %v5149
      %5262 = vst.msk [vmem:[%s609 + $0x180] sm:$0xff] %vm1380, %v5150
      %5263 = vst [vmem:[%s609 + $0x188] sm:$0xff] %v5151
      %5264 = vst [vmem:[%s609 + $0x190] sm:$0xff] %v5152
      %5265 = vst [vmem:[%s609 + $0x198] sm:$0xff] %v5153
      %5266 = vst [vmem:[%s609 + $0x1a0] sm:$0xff] %v5154
      %5267 = vst [vmem:[%s609 + $0x1a8] sm:$0xff] %v5155
      %5268 = vst [vmem:[%s609 + $0x1b0] sm:$0xff] %v5156
      %5269 = vst.msk [vmem:[%s609 + $0x1b8] sm:$0xff] %vm1380, %v5157
      %5270 = vst [vmem:[%s609 + $0x1c0] sm:$0xff] %v5158
      %5271 = vst [vmem:[%s609 + $0x1c8] sm:$0xff] %v5159
      %5272 = vst [vmem:[%s609 + $0x1d0] sm:$0xff] %v5160
      %5273 = vst [vmem:[%s609 + $0x1d8] sm:$0xff] %v5161
      %5274 = vst [vmem:[%s609 + $0x1e0] sm:$0xff] %v5162
      %5275 = vst [vmem:[%s609 + $0x1e8] sm:$0xff] %v5163
      %5276 = vst.msk [vmem:[%s609 + $0x1f0] sm:$0xff] %vm1380, %v5164
      %5277 = vst [vmem:[%s609 + $0x1f8] sm:$0xff] %v5165
      %5278 = vst [vmem:[%s609 + $0x200] sm:$0xff] %v5166
      %5279 = vst [vmem:[%s609 + $0x208] sm:$0xff] %v5167
      %5280 = vst [vmem:[%s609 + $0x210] sm:$0xff] %v5168
      %5281 = vst [vmem:[%s609 + $0x218] sm:$0xff] %v5169
      %5282 = vst [vmem:[%s609 + $0x220] sm:$0xff] %v5170
      %5283 = vst.msk [vmem:[%s609 + $0x228] sm:$0xff] %vm1380, %v5171
      %5284 = vst [vmem:[%s609 + $0x230] sm:$0xff] %v5172
      %5285 = vst [vmem:[%s609 + $0x238] sm:$0xff] %v5173
      %5286 = vst [vmem:[%s609 + $0x240] sm:$0xff] %v5174
      %5287 = vst [vmem:[%s609 + $0x248] sm:$0xff] %v5175
      %5288 = vst [vmem:[%s609 + $0x250] sm:$0xff] %v5176
      %5289 = vst [vmem:[%s609 + $0x258] sm:$0xff] %v5177
      %5290 = vst.msk [vmem:[%s609 + $0x260] sm:$0xff] %vm1380, %v5178
      %5291 = vst [vmem:[%s609 + $0x268] sm:$0xff] %v5179
      %5292 = vst [vmem:[%s609 + $0x270] sm:$0xff] %v5180
      %5293 = vst [vmem:[%s609 + $0x278] sm:$0xff] %v5181
      %5294 = vst [vmem:[%s609 + $0x280] sm:$0xff] %v5182
      %5295 = vst [vmem:[%s609 + $0x288] sm:$0xff] %v5183
      %5296 = vst [vmem:[%s609 + $0x290] sm:$0xff] %v5184
      %5297 = vst.msk [vmem:[%s609 + $0x298] sm:$0xff] %vm1380, %v5185
      %5298 = vst [vmem:[%s609 + $0x2a0] sm:$0xff] %v5186
      %5299 = vst [vmem:[%s609 + $0x2a8] sm:$0xff] %v5187
      %5300 = vst [vmem:[%s609 + $0x2b0] sm:$0xff] %v5188
      %5301 = vst [vmem:[%s609 + $0x2b8] sm:$0xff] %v5189
      %5302 = vst [vmem:[%s609 + $0x2c0] sm:$0xff] %v5190
      %5303 = vst [vmem:[%s609 + $0x2c8] sm:$0xff] %v5191
      %5304 = vst.msk [vmem:[%s609 + $0x2d0] sm:$0xff] %vm1380, %v5192
      %5305 = vst [vmem:[%s609 + $0x2d8] sm:$0xff] %v5193
      %5306 = vst [vmem:[%s609 + $0x2e0] sm:$0xff] %v5194
      %5307 = vst [vmem:[%s609 + $0x2e8] sm:$0xff] %v5195
      %5308 = vst [vmem:[%s609 + $0x2f0] sm:$0xff] %v5196
      %5309 = vst [vmem:[%s609 + $0x2f8] sm:$0xff] %v5197
      %5310 = vst [vmem:[%s609 + $0x300] sm:$0xff] %v5198
      %5311 = vst.msk [vmem:[%s609 + $0x308] sm:$0xff] %vm1380, %v5199
      %5312 = vst [vmem:[%s609 + $0x310] sm:$0xff] %v5200
      %5313 = vst [vmem:[%s609 + $0x318] sm:$0xff] %v5201
      %5314 = vst [vmem:[%s609 + $0x320] sm:$0xff] %v5202
      %5315 = vst [vmem:[%s609 + $0x328] sm:$0xff] %v5203
      %5316 = vst [vmem:[%s609 + $0x330] sm:$0xff] %v5204
      %5317 = vst [vmem:[%s609 + $0x338] sm:$0xff] %v5205
      %5318 = vst.msk [vmem:[%s609 + $0x340] sm:$0xff] %vm1380, %v5206
      %5319 = vst [vmem:[%s609 + $0x348] sm:$0xff] %v5207
      %5320 = vst [vmem:[%s609 + $0x350] sm:$0xff] %v5208
      %5321 = vst [vmem:[%s609 + $0x358] sm:$0xff] %v5209
      %5322 = vst [vmem:[%s609 + $0x360] sm:$0xff] %v5210
      %5323 = vst [vmem:[%s609 + $0x368] sm:$0xff] %v5211
      %5324 = vst [vmem:[%s609 + $0x370] sm:$0xff] %v5212
      %5325 = vst.msk [vmem:[%s609 + $0x378] sm:$0xff] %vm1380, %v5213
      %s5326 = smul.u32 16, %s30
      %p5327 = scmp.lt.s32.totalorder %s5326, 63
      %s5328 = scalar_select %p5327, %s5326, 63
      %s5329 = smul.addr %s5328, 7
      %s5330 = smul.addr %s5329, 8
      %s5331 = scalar_lea.vmem %s19, %s5330
      // Predicated region
      $region97: #{_forward_impl.1} parent=95 // pred_check
        %p5332 = pneg %p452
      $region98: #{_forward_impl.1} parent=95 // pred_check_branch
        %5334 = sbr.rel (%p5332) target = $region100
      $region99: #{_forward_impl.1} parent=95 // pred_region
        %s5335 = smul.u32 16, %s30
      $region100: #{_forward_impl.1} parent=95 // pred_fallthru
        _
    $region96: #{_forward_impl.1} parent=5 // pred_fallthru
      _
    %p5336 = scmp.le.s32.totalorder 2, %s25
    // Predicated region
    $region101: #{_forward_impl.1} parent=5 // pred_check
      %p5337 = pneg %p5336
    $region102: #{_forward_impl.1} parent=5 // pred_check_branch
      %5339 = sbr.rel (%p5337) target = $region104
    $region103: #{_forward_impl.1} parent=5 // pred_region
      %s5340 = ssub.s32 %s25, 2
      // Predicated region
      $region105: #{_forward_impl.1} parent=103 // pred_check
        %p5341 = pneg %p458
      $region106: #{_forward_impl.1} parent=103 // pred_check_branch
        %5343 = sbr.rel (%p5341) target = $region108
      $region107: #{_forward_impl.1} parent=103 // pred_region
        %s5344 = smul.u32 16, %s31
        %p5345 = scmp.lt.s32.totalorder %s5344, 63
        %s5346 = scalar_select %p5345, %s5344, 63
        %s5347 = smul.addr %s5346, 7
        %s5348 = smul.addr %s5347, 8
        %s5349 = scalar_lea.vmem %s19, %s5348
      $region108: #{_forward_impl.1} parent=103 // pred_fallthru
        _
    $region104: #{_forward_impl.1} parent=5 // pred_fallthru
      _
  $region6: #{_forward_impl.1} parent=0 // loop_footer
    %s29 = sadd.s32 1, %s25
  $region7: #{_forward_impl.1} parent=0 // loop_footer_branch
    %24 = sbr.rel target = $region3
  $region8: #{_forward_impl.1} parent=0 // loop_exit
    _

</llo_original>
